<compile_context>
chip_gen: v7x
topology: tpu7x:2x2x1
jax: 0.10.0
libtpu: 0.0.40
codegen_flags: <defaults>
</compile_context>

<pallas_src>
import numpy as np

import jax
import jax.numpy as jnp
from jax import lax
from jax.experimental import pallas as pl
from jax.experimental.pallas import tpu as pltpu

# ----------------------------- configuration -------------------------------
B = 2              # batch
L = 8              # sequence length (tokens)
W_CHARS = 8        # chars per token
VOCAB_W = 50       # word vocab
VOCAB_C = 32       # char vocab
WORD_DIM = 32      # word embedding dim
CHAR_DIM = 16      # char embedding dim
FILTERS = [(1, 16), (2, 16), (3, 32)]   # (width, n_filters)
N_HIGHWAY = 1
PROJ_DIM = 32      # projection_dim
ENCODE_DIM = 32    # LSTM hidden dim (encode_dim)
CELL_CLIP = 3.0
PROJ_CLIP = 3.0
D_FILT = sum(o for _, o in FILTERS)
K_MAX = max(k for k, _ in FILTERS)


# ----------------------------- fused kernel ---------------------------------
def make_direction_kernel(batch, seq, n_highway):
    """One grid point = one direction (fwd or bwd) of the whole forward pass."""
    n_tok = batch * seq
    n_win = W_CHARS * n_tok
    hdim = ENCODE_DIM
    f32 = jnp.float32

    def lstm_cell(pre, c_prev, wp):
        # One sigmoid over the full (B, 4H) vreg, tanh only on the g slice.
        sig = jax.nn.sigmoid(pre)
        i = sig[:, 0:hdim]
        f = sig[:, hdim:2 * hdim]
        o = sig[:, 3 * hdim:4 * hdim]
        g = jnp.tanh(pre[:, 2 * hdim:3 * hdim])
        c = jnp.clip(f * c_prev + i * g, -CELL_CLIP, CELL_CLIP)     # cell_clip
        h = o * jnp.tanh(c)
        hp = jnp.clip(jnp.dot(h, wp, preferred_element_type=f32),
                      -PROJ_CLIP, PROJ_CLIP)                         # proj_clip
        return c, hp

    def run_layer(xp, wh, wp):
        # xp: (n_tok, 4H) hoisted input pre-activations (rows = t*batch + b).
        c = jnp.zeros((batch, hdim), f32)
        h = jnp.zeros((batch, PROJ_DIM), f32)
        outs = []
        for t in range(seq):                                         # unrolled
            pre = xp[t * batch:(t + 1) * batch, :] + jnp.dot(
                h, wh, preferred_element_type=f32)
            c, h = lstm_cell(pre, c, wp)
            outs.append(h)
        return jnp.concatenate(outs, axis=0)                         # (n_tok,P)

    def kernel(word_ref, cwin_ref, wtab_ref, ctab_ref, wconv_ref, whwy_ref,
               wproj_ref, bias_ref, wx_ref, wh_ref, bl_ref, wp_ref, out_ref):
        # ---- char CNN via one-hot matmuls (embedding table folded in) ------
        ids = cwin_ref[0]                               # (n_win, K_MAX) int32
        ciota = lax.broadcasted_iota(jnp.int32, (n_win, VOCAB_C), 1)
        conv = jnp.zeros((n_win, D_FILT), f32)
        for k in range(K_MAX):
            # effective weights for window offset k: char_table @ Wconv_k
            w_eff = jnp.dot(ctab_ref[...],
                            wconv_ref[k * CHAR_DIM:(k + 1) * CHAR_DIM, :],
                            preferred_element_type=f32)        # (Vc, D_FILT)
            onehot = jnp.where(ids[:, k:k + 1] == ciota, 1.0, 0.0).astype(f32)
            conv = conv + jnp.dot(onehot, w_eff, preferred_element_type=f32)
        conv = conv + bias_ref[0:1, 0:D_FILT]

        # validity mask built in-kernel (no shipped constant): window p is
        # valid for a width-kw filter iff row < (W - kw + 1) * n_tok.
        rows = lax.broadcasted_iota(jnp.int32, (n_win, D_FILT), 0)
        cols = lax.broadcasted_iota(jnp.int32, (n_win, D_FILT), 1)
        limit = jnp.zeros((n_win, D_FILT), jnp.int32)
        off = 0
        for (kw, o) in FILTERS:
            limit = jnp.where((cols >= off) & (cols < off + o),
                              (W_CHARS - kw + 1) * n_tok, limit)
            off += o
        act = jnp.where(rows < limit, jnp.maximum(conv, 0.0), 0.0)

        pooled = act[0:n_tok, :]                        # window 0 (all valid)
        for p in range(1, W_CHARS):                     # max-pool over time
            pooled = jnp.maximum(pooled, act[p * n_tok:(p + 1) * n_tok, :])
        h = pooled                                      # (n_tok, D_FILT)

        # ---- highway layers (merged [Wt | Wg] matmul) -----------------------
        for q in range(n_highway):
            tg = (jnp.dot(h, whwy_ref[q], preferred_element_type=f32)
                  + bias_ref[1 + q:2 + q, :])           # (n_tok, 2*D_FILT)
            tt = jnp.maximum(tg[:, 0:D_FILT], 0.0)
            gg = jax.nn.sigmoid(tg[:, D_FILT:2 * D_FILT])
            h = gg * tt + (1.0 - gg) * h

        # ---- word embedding one-hot + projection (split matmul) -------------
        wid = word_ref[0]                               # (n_tok, 1) int32
        oh_w = jnp.where(
            wid == lax.broadcasted_iota(jnp.int32, (n_tok, VOCAB_W), 1),
            1.0, 0.0).astype(f32)
        wvec = jnp.dot(oh_w, wtab_ref[...], preferred_element_type=f32)
        tok = (jnp.dot(wvec, wproj_ref[0:WORD_DIM, :],
                       preferred_element_type=f32)
               + jnp.dot(h, wproj_ref[WORD_DIM:WORD_DIM + D_FILT, :],
                         preferred_element_type=f32)
               + bias_ref[1 + n_highway:2 + n_highway, 0:PROJ_DIM])

        # ---- 2 stacked LSTM-with-projection layers (this direction) ---------
        xp0 = jnp.dot(tok, wx_ref[0], preferred_element_type=f32) + bl_ref[0]
        h0 = run_layer(xp0, wh_ref[0], wp_ref[0])
        xp1 = jnp.dot(h0, wx_ref[1], preferred_element_type=f32) + bl_ref[1]
        h1 = run_layer(xp1, wh_ref[1], wp_ref[1])

        # ELMo residual for layer >= 1; single store per direction.
        out_ref[0] = h1 + h0

    return kernel


# ----------------------------- wrapper glue ----------------------------------
def _build_perm_tables(batch, seq):
    """Static (trace-time) gather tables: per-direction token/char-window ids."""
    n_tok = batch * seq
    tok_perm = np.zeros((2, n_tok), np.int32)
    cwin_perm = np.zeros((2, W_CHARS * n_tok, K_MAX), np.int32)
    for d in range(2):
        times = np.arange(seq) if d == 0 else np.arange(seq)[::-1]
        for tpos in range(seq):
            l = int(times[tpos])
            for b in range(batch):
                r = tpos * batch + b
                tok_perm[d, r] = b * seq + l
                for p in range(W_CHARS):
                    for k in range(K_MAX):
                        w = p + k
                        if w >= W_CHARS:
                            w = 0   # don't-care: zero conv weight or masked win
                        cwin_perm[d, p * n_tok + r, k] = (b * seq + l) * W_CHARS + w
    return tok_perm, cwin_perm


def _pack_params(params):
    """Pack weights into few lane-dense slabs (fewer, larger DMAs)."""
    tw = params["token_weights"]
    idx = 0
    w_conv = jnp.zeros((K_MAX * CHAR_DIM, D_FILT), jnp.float32)
    b_conv = jnp.zeros((D_FILT,), jnp.float32)
    off = 0
    for (k, o) in FILTERS:
        wf, bf = tw[idx], tw[idx + 1]
        idx += 2
        w_conv = w_conv.at[:k * CHAR_DIM, off:off + o].set(
            wf.reshape(k * CHAR_DIM, o))
        b_conv = b_conv.at[off:off + o].set(bf.reshape(o))
        off += o

    w_hwy, b_hwy = [], []
    for _ in range(N_HIGHWAY):
        wt, bt, wg, bg = tw[idx], tw[idx + 1], tw[idx + 2], tw[idx + 3]
        idx += 4
        w_hwy.append(jnp.concatenate([wt, wg], axis=1))           # (D, 2D)
        b_hwy.append(jnp.concatenate([bt.reshape(-1), bg.reshape(-1)]))
    w_hwy = jnp.stack(w_hwy)                                      # (nh, D, 2D)
    w_proj, b_proj = tw[idx], tw[idx + 1]                         # (Dw+Df,P),(1,P)

    def pad128(v):
        v = v.reshape(-1)
        return jnp.pad(v, (0, 128 - v.shape[0]))

    bias_slab = jnp.stack([pad128(b_conv)] + [pad128(b) for b in b_hwy]
                          + [pad128(b_proj)])                     # (2+nh, 128)

    names = ("fwd0", "fwd1", "bwd0", "bwd1")   # order: [direction, layer]
    wx = jnp.stack([params[n][0] for n in names])                 # (4, P, 4H)
    wh = jnp.stack([params[n][1] for n in names])                 # (4, P, 4H)
    bl = jnp.stack([params[n][2] for n in names])                 # (4, 1, 4H)
    wp = jnp.stack([params[n][3] for n in names])                 # (4, H, P)
    return (params["word_emb_table"], params["char_emb_table"], w_conv,
            w_hwy, w_proj, bias_slab, wx, wh, bl, wp)


def model_forward(word_inp, chars_inp, mask, params):
    batch, seq = word_inp.shape
    n_tok = batch * seq
    n_win = W_CHARS * n_tok

    tok_perm, cwin_perm = _build_perm_tables(batch, seq)      # numpy, static
    word_ids = word_inp.reshape(-1)[tok_perm][..., None].astype(jnp.int32)
    cwin_ids = chars_inp.reshape(-1)[cwin_perm].astype(jnp.int32)

    (wtab, ctab, w_conv, w_hwy, w_proj, bias_slab,
     wx, wh, bl, wp) = _pack_params(params)
    n_bias = bias_slab.shape[0]

    in_specs = [
        pl.BlockSpec((1, n_tok, 1), lambda d: (d, 0, 0)),            # word ids
        pl.BlockSpec((1, n_win, K_MAX), lambda d: (d, 0, 0)),        # char ids
        pl.BlockSpec((VOCAB_W, WORD_DIM), lambda d: (0, 0)),         # word tab
        pl.BlockSpec((VOCAB_C, CHAR_DIM), lambda d: (0, 0)),         # char tab
        pl.BlockSpec((K_MAX * CHAR_DIM, D_FILT), lambda d: (0, 0)),  # conv W
        pl.BlockSpec((N_HIGHWAY, D_FILT, 2 * D_FILT),
                     lambda d: (0, 0, 0)),                           # highway
        pl.BlockSpec((WORD_DIM + D_FILT, PROJ_DIM), lambda d: (0, 0)),  # proj W
        pl.BlockSpec((n_bias, 128), lambda d: (0, 0)),               # bias slab
        pl.BlockSpec((2, PROJ_DIM, 4 * ENCODE_DIM), lambda d: (d, 0, 0)),  # Wx
        pl.BlockSpec((2, PROJ_DIM, 4 * ENCODE_DIM), lambda d: (d, 0, 0)),  # Wh
        pl.BlockSpec((2, 1, 4 * ENCODE_DIM), lambda d: (d, 0, 0)),         # b
        pl.BlockSpec((2, ENCODE_DIM, PROJ_DIM), lambda d: (d, 0, 0)),      # Wp
    ]

    out = pl.pallas_call(
        make_direction_kernel(batch, seq, N_HIGHWAY),
        out_shape=jax.ShapeDtypeStruct((2, n_tok, PROJ_DIM), jnp.float32),
        grid=(2,),                                   # grid point = direction
        in_specs=in_specs,
        out_specs=pl.BlockSpec((1, n_tok, PROJ_DIM), lambda d: (d, 0, 0)),
        compiler_params=pltpu.CompilerParams(
            dimension_semantics=("parallel",)),      # 2 TCs on v7x
    )(word_ids, cwin_ids, wtab, ctab, w_conv, w_hwy, w_proj, bias_slab,
      wx, wh, bl, wp)

    # direction 0 is time-major, direction 1 is reversed-time-major -> un-reverse
    fwd = out[0].reshape(seq, batch, PROJ_DIM)
    bwd = out[1].reshape(seq, batch, PROJ_DIM)[::-1]
    enc = jnp.transpose(jnp.concatenate([fwd, bwd], axis=-1), (1, 0, 2))
    # TODO(synk): PyTorch version uses packed variable-length sequences; here the
    # mask is applied multiplicatively (exact for all-ones / right-padded masks).
    return enc * mask[..., None].astype(enc.dtype)


# ------------------------------ param init -----------------------------------
def init_params(key):
    keys = iter(jax.random.split(key, 64))

    def rand(shape, scale):
        return jax.random.normal(next(keys), shape, jnp.float32) * scale

    p = {}
    p["word_emb_table"] = rand((VOCAB_W, WORD_DIM), 0.1)
    p["char_emb_table"] = rand((VOCAB_C, CHAR_DIM), 0.1)

    tw = []
    for (k, o) in FILTERS:
        tw.append(rand((k, CHAR_DIM, o), 1.0 / (k * CHAR_DIM) ** 0.5))
        tw.append(rand((1, o), 0.01))
    for _ in range(N_HIGHWAY):
        tw.append(rand((D_FILT, D_FILT), 1.0 / D_FILT ** 0.5))  # W_t
        tw.append(rand((1, D_FILT), 0.01))                      # b_t
        tw.append(rand((D_FILT, D_FILT), 1.0 / D_FILT ** 0.5))  # W_g
        tw.append(rand((1, D_FILT), 0.01))                      # b_g
    tw.append(rand((WORD_DIM + D_FILT, PROJ_DIM),
                   1.0 / (WORD_DIM + D_FILT) ** 0.5))           # projection
    tw.append(rand((1, PROJ_DIM), 0.01))
    p["token_weights"] = tuple(tw)

    def lstm_params():
        return (rand((PROJ_DIM, 4 * ENCODE_DIM), 1.0 / PROJ_DIM ** 0.5),   # Wx
                rand((PROJ_DIM, 4 * ENCODE_DIM), 1.0 / PROJ_DIM ** 0.5),   # Wh
                rand((1, 4 * ENCODE_DIM), 0.01),                           # b
                rand((ENCODE_DIM, PROJ_DIM), 1.0 / ENCODE_DIM ** 0.5))     # Wp

    for name in ("fwd0", "fwd1", "bwd0", "bwd1"):
        p[name] = lstm_params()
    return p


# --------------------------------- main ---------------------------------------
if __name__ == "__main__":
    key = jax.random.PRNGKey(0)
    kp, kw, kc = jax.random.split(key, 3)
    params = init_params(kp)

    word_inp = jax.random.randint(kw, (B, L), 0, VOCAB_W, dtype=jnp.int32)
    chars_inp = jax.random.randint(kc, (B, L, W_CHARS), 0, VOCAB_C,
                                   dtype=jnp.int32)
    mask = jnp.ones((B, L), jnp.float32)          # mask_package[0]

    fwd_fn = jax.jit(model_forward)
    out = jax.block_until_ready(fwd_fn(word_inp, chars_inp, mask, params))
    assert out.shape == (B, L, 2 * PROJ_DIM), out.shape
    assert bool(jnp.all(jnp.isfinite(out)))
    print("KERNEL_OK")
</pallas_src>

<mosaic_0001>
module attributes {stable_mosaic.version = 11 : i64} {
  func.func @kernel(%arg0: i32, %arg1: memref<1x16x1xi32, #tpu.memory_space<vmem>>, %arg2: memref<1x128x3xi32, #tpu.memory_space<vmem>>, %arg3: memref<50x32xf32, #tpu.memory_space<vmem>>, %arg4: memref<32x16xf32, #tpu.memory_space<vmem>>, %arg5: memref<48x64xf32, #tpu.memory_space<vmem>>, %arg6: memref<1x64x128xf32, #tpu.memory_space<vmem>>, %arg7: memref<96x32xf32, #tpu.memory_space<vmem>>, %arg8: memref<3x128xf32, #tpu.memory_space<vmem>>, %arg9: memref<2x32x128xf32, #tpu.memory_space<vmem>>, %arg10: memref<2x32x128xf32, #tpu.memory_space<vmem>>, %arg11: memref<2x1x128xf32, #tpu.memory_space<vmem>>, %arg12: memref<2x32x32xf32, #tpu.memory_space<vmem>>, %arg13: memref<1x16x32xf32, #tpu.memory_space<vmem>>) attributes {dimension_semantics = [#tpu.dimension_semantics<parallel>], iteration_bounds = array<i64: 2>, scalar_prefetch = 0 : i64, scratch_operands = 0 : i64, tpu.core_type = #tpu.core_type<tc>, window_params = [{transform_indices = @transform_0, window_bounds = array<i64: 1, 16, 1>}, {transform_indices = @transform_1, window_bounds = array<i64: 1, 128, 3>}, {pipeline_mode = #tpu.pipeline_mode<synchronous>, transform_indices = @transform_2, window_bounds = array<i64: 50, 32>}, {pipeline_mode = #tpu.pipeline_mode<synchronous>, transform_indices = @transform_3, window_bounds = array<i64: 32, 16>}, {pipeline_mode = #tpu.pipeline_mode<synchronous>, transform_indices = @transform_4, window_bounds = array<i64: 48, 64>}, {pipeline_mode = #tpu.pipeline_mode<synchronous>, transform_indices = @transform_5, window_bounds = array<i64: 1, 64, 128>}, {pipeline_mode = #tpu.pipeline_mode<synchronous>, transform_indices = @transform_6, window_bounds = array<i64: 96, 32>}, {pipeline_mode = #tpu.pipeline_mode<synchronous>, transform_indices = @transform_7, window_bounds = array<i64: 3, 128>}, {transform_indices = @transform_8, window_bounds = array<i64: 2, 32, 128>}, {transform_indices = @transform_9, window_bounds = array<i64: 2, 32, 128>}, {transform_indices = @transform_10, window_bounds = array<i64: 2, 1, 128>}, {transform_indices = @transform_11, window_bounds = array<i64: 2, 32, 32>}, {transform_indices = @transform_12, window_bounds = array<i64: 1, 16, 32>}]} {
    %c0 = arith.constant 0 : index
    %c0_0 = arith.constant 0 : index
    %c0_1 = arith.constant 0 : index
    %0 = vector.load %arg2[%c0, %c0_0, %c0_1] : memref<1x128x3xi32, #tpu.memory_space<vmem>>, vector<1x128x3xi32>
    %1 = vector.shape_cast %0 : vector<1x128x3xi32> to vector<128x3xi32>
    %2 = tpu.iota {dimensions = array<i32: 1>} : vector<128x32xi32>
    %cst = arith.constant 0.000000e+00 : f32
    %3 = vector.broadcast %cst : f32 to vector<128x64xf32>
    %c0_2 = arith.constant 0 : index
    %c0_3 = arith.constant 0 : index
    %4 = vector.load %arg4[%c0_2, %c0_3] : memref<32x16xf32, #tpu.memory_space<vmem>>, vector<32x16xf32>
    %c0_4 = arith.constant 0 : index
    %c0_5 = arith.constant 0 : index
    %5 = vector.load %arg5[%c0_4, %c0_5] : memref<48x64xf32, #tpu.memory_space<vmem>>, vector<16x64xf32>
    %cst_6 = arith.constant dense<0.000000e+00> : vector<32x64xf32>
    %6 = tpu.matmul %4, %5, %cst_6 {dimension_numbers = #tpu.dot_dimension_numbers<[1], [0], [0], [1], [0, 0, 1, 1], [], []>} : vector<32x16xf32>, vector<16x64xf32>, vector<32x64xf32> -> vector<32x64xf32>
    %7 = vector.extract_strided_slice %1 {offsets = [0, 0], sizes = [128, 1], strides = [1, 1]} : vector<128x3xi32> to vector<128x1xi32>
    %8 = vector.broadcast %7 : vector<128x1xi32> to vector<128x32xi32>
    %9 = arith.cmpi eq, %8, %2 : vector<128x32xi32>
    %cst_7 = arith.constant 1.000000e+00 : f32
    %cst_8 = arith.constant 0.000000e+00 : f32
    %10 = vector.broadcast %cst_7 : f32 to vector<128x32xf32>
    %11 = vector.broadcast %cst_8 : f32 to vector<128x32xf32>
    %12 = arith.select %9, %10, %11 : vector<128x32xi1>, vector<128x32xf32>
    %cst_9 = arith.constant dense<0.000000e+00> : vector<128x64xf32>
    %13 = tpu.matmul %12, %6, %cst_9 {dimension_numbers = #tpu.dot_dimension_numbers<[1], [0], [0], [1], [0, 0, 1, 1], [], []>} : vector<128x32xf32>, vector<32x64xf32>, vector<128x64xf32> -> vector<128x64xf32>
    %14 = arith.addf %3, %13 : vector<128x64xf32>
    %c0_10 = arith.constant 0 : index
    %c0_11 = arith.constant 0 : index
    %15 = vector.load %arg4[%c0_10, %c0_11] : memref<32x16xf32, #tpu.memory_space<vmem>>, vector<32x16xf32>
    %c16 = arith.constant 16 : index
    %c0_12 = arith.constant 0 : index
    %16 = vector.load %arg5[%c16, %c0_12] : memref<48x64xf32, #tpu.memory_space<vmem>>, vector<16x64xf32>
    %cst_13 = arith.constant dense<0.000000e+00> : vector<32x64xf32>
    %17 = tpu.matmul %15, %16, %cst_13 {dimension_numbers = #tpu.dot_dimension_numbers<[1], [0], [0], [1], [0, 0, 1, 1], [], []>} : vector<32x16xf32>, vector<16x64xf32>, vector<32x64xf32> -> vector<32x64xf32>
    %18 = vector.extract_strided_slice %1 {offsets = [0, 1], sizes = [128, 1], strides = [1, 1]} : vector<128x3xi32> to vector<128x1xi32>
    %19 = vector.broadcast %18 : vector<128x1xi32> to vector<128x32xi32>
    %20 = arith.cmpi eq, %19, %2 : vector<128x32xi32>
    %cst_14 = arith.constant 1.000000e+00 : f32
    %cst_15 = arith.constant 0.000000e+00 : f32
    %21 = vector.broadcast %cst_14 : f32 to vector<128x32xf32>
    %22 = vector.broadcast %cst_15 : f32 to vector<128x32xf32>
    %23 = arith.select %20, %21, %22 : vector<128x32xi1>, vector<128x32xf32>
    %cst_16 = arith.constant dense<0.000000e+00> : vector<128x64xf32>
    %24 = tpu.matmul %23, %17, %cst_16 {dimension_numbers = #tpu.dot_dimension_numbers<[1], [0], [0], [1], [0, 0, 1, 1], [], []>} : vector<128x32xf32>, vector<32x64xf32>, vector<128x64xf32> -> vector<128x64xf32>
    %25 = arith.addf %14, %24 : vector<128x64xf32>
    %c0_17 = arith.constant 0 : index
    %c0_18 = arith.constant 0 : index
    %26 = vector.load %arg4[%c0_17, %c0_18] : memref<32x16xf32, #tpu.memory_space<vmem>>, vector<32x16xf32>
    %c32 = arith.constant 32 : index
    %c0_19 = arith.constant 0 : index
    %27 = vector.load %arg5[%c32, %c0_19] : memref<48x64xf32, #tpu.memory_space<vmem>>, vector<16x64xf32>
    %cst_20 = arith.constant dense<0.000000e+00> : vector<32x64xf32>
    %28 = tpu.matmul %26, %27, %cst_20 {dimension_numbers = #tpu.dot_dimension_numbers<[1], [0], [0], [1], [0, 0, 1, 1], [], []>} : vector<32x16xf32>, vector<16x64xf32>, vector<32x64xf32> -> vector<32x64xf32>
    %29 = vector.extract_strided_slice %1 {offsets = [0, 2], sizes = [128, 1], strides = [1, 1]} : vector<128x3xi32> to vector<128x1xi32>
    %30 = vector.broadcast %29 : vector<128x1xi32> to vector<128x32xi32>
    %31 = arith.cmpi eq, %30, %2 : vector<128x32xi32>
    %cst_21 = arith.constant 1.000000e+00 : f32
    %cst_22 = arith.constant 0.000000e+00 : f32
    %32 = vector.broadcast %cst_21 : f32 to vector<128x32xf32>
    %33 = vector.broadcast %cst_22 : f32 to vector<128x32xf32>
    %34 = arith.select %31, %32, %33 : vector<128x32xi1>, vector<128x32xf32>
    %cst_23 = arith.constant dense<0.000000e+00> : vector<128x64xf32>
    %35 = tpu.matmul %34, %28, %cst_23 {dimension_numbers = #tpu.dot_dimension_numbers<[1], [0], [0], [1], [0, 0, 1, 1], [], []>} : vector<128x32xf32>, vector<32x64xf32>, vector<128x64xf32> -> vector<128x64xf32>
    %36 = arith.addf %25, %35 : vector<128x64xf32>
    %c0_24 = arith.constant 0 : index
    %c0_25 = arith.constant 0 : index
    %37 = vector.load %arg8[%c0_24, %c0_25] : memref<3x128xf32, #tpu.memory_space<vmem>>, vector<1x64xf32>
    %38 = vector.broadcast %37 : vector<1x64xf32> to vector<128x64xf32>
    %39 = arith.addf %36, %38 : vector<128x64xf32>
    %40 = tpu.iota {dimensions = array<i32: 0>} : vector<128x64xi32>
    %41 = tpu.iota {dimensions = array<i32: 1>} : vector<128x64xi32>
    %c0_i32 = arith.constant 0 : i32
    %42 = vector.broadcast %c0_i32 : i32 to vector<128x64xi32>
    %c0_i32_26 = arith.constant 0 : i32
    %43 = vector.broadcast %c0_i32_26 : i32 to vector<128x64xi32>
    %44 = arith.cmpi sge, %41, %43 : vector<128x64xi32>
    %c16_i32 = arith.constant 16 : i32
    %45 = vector.broadcast %c16_i32 : i32 to vector<128x64xi32>
    %46 = arith.cmpi slt, %41, %45 : vector<128x64xi32>
    %47 = arith.andi %44, %46 : vector<128x64xi1>
    %c128_i32 = arith.constant 128 : i32
    %48 = vector.broadcast %c128_i32 : i32 to vector<128x64xi32>
    %49 = arith.select %47, %48, %42 : vector<128x64xi1>, vector<128x64xi32>
    %c16_i32_27 = arith.constant 16 : i32
    %50 = vector.broadcast %c16_i32_27 : i32 to vector<128x64xi32>
    %51 = arith.cmpi sge, %41, %50 : vector<128x64xi32>
    %c32_i32 = arith.constant 32 : i32
    %52 = vector.broadcast %c32_i32 : i32 to vector<128x64xi32>
    %53 = arith.cmpi slt, %41, %52 : vector<128x64xi32>
    %54 = arith.andi %51, %53 : vector<128x64xi1>
    %c112_i32 = arith.constant 112 : i32
    %55 = vector.broadcast %c112_i32 : i32 to vector<128x64xi32>
    %56 = arith.select %54, %55, %49 : vector<128x64xi1>, vector<128x64xi32>
    %c32_i32_28 = arith.constant 32 : i32
    %57 = vector.broadcast %c32_i32_28 : i32 to vector<128x64xi32>
    %58 = arith.cmpi sge, %41, %57 : vector<128x64xi32>
    %c64_i32 = arith.constant 64 : i32
    %59 = vector.broadcast %c64_i32 : i32 to vector<128x64xi32>
    %60 = arith.cmpi slt, %41, %59 : vector<128x64xi32>
    %61 = arith.andi %58, %60 : vector<128x64xi1>
    %c96_i32 = arith.constant 96 : i32
    %62 = vector.broadcast %c96_i32 : i32 to vector<128x64xi32>
    %63 = arith.select %61, %62, %56 : vector<128x64xi1>, vector<128x64xi32>
    %64 = arith.cmpi slt, %40, %63 : vector<128x64xi32>
    %cst_29 = arith.constant 0.000000e+00 : f32
    %65 = vector.broadcast %cst_29 : f32 to vector<128x64xf32>
    %66 = arith.maximumf %39, %65 : vector<128x64xf32>
    %cst_30 = arith.constant 0.000000e+00 : f32
    %67 = vector.broadcast %cst_30 : f32 to vector<128x64xf32>
    %68 = arith.select %64, %66, %67 : vector<128x64xi1>, vector<128x64xf32>
    %69 = vector.extract_strided_slice %68 {offsets = [0, 0], sizes = [16, 64], strides = [1, 1]} : vector<128x64xf32> to vector<16x64xf32>
    %70 = vector.extract_strided_slice %68 {offsets = [16, 0], sizes = [16, 64], strides = [1, 1]} : vector<128x64xf32> to vector<16x64xf32>
    %71 = arith.maximumf %69, %70 : vector<16x64xf32>
    %72 = vector.extract_strided_slice %68 {offsets = [32, 0], sizes = [16, 64], strides = [1, 1]} : vector<128x64xf32> to vector<16x64xf32>
    %73 = arith.maximumf %71, %72 : vector<16x64xf32>
    %74 = vector.extract_strided_slice %68 {offsets = [48, 0], sizes = [16, 64], strides = [1, 1]} : vector<128x64xf32> to vector<16x64xf32>
    %75 = arith.maximumf %73, %74 : vector<16x64xf32>
    %76 = vector.extract_strided_slice %68 {offsets = [64, 0], sizes = [16, 64], strides = [1, 1]} : vector<128x64xf32> to vector<16x64xf32>
    %77 = arith.maximumf %75, %76 : vector<16x64xf32>
    %78 = vector.extract_strided_slice %68 {offsets = [80, 0], sizes = [16, 64], strides = [1, 1]} : vector<128x64xf32> to vector<16x64xf32>
    %79 = arith.maximumf %77, %78 : vector<16x64xf32>
    %80 = vector.extract_strided_slice %68 {offsets = [96, 0], sizes = [16, 64], strides = [1, 1]} : vector<128x64xf32> to vector<16x64xf32>
    %81 = arith.maximumf %79, %80 : vector<16x64xf32>
    %82 = vector.extract_strided_slice %68 {offsets = [112, 0], sizes = [16, 64], strides = [1, 1]} : vector<128x64xf32> to vector<16x64xf32>
    %83 = arith.maximumf %81, %82 : vector<16x64xf32>
    %c0_31 = arith.constant 0 : index
    %c0_32 = arith.constant 0 : index
    %c0_33 = arith.constant 0 : index
    %84 = vector.load %arg6[%c0_31, %c0_32, %c0_33] : memref<1x64x128xf32, #tpu.memory_space<vmem>>, vector<1x64x128xf32>
    %85 = vector.shape_cast %84 : vector<1x64x128xf32> to vector<64x128xf32>
    %cst_34 = arith.constant dense<0.000000e+00> : vector<16x128xf32>
    %86 = tpu.matmul %83, %85, %cst_34 {dimension_numbers = #tpu.dot_dimension_numbers<[1], [0], [0], [1], [0, 0, 1, 1], [], []>} : vector<16x64xf32>, vector<64x128xf32>, vector<16x128xf32> -> vector<16x128xf32>
    %c1 = arith.constant 1 : index
    %c0_35 = arith.constant 0 : index
    %87 = vector.load %arg8[%c1, %c0_35] : memref<3x128xf32, #tpu.memory_space<vmem>>, vector<1x128xf32>
    %88 = vector.broadcast %87 : vector<1x128xf32> to vector<16x128xf32>
    %89 = arith.addf %86, %88 : vector<16x128xf32>
    %90 = vector.extract_strided_slice %89 {offsets = [0, 0], sizes = [16, 64], strides = [1, 1]} : vector<16x128xf32> to vector<16x64xf32>
    %cst_36 = arith.constant 0.000000e+00 : f32
    %91 = vector.broadcast %cst_36 : f32 to vector<16x64xf32>
    %92 = arith.maximumf %90, %91 : vector<16x64xf32>
    %93 = vector.extract_strided_slice %89 {offsets = [0, 64], sizes = [16, 64], strides = [1, 1]} : vector<16x128xf32> to vector<16x64xf32>
    %94 = arith.negf %93 : vector<16x64xf32>
    %95 = math.exp %94 : vector<16x64xf32>
    %cst_37 = arith.constant 1.000000e+00 : f32
    %96 = vector.broadcast %cst_37 : f32 to vector<16x64xf32>
    %97 = arith.addf %96, %95 : vector<16x64xf32>
    %98 = arith.divf %96, %97 : vector<16x64xf32>
    %99 = arith.mulf %98, %92 : vector<16x64xf32>
    %cst_38 = arith.constant 1.000000e+00 : f32
    %100 = vector.broadcast %cst_38 : f32 to vector<16x64xf32>
    %101 = arith.subf %100, %98 : vector<16x64xf32>
    %102 = arith.mulf %101, %83 : vector<16x64xf32>
    %103 = arith.addf %99, %102 : vector<16x64xf32>
    %c0_39 = arith.constant 0 : index
    %c0_40 = arith.constant 0 : index
    %c0_41 = arith.constant 0 : index
    %104 = vector.load %arg1[%c0_39, %c0_40, %c0_41] : memref<1x16x1xi32, #tpu.memory_space<vmem>>, vector<1x16x1xi32>
    %105 = vector.shape_cast %104 : vector<1x16x1xi32> to vector<16x1xi32>
    %106 = tpu.iota {dimensions = array<i32: 1>} : vector<16x50xi32>
    %107 = vector.broadcast %105 : vector<16x1xi32> to vector<16x50xi32>
    %108 = arith.cmpi eq, %107, %106 : vector<16x50xi32>
    %cst_42 = arith.constant 1.000000e+00 : f32
    %cst_43 = arith.constant 0.000000e+00 : f32
    %109 = vector.broadcast %cst_42 : f32 to vector<16x50xf32>
    %110 = vector.broadcast %cst_43 : f32 to vector<16x50xf32>
    %111 = arith.select %108, %109, %110 : vector<16x50xi1>, vector<16x50xf32>
    %c0_44 = arith.constant 0 : index
    %c0_45 = arith.constant 0 : index
    %112 = vector.load %arg3[%c0_44, %c0_45] : memref<50x32xf32, #tpu.memory_space<vmem>>, vector<50x32xf32>
    %cst_46 = arith.constant dense<0.000000e+00> : vector<16x32xf32>
    %113 = tpu.matmul %111, %112, %cst_46 {dimension_numbers = #tpu.dot_dimension_numbers<[1], [0], [0], [1], [0, 0, 1, 1], [], []>} : vector<16x50xf32>, vector<50x32xf32>, vector<16x32xf32> -> vector<16x32xf32>
    %c0_47 = arith.constant 0 : index
    %c0_48 = arith.constant 0 : index
    %114 = vector.load %arg7[%c0_47, %c0_48] : memref<96x32xf32, #tpu.memory_space<vmem>>, vector<32x32xf32>
    %cst_49 = arith.constant dense<0.000000e+00> : vector<16x32xf32>
    %115 = tpu.matmul %113, %114, %cst_49 {dimension_numbers = #tpu.dot_dimension_numbers<[1], [0], [0], [1], [0, 0, 1, 1], [], []>} : vector<16x32xf32>, vector<32x32xf32>, vector<16x32xf32> -> vector<16x32xf32>
    %c32_50 = arith.constant 32 : index
    %c0_51 = arith.constant 0 : index
    %116 = vector.load %arg7[%c32_50, %c0_51] : memref<96x32xf32, #tpu.memory_space<vmem>>, vector<64x32xf32>
    %cst_52 = arith.constant dense<0.000000e+00> : vector<16x32xf32>
    %117 = tpu.matmul %103, %116, %cst_52 {dimension_numbers = #tpu.dot_dimension_numbers<[1], [0], [0], [1], [0, 0, 1, 1], [], []>} : vector<16x64xf32>, vector<64x32xf32>, vector<16x32xf32> -> vector<16x32xf32>
    %118 = arith.addf %115, %117 : vector<16x32xf32>
    %c2 = arith.constant 2 : index
    %c0_53 = arith.constant 0 : index
    %119 = vector.load %arg8[%c2, %c0_53] : memref<3x128xf32, #tpu.memory_space<vmem>>, vector<1x32xf32>
    %120 = vector.broadcast %119 : vector<1x32xf32> to vector<16x32xf32>
    %121 = arith.addf %118, %120 : vector<16x32xf32>
    %c0_54 = arith.constant 0 : index
    %c0_55 = arith.constant 0 : index
    %c0_56 = arith.constant 0 : index
    %122 = vector.load %arg9[%c0_54, %c0_55, %c0_56] : memref<2x32x128xf32, #tpu.memory_space<vmem>>, vector<1x32x128xf32>
    %123 = vector.shape_cast %122 : vector<1x32x128xf32> to vector<32x128xf32>
    %cst_57 = arith.constant dense<0.000000e+00> : vector<16x128xf32>
    %124 = tpu.matmul %121, %123, %cst_57 {dimension_numbers = #tpu.dot_dimension_numbers<[1], [0], [0], [1], [0, 0, 1, 1], [], []>} : vector<16x32xf32>, vector<32x128xf32>, vector<16x128xf32> -> vector<16x128xf32>
    %c0_58 = arith.constant 0 : index
    %c0_59 = arith.constant 0 : index
    %c0_60 = arith.constant 0 : index
    %125 = vector.load %arg11[%c0_58, %c0_59, %c0_60] : memref<2x1x128xf32, #tpu.memory_space<vmem>>, vector<1x1x128xf32>
    %126 = vector.shape_cast %125 : vector<1x1x128xf32> to vector<1x128xf32>
    %127 = vector.broadcast %126 : vector<1x128xf32> to vector<16x128xf32>
    %128 = arith.addf %124, %127 : vector<16x128xf32>
    %c0_61 = arith.constant 0 : index
    %c0_62 = arith.constant 0 : index
    %c0_63 = arith.constant 0 : index
    %129 = vector.load %arg10[%c0_61, %c0_62, %c0_63] : memref<2x32x128xf32, #tpu.memory_space<vmem>>, vector<1x32x128xf32>
    %130 = vector.shape_cast %129 : vector<1x32x128xf32> to vector<32x128xf32>
    %c0_64 = arith.constant 0 : index
    %c0_65 = arith.constant 0 : index
    %c0_66 = arith.constant 0 : index
    %131 = vector.load %arg12[%c0_64, %c0_65, %c0_66] : memref<2x32x32xf32, #tpu.memory_space<vmem>>, vector<1x32x32xf32>
    %132 = vector.shape_cast %131 : vector<1x32x32xf32> to vector<32x32xf32>
    %cst_67 = arith.constant 0.000000e+00 : f32
    %133 = vector.broadcast %cst_67 : f32 to vector<2x32xf32>
    %cst_68 = arith.constant 0.000000e+00 : f32
    %134 = vector.broadcast %cst_68 : f32 to vector<2x32xf32>
    %135 = vector.extract_strided_slice %128 {offsets = [0, 0], sizes = [2, 128], strides = [1, 1]} : vector<16x128xf32> to vector<2x128xf32>
    %cst_69 = arith.constant dense<0.000000e+00> : vector<2x128xf32>
    %136 = tpu.matmul %134, %130, %cst_69 {dimension_numbers = #tpu.dot_dimension_numbers<[1], [0], [0], [1], [0, 0, 1, 1], [], []>} : vector<2x32xf32>, vector<32x128xf32>, vector<2x128xf32> -> vector<2x128xf32>
    %137 = arith.addf %135, %136 : vector<2x128xf32>
    %138 = arith.negf %137 : vector<2x128xf32>
    %139 = math.exp %138 : vector<2x128xf32>
    %cst_70 = arith.constant 1.000000e+00 : f32
    %140 = vector.broadcast %cst_70 : f32 to vector<2x128xf32>
    %141 = arith.addf %140, %139 : vector<2x128xf32>
    %142 = arith.divf %140, %141 : vector<2x128xf32>
    %143 = vector.extract_strided_slice %142 {offsets = [0, 0], sizes = [2, 32], strides = [1, 1]} : vector<2x128xf32> to vector<2x32xf32>
    %144 = vector.extract_strided_slice %142 {offsets = [0, 32], sizes = [2, 32], strides = [1, 1]} : vector<2x128xf32> to vector<2x32xf32>
    %145 = vector.extract_strided_slice %142 {offsets = [0, 96], sizes = [2, 32], strides = [1, 1]} : vector<2x128xf32> to vector<2x32xf32>
    %146 = vector.extract_strided_slice %137 {offsets = [0, 64], sizes = [2, 32], strides = [1, 1]} : vector<2x128xf32> to vector<2x32xf32>
    %147 = math.tanh %146 : vector<2x32xf32>
    %148 = arith.mulf %144, %133 : vector<2x32xf32>
    %149 = arith.mulf %143, %147 : vector<2x32xf32>
    %150 = arith.addf %148, %149 : vector<2x32xf32>
    %cst_71 = arith.constant -3.000000e+00 : f32
    %cst_72 = arith.constant 3.000000e+00 : f32
    %151 = vector.broadcast %cst_71 : f32 to vector<2x32xf32>
    %152 = arith.maximumf %151, %150 : vector<2x32xf32>
    %153 = vector.broadcast %cst_72 : f32 to vector<2x32xf32>
    %154 = arith.minimumf %153, %152 : vector<2x32xf32>
    %155 = math.tanh %154 : vector<2x32xf32>
    %156 = arith.mulf %145, %155 : vector<2x32xf32>
    %cst_73 = arith.constant dense<0.000000e+00> : vector<2x32xf32>
    %157 = tpu.matmul %156, %132, %cst_73 {dimension_numbers = #tpu.dot_dimension_numbers<[1], [0], [0], [1], [0, 0, 1, 1], [], []>} : vector<2x32xf32>, vector<32x32xf32>, vector<2x32xf32> -> vector<2x32xf32>
    %cst_74 = arith.constant -3.000000e+00 : f32
    %cst_75 = arith.constant 3.000000e+00 : f32
    %158 = vector.broadcast %cst_74 : f32 to vector<2x32xf32>
    %159 = arith.maximumf %158, %157 : vector<2x32xf32>
    %160 = vector.broadcast %cst_75 : f32 to vector<2x32xf32>
    %161 = arith.minimumf %160, %159 : vector<2x32xf32>
    %162 = vector.extract_strided_slice %128 {offsets = [2, 0], sizes = [2, 128], strides = [1, 1]} : vector<16x128xf32> to vector<2x128xf32>
    %cst_76 = arith.constant dense<0.000000e+00> : vector<2x128xf32>
    %163 = tpu.matmul %161, %130, %cst_76 {dimension_numbers = #tpu.dot_dimension_numbers<[1], [0], [0], [1], [0, 0, 1, 1], [], []>} : vector<2x32xf32>, vector<32x128xf32>, vector<2x128xf32> -> vector<2x128xf32>
    %164 = arith.addf %162, %163 : vector<2x128xf32>
    %165 = arith.negf %164 : vector<2x128xf32>
    %166 = math.exp %165 : vector<2x128xf32>
    %cst_77 = arith.constant 1.000000e+00 : f32
    %167 = vector.broadcast %cst_77 : f32 to vector<2x128xf32>
    %168 = arith.addf %167, %166 : vector<2x128xf32>
    %169 = arith.divf %167, %168 : vector<2x128xf32>
    %170 = vector.extract_strided_slice %169 {offsets = [0, 0], sizes = [2, 32], strides = [1, 1]} : vector<2x128xf32> to vector<2x32xf32>
    %171 = vector.extract_strided_slice %169 {offsets = [0, 32], sizes = [2, 32], strides = [1, 1]} : vector<2x128xf32> to vector<2x32xf32>
    %172 = vector.extract_strided_slice %169 {offsets = [0, 96], sizes = [2, 32], strides = [1, 1]} : vector<2x128xf32> to vector<2x32xf32>
    %173 = vector.extract_strided_slice %164 {offsets = [0, 64], sizes = [2, 32], strides = [1, 1]} : vector<2x128xf32> to vector<2x32xf32>
    %174 = math.tanh %173 : vector<2x32xf32>
    %175 = arith.mulf %171, %154 : vector<2x32xf32>
    %176 = arith.mulf %170, %174 : vector<2x32xf32>
    %177 = arith.addf %175, %176 : vector<2x32xf32>
    %cst_78 = arith.constant -3.000000e+00 : f32
    %cst_79 = arith.constant 3.000000e+00 : f32
    %178 = vector.broadcast %cst_78 : f32 to vector<2x32xf32>
    %179 = arith.maximumf %178, %177 : vector<2x32xf32>
    %180 = vector.broadcast %cst_79 : f32 to vector<2x32xf32>
    %181 = arith.minimumf %180, %179 : vector<2x32xf32>
    %182 = math.tanh %181 : vector<2x32xf32>
    %183 = arith.mulf %172, %182 : vector<2x32xf32>
    %cst_80 = arith.constant dense<0.000000e+00> : vector<2x32xf32>
    %184 = tpu.matmul %183, %132, %cst_80 {dimension_numbers = #tpu.dot_dimension_numbers<[1], [0], [0], [1], [0, 0, 1, 1], [], []>} : vector<2x32xf32>, vector<32x32xf32>, vector<2x32xf32> -> vector<2x32xf32>
    %cst_81 = arith.constant -3.000000e+00 : f32
    %cst_82 = arith.constant 3.000000e+00 : f32
    %185 = vector.broadcast %cst_81 : f32 to vector<2x32xf32>
    %186 = arith.maximumf %185, %184 : vector<2x32xf32>
    %187 = vector.broadcast %cst_82 : f32 to vector<2x32xf32>
    %188 = arith.minimumf %187, %186 : vector<2x32xf32>
    %189 = vector.extract_strided_slice %128 {offsets = [4, 0], sizes = [2, 128], strides = [1, 1]} : vector<16x128xf32> to vector<2x128xf32>
    %cst_83 = arith.constant dense<0.000000e+00> : vector<2x128xf32>
    %190 = tpu.matmul %188, %130, %cst_83 {dimension_numbers = #tpu.dot_dimension_numbers<[1], [0], [0], [1], [0, 0, 1, 1], [], []>} : vector<2x32xf32>, vector<32x128xf32>, vector<2x128xf32> -> vector<2x128xf32>
    %191 = arith.addf %189, %190 : vector<2x128xf32>
    %192 = arith.negf %191 : vector<2x128xf32>
    %193 = math.exp %192 : vector<2x128xf32>
    %cst_84 = arith.constant 1.000000e+00 : f32
    %194 = vector.broadcast %cst_84 : f32 to vector<2x128xf32>
    %195 = arith.addf %194, %193 : vector<2x128xf32>
    %196 = arith.divf %194, %195 : vector<2x128xf32>
    %197 = vector.extract_strided_slice %196 {offsets = [0, 0], sizes = [2, 32], strides = [1, 1]} : vector<2x128xf32> to vector<2x32xf32>
    %198 = vector.extract_strided_slice %196 {offsets = [0, 32], sizes = [2, 32], strides = [1, 1]} : vector<2x128xf32> to vector<2x32xf32>
    %199 = vector.extract_strided_slice %196 {offsets = [0, 96], sizes = [2, 32], strides = [1, 1]} : vector<2x128xf32> to vector<2x32xf32>
    %200 = vector.extract_strided_slice %191 {offsets = [0, 64], sizes = [2, 32], strides = [1, 1]} : vector<2x128xf32> to vector<2x32xf32>
    %201 = math.tanh %200 : vector<2x32xf32>
    %202 = arith.mulf %198, %181 : vector<2x32xf32>
    %203 = arith.mulf %197, %201 : vector<2x32xf32>
    %204 = arith.addf %202, %203 : vector<2x32xf32>
    %cst_85 = arith.constant -3.000000e+00 : f32
    %cst_86 = arith.constant 3.000000e+00 : f32
    %205 = vector.broadcast %cst_85 : f32 to vector<2x32xf32>
    %206 = arith.maximumf %205, %204 : vector<2x32xf32>
    %207 = vector.broadcast %cst_86 : f32 to vector<2x32xf32>
    %208 = arith.minimumf %207, %206 : vector<2x32xf32>
    %209 = math.tanh %208 : vector<2x32xf32>
    %210 = arith.mulf %199, %209 : vector<2x32xf32>
    %cst_87 = arith.constant dense<0.000000e+00> : vector<2x32xf32>
    %211 = tpu.matmul %210, %132, %cst_87 {dimension_numbers = #tpu.dot_dimension_numbers<[1], [0], [0], [1], [0, 0, 1, 1], [], []>} : vector<2x32xf32>, vector<32x32xf32>, vector<2x32xf32> -> vector<2x32xf32>
    %cst_88 = arith.constant -3.000000e+00 : f32
    %cst_89 = arith.constant 3.000000e+00 : f32
    %212 = vector.broadcast %cst_88 : f32 to vector<2x32xf32>
    %213 = arith.maximumf %212, %211 : vector<2x32xf32>
    %214 = vector.broadcast %cst_89 : f32 to vector<2x32xf32>
    %215 = arith.minimumf %214, %213 : vector<2x32xf32>
    %216 = vector.extract_strided_slice %128 {offsets = [6, 0], sizes = [2, 128], strides = [1, 1]} : vector<16x128xf32> to vector<2x128xf32>
    %cst_90 = arith.constant dense<0.000000e+00> : vector<2x128xf32>
    %217 = tpu.matmul %215, %130, %cst_90 {dimension_numbers = #tpu.dot_dimension_numbers<[1], [0], [0], [1], [0, 0, 1, 1], [], []>} : vector<2x32xf32>, vector<32x128xf32>, vector<2x128xf32> -> vector<2x128xf32>
    %218 = arith.addf %216, %217 : vector<2x128xf32>
    %219 = arith.negf %218 : vector<2x128xf32>
    %220 = math.exp %219 : vector<2x128xf32>
    %cst_91 = arith.constant 1.000000e+00 : f32
    %221 = vector.broadcast %cst_91 : f32 to vector<2x128xf32>
    %222 = arith.addf %221, %220 : vector<2x128xf32>
    %223 = arith.divf %221, %222 : vector<2x128xf32>
    %224 = vector.extract_strided_slice %223 {offsets = [0, 0], sizes = [2, 32], strides = [1, 1]} : vector<2x128xf32> to vector<2x32xf32>
    %225 = vector.extract_strided_slice %223 {offsets = [0, 32], sizes = [2, 32], strides = [1, 1]} : vector<2x128xf32> to vector<2x32xf32>
    %226 = vector.extract_strided_slice %223 {offsets = [0, 96], sizes = [2, 32], strides = [1, 1]} : vector<2x128xf32> to vector<2x32xf32>
    %227 = vector.extract_strided_slice %218 {offsets = [0, 64], sizes = [2, 32], strides = [1, 1]} : vector<2x128xf32> to vector<2x32xf32>
    %228 = math.tanh %227 : vector<2x32xf32>
    %229 = arith.mulf %225, %208 : vector<2x32xf32>
    %230 = arith.mulf %224, %228 : vector<2x32xf32>
    %231 = arith.addf %229, %230 : vector<2x32xf32>
    %cst_92 = arith.constant -3.000000e+00 : f32
    %cst_93 = arith.constant 3.000000e+00 : f32
    %232 = vector.broadcast %cst_92 : f32 to vector<2x32xf32>
    %233 = arith.maximumf %232, %231 : vector<2x32xf32>
    %234 = vector.broadcast %cst_93 : f32 to vector<2x32xf32>
    %235 = arith.minimumf %234, %233 : vector<2x32xf32>
    %236 = math.tanh %235 : vector<2x32xf32>
    %237 = arith.mulf %226, %236 : vector<2x32xf32>
    %cst_94 = arith.constant dense<0.000000e+00> : vector<2x32xf32>
    %238 = tpu.matmul %237, %132, %cst_94 {dimension_numbers = #tpu.dot_dimension_numbers<[1], [0], [0], [1], [0, 0, 1, 1], [], []>} : vector<2x32xf32>, vector<32x32xf32>, vector<2x32xf32> -> vector<2x32xf32>
    %cst_95 = arith.constant -3.000000e+00 : f32
    %cst_96 = arith.constant 3.000000e+00 : f32
    %239 = vector.broadcast %cst_95 : f32 to vector<2x32xf32>
    %240 = arith.maximumf %239, %238 : vector<2x32xf32>
    %241 = vector.broadcast %cst_96 : f32 to vector<2x32xf32>
    %242 = arith.minimumf %241, %240 : vector<2x32xf32>
    %243 = vector.extract_strided_slice %128 {offsets = [8, 0], sizes = [2, 128], strides = [1, 1]} : vector<16x128xf32> to vector<2x128xf32>
    %cst_97 = arith.constant dense<0.000000e+00> : vector<2x128xf32>
    %244 = tpu.matmul %242, %130, %cst_97 {dimension_numbers = #tpu.dot_dimension_numbers<[1], [0], [0], [1], [0, 0, 1, 1], [], []>} : vector<2x32xf32>, vector<32x128xf32>, vector<2x128xf32> -> vector<2x128xf32>
    %245 = arith.addf %243, %244 : vector<2x128xf32>
    %246 = arith.negf %245 : vector<2x128xf32>
    %247 = math.exp %246 : vector<2x128xf32>
    %cst_98 = arith.constant 1.000000e+00 : f32
    %248 = vector.broadcast %cst_98 : f32 to vector<2x128xf32>
    %249 = arith.addf %248, %247 : vector<2x128xf32>
    %250 = arith.divf %248, %249 : vector<2x128xf32>
    %251 = vector.extract_strided_slice %250 {offsets = [0, 0], sizes = [2, 32], strides = [1, 1]} : vector<2x128xf32> to vector<2x32xf32>
    %252 = vector.extract_strided_slice %250 {offsets = [0, 32], sizes = [2, 32], strides = [1, 1]} : vector<2x128xf32> to vector<2x32xf32>
    %253 = vector.extract_strided_slice %250 {offsets = [0, 96], sizes = [2, 32], strides = [1, 1]} : vector<2x128xf32> to vector<2x32xf32>
    %254 = vector.extract_strided_slice %245 {offsets = [0, 64], sizes = [2, 32], strides = [1, 1]} : vector<2x128xf32> to vector<2x32xf32>
    %255 = math.tanh %254 : vector<2x32xf32>
    %256 = arith.mulf %252, %235 : vector<2x32xf32>
    %257 = arith.mulf %251, %255 : vector<2x32xf32>
    %258 = arith.addf %256, %257 : vector<2x32xf32>
    %cst_99 = arith.constant -3.000000e+00 : f32
    %cst_100 = arith.constant 3.000000e+00 : f32
    %259 = vector.broadcast %cst_99 : f32 to vector<2x32xf32>
    %260 = arith.maximumf %259, %258 : vector<2x32xf32>
    %261 = vector.broadcast %cst_100 : f32 to vector<2x32xf32>
    %262 = arith.minimumf %261, %260 : vector<2x32xf32>
    %263 = math.tanh %262 : vector<2x32xf32>
    %264 = arith.mulf %253, %263 : vector<2x32xf32>
    %cst_101 = arith.constant dense<0.000000e+00> : vector<2x32xf32>
    %265 = tpu.matmul %264, %132, %cst_101 {dimension_numbers = #tpu.dot_dimension_numbers<[1], [0], [0], [1], [0, 0, 1, 1], [], []>} : vector<2x32xf32>, vector<32x32xf32>, vector<2x32xf32> -> vector<2x32xf32>
    %cst_102 = arith.constant -3.000000e+00 : f32
    %cst_103 = arith.constant 3.000000e+00 : f32
    %266 = vector.broadcast %cst_102 : f32 to vector<2x32xf32>
    %267 = arith.maximumf %266, %265 : vector<2x32xf32>
    %268 = vector.broadcast %cst_103 : f32 to vector<2x32xf32>
    %269 = arith.minimumf %268, %267 : vector<2x32xf32>
    %270 = vector.extract_strided_slice %128 {offsets = [10, 0], sizes = [2, 128], strides = [1, 1]} : vector<16x128xf32> to vector<2x128xf32>
    %cst_104 = arith.constant dense<0.000000e+00> : vector<2x128xf32>
    %271 = tpu.matmul %269, %130, %cst_104 {dimension_numbers = #tpu.dot_dimension_numbers<[1], [0], [0], [1], [0, 0, 1, 1], [], []>} : vector<2x32xf32>, vector<32x128xf32>, vector<2x128xf32> -> vector<2x128xf32>
    %272 = arith.addf %270, %271 : vector<2x128xf32>
    %273 = arith.negf %272 : vector<2x128xf32>
    %274 = math.exp %273 : vector<2x128xf32>
    %cst_105 = arith.constant 1.000000e+00 : f32
    %275 = vector.broadcast %cst_105 : f32 to vector<2x128xf32>
    %276 = arith.addf %275, %274 : vector<2x128xf32>
    %277 = arith.divf %275, %276 : vector<2x128xf32>
    %278 = vector.extract_strided_slice %277 {offsets = [0, 0], sizes = [2, 32], strides = [1, 1]} : vector<2x128xf32> to vector<2x32xf32>
    %279 = vector.extract_strided_slice %277 {offsets = [0, 32], sizes = [2, 32], strides = [1, 1]} : vector<2x128xf32> to vector<2x32xf32>
    %280 = vector.extract_strided_slice %277 {offsets = [0, 96], sizes = [2, 32], strides = [1, 1]} : vector<2x128xf32> to vector<2x32xf32>
    %281 = vector.extract_strided_slice %272 {offsets = [0, 64], sizes = [2, 32], strides = [1, 1]} : vector<2x128xf32> to vector<2x32xf32>
    %282 = math.tanh %281 : vector<2x32xf32>
    %283 = arith.mulf %279, %262 : vector<2x32xf32>
    %284 = arith.mulf %278, %282 : vector<2x32xf32>
    %285 = arith.addf %283, %284 : vector<2x32xf32>
    %cst_106 = arith.constant -3.000000e+00 : f32
    %cst_107 = arith.constant 3.000000e+00 : f32
    %286 = vector.broadcast %cst_106 : f32 to vector<2x32xf32>
    %287 = arith.maximumf %286, %285 : vector<2x32xf32>
    %288 = vector.broadcast %cst_107 : f32 to vector<2x32xf32>
    %289 = arith.minimumf %288, %287 : vector<2x32xf32>
    %290 = math.tanh %289 : vector<2x32xf32>
    %291 = arith.mulf %280, %290 : vector<2x32xf32>
    %cst_108 = arith.constant dense<0.000000e+00> : vector<2x32xf32>
    %292 = tpu.matmul %291, %132, %cst_108 {dimension_numbers = #tpu.dot_dimension_numbers<[1], [0], [0], [1], [0, 0, 1, 1], [], []>} : vector<2x32xf32>, vector<32x32xf32>, vector<2x32xf32> -> vector<2x32xf32>
    %cst_109 = arith.constant -3.000000e+00 : f32
    %cst_110 = arith.constant 3.000000e+00 : f32
    %293 = vector.broadcast %cst_109 : f32 to vector<2x32xf32>
    %294 = arith.maximumf %293, %292 : vector<2x32xf32>
    %295 = vector.broadcast %cst_110 : f32 to vector<2x32xf32>
    %296 = arith.minimumf %295, %294 : vector<2x32xf32>
    %297 = vector.extract_strided_slice %128 {offsets = [12, 0], sizes = [2, 128], strides = [1, 1]} : vector<16x128xf32> to vector<2x128xf32>
    %cst_111 = arith.constant dense<0.000000e+00> : vector<2x128xf32>
    %298 = tpu.matmul %296, %130, %cst_111 {dimension_numbers = #tpu.dot_dimension_numbers<[1], [0], [0], [1], [0, 0, 1, 1], [], []>} : vector<2x32xf32>, vector<32x128xf32>, vector<2x128xf32> -> vector<2x128xf32>
    %299 = arith.addf %297, %298 : vector<2x128xf32>
    %300 = arith.negf %299 : vector<2x128xf32>
    %301 = math.exp %300 : vector<2x128xf32>
    %cst_112 = arith.constant 1.000000e+00 : f32
    %302 = vector.broadcast %cst_112 : f32 to vector<2x128xf32>
    %303 = arith.addf %302, %301 : vector<2x128xf32>
    %304 = arith.divf %302, %303 : vector<2x128xf32>
    %305 = vector.extract_strided_slice %304 {offsets = [0, 0], sizes = [2, 32], strides = [1, 1]} : vector<2x128xf32> to vector<2x32xf32>
    %306 = vector.extract_strided_slice %304 {offsets = [0, 32], sizes = [2, 32], strides = [1, 1]} : vector<2x128xf32> to vector<2x32xf32>
    %307 = vector.extract_strided_slice %304 {offsets = [0, 96], sizes = [2, 32], strides = [1, 1]} : vector<2x128xf32> to vector<2x32xf32>
    %308 = vector.extract_strided_slice %299 {offsets = [0, 64], sizes = [2, 32], strides = [1, 1]} : vector<2x128xf32> to vector<2x32xf32>
    %309 = math.tanh %308 : vector<2x32xf32>
    %310 = arith.mulf %306, %289 : vector<2x32xf32>
    %311 = arith.mulf %305, %309 : vector<2x32xf32>
    %312 = arith.addf %310, %311 : vector<2x32xf32>
    %cst_113 = arith.constant -3.000000e+00 : f32
    %cst_114 = arith.constant 3.000000e+00 : f32
    %313 = vector.broadcast %cst_113 : f32 to vector<2x32xf32>
    %314 = arith.maximumf %313, %312 : vector<2x32xf32>
    %315 = vector.broadcast %cst_114 : f32 to vector<2x32xf32>
    %316 = arith.minimumf %315, %314 : vector<2x32xf32>
    %317 = math.tanh %316 : vector<2x32xf32>
    %318 = arith.mulf %307, %317 : vector<2x32xf32>
    %cst_115 = arith.constant dense<0.000000e+00> : vector<2x32xf32>
    %319 = tpu.matmul %318, %132, %cst_115 {dimension_numbers = #tpu.dot_dimension_numbers<[1], [0], [0], [1], [0, 0, 1, 1], [], []>} : vector<2x32xf32>, vector<32x32xf32>, vector<2x32xf32> -> vector<2x32xf32>
    %cst_116 = arith.constant -3.000000e+00 : f32
    %cst_117 = arith.constant 3.000000e+00 : f32
    %320 = vector.broadcast %cst_116 : f32 to vector<2x32xf32>
    %321 = arith.maximumf %320, %319 : vector<2x32xf32>
    %322 = vector.broadcast %cst_117 : f32 to vector<2x32xf32>
    %323 = arith.minimumf %322, %321 : vector<2x32xf32>
    %324 = vector.extract_strided_slice %128 {offsets = [14, 0], sizes = [2, 128], strides = [1, 1]} : vector<16x128xf32> to vector<2x128xf32>
    %cst_118 = arith.constant dense<0.000000e+00> : vector<2x128xf32>
    %325 = tpu.matmul %323, %130, %cst_118 {dimension_numbers = #tpu.dot_dimension_numbers<[1], [0], [0], [1], [0, 0, 1, 1], [], []>} : vector<2x32xf32>, vector<32x128xf32>, vector<2x128xf32> -> vector<2x128xf32>
    %326 = arith.addf %324, %325 : vector<2x128xf32>
    %327 = arith.negf %326 : vector<2x128xf32>
    %328 = math.exp %327 : vector<2x128xf32>
    %cst_119 = arith.constant 1.000000e+00 : f32
    %329 = vector.broadcast %cst_119 : f32 to vector<2x128xf32>
    %330 = arith.addf %329, %328 : vector<2x128xf32>
    %331 = arith.divf %329, %330 : vector<2x128xf32>
    %332 = vector.extract_strided_slice %331 {offsets = [0, 0], sizes = [2, 32], strides = [1, 1]} : vector<2x128xf32> to vector<2x32xf32>
    %333 = vector.extract_strided_slice %331 {offsets = [0, 32], sizes = [2, 32], strides = [1, 1]} : vector<2x128xf32> to vector<2x32xf32>
    %334 = vector.extract_strided_slice %331 {offsets = [0, 96], sizes = [2, 32], strides = [1, 1]} : vector<2x128xf32> to vector<2x32xf32>
    %335 = vector.extract_strided_slice %326 {offsets = [0, 64], sizes = [2, 32], strides = [1, 1]} : vector<2x128xf32> to vector<2x32xf32>
    %336 = math.tanh %335 : vector<2x32xf32>
    %337 = arith.mulf %333, %316 : vector<2x32xf32>
    %338 = arith.mulf %332, %336 : vector<2x32xf32>
    %339 = arith.addf %337, %338 : vector<2x32xf32>
    %cst_120 = arith.constant -3.000000e+00 : f32
    %cst_121 = arith.constant 3.000000e+00 : f32
    %340 = vector.broadcast %cst_120 : f32 to vector<2x32xf32>
    %341 = arith.maximumf %340, %339 : vector<2x32xf32>
    %342 = vector.broadcast %cst_121 : f32 to vector<2x32xf32>
    %343 = arith.minimumf %342, %341 : vector<2x32xf32>
    %344 = math.tanh %343 : vector<2x32xf32>
    %345 = arith.mulf %334, %344 : vector<2x32xf32>
    %cst_122 = arith.constant dense<0.000000e+00> : vector<2x32xf32>
    %346 = tpu.matmul %345, %132, %cst_122 {dimension_numbers = #tpu.dot_dimension_numbers<[1], [0], [0], [1], [0, 0, 1, 1], [], []>} : vector<2x32xf32>, vector<32x32xf32>, vector<2x32xf32> -> vector<2x32xf32>
    %cst_123 = arith.constant -3.000000e+00 : f32
    %cst_124 = arith.constant 3.000000e+00 : f32
    %347 = vector.broadcast %cst_123 : f32 to vector<2x32xf32>
    %348 = arith.maximumf %347, %346 : vector<2x32xf32>
    %349 = vector.broadcast %cst_124 : f32 to vector<2x32xf32>
    %350 = arith.minimumf %349, %348 : vector<2x32xf32>
    %351 = tpu.concatenate %161, %188, %215, %242, %269, %296, %323, %350 in 0 : vector<2x32xf32>, vector<2x32xf32>, vector<2x32xf32>, vector<2x32xf32>, vector<2x32xf32>, vector<2x32xf32>, vector<2x32xf32>, vector<2x32xf32> -> vector<16x32xf32>
    %c1_125 = arith.constant 1 : index
    %c0_126 = arith.constant 0 : index
    %c0_127 = arith.constant 0 : index
    %352 = vector.load %arg9[%c1_125, %c0_126, %c0_127] : memref<2x32x128xf32, #tpu.memory_space<vmem>>, vector<1x32x128xf32>
    %353 = vector.shape_cast %352 : vector<1x32x128xf32> to vector<32x128xf32>
    %cst_128 = arith.constant dense<0.000000e+00> : vector<16x128xf32>
    %354 = tpu.matmul %351, %353, %cst_128 {dimension_numbers = #tpu.dot_dimension_numbers<[1], [0], [0], [1], [0, 0, 1, 1], [], []>} : vector<16x32xf32>, vector<32x128xf32>, vector<16x128xf32> -> vector<16x128xf32>
    %c1_129 = arith.constant 1 : index
    %c0_130 = arith.constant 0 : index
    %c0_131 = arith.constant 0 : index
    %355 = vector.load %arg11[%c1_129, %c0_130, %c0_131] : memref<2x1x128xf32, #tpu.memory_space<vmem>>, vector<1x1x128xf32>
    %356 = vector.shape_cast %355 : vector<1x1x128xf32> to vector<1x128xf32>
    %357 = vector.broadcast %356 : vector<1x128xf32> to vector<16x128xf32>
    %358 = arith.addf %354, %357 : vector<16x128xf32>
    %c1_132 = arith.constant 1 : index
    %c0_133 = arith.constant 0 : index
    %c0_134 = arith.constant 0 : index
    %359 = vector.load %arg10[%c1_132, %c0_133, %c0_134] : memref<2x32x128xf32, #tpu.memory_space<vmem>>, vector<1x32x128xf32>
    %360 = vector.shape_cast %359 : vector<1x32x128xf32> to vector<32x128xf32>
    %c1_135 = arith.constant 1 : index
    %c0_136 = arith.constant 0 : index
    %c0_137 = arith.constant 0 : index
    %361 = vector.load %arg12[%c1_135, %c0_136, %c0_137] : memref<2x32x32xf32, #tpu.memory_space<vmem>>, vector<1x32x32xf32>
    %362 = vector.shape_cast %361 : vector<1x32x32xf32> to vector<32x32xf32>
    %cst_138 = arith.constant 0.000000e+00 : f32
    %363 = vector.broadcast %cst_138 : f32 to vector<2x32xf32>
    %cst_139 = arith.constant 0.000000e+00 : f32
    %364 = vector.broadcast %cst_139 : f32 to vector<2x32xf32>
    %365 = vector.extract_strided_slice %358 {offsets = [0, 0], sizes = [2, 128], strides = [1, 1]} : vector<16x128xf32> to vector<2x128xf32>
    %cst_140 = arith.constant dense<0.000000e+00> : vector<2x128xf32>
    %366 = tpu.matmul %364, %360, %cst_140 {dimension_numbers = #tpu.dot_dimension_numbers<[1], [0], [0], [1], [0, 0, 1, 1], [], []>} : vector<2x32xf32>, vector<32x128xf32>, vector<2x128xf32> -> vector<2x128xf32>
    %367 = arith.addf %365, %366 : vector<2x128xf32>
    %368 = arith.negf %367 : vector<2x128xf32>
    %369 = math.exp %368 : vector<2x128xf32>
    %cst_141 = arith.constant 1.000000e+00 : f32
    %370 = vector.broadcast %cst_141 : f32 to vector<2x128xf32>
    %371 = arith.addf %370, %369 : vector<2x128xf32>
    %372 = arith.divf %370, %371 : vector<2x128xf32>
    %373 = vector.extract_strided_slice %372 {offsets = [0, 0], sizes = [2, 32], strides = [1, 1]} : vector<2x128xf32> to vector<2x32xf32>
    %374 = vector.extract_strided_slice %372 {offsets = [0, 32], sizes = [2, 32], strides = [1, 1]} : vector<2x128xf32> to vector<2x32xf32>
    %375 = vector.extract_strided_slice %372 {offsets = [0, 96], sizes = [2, 32], strides = [1, 1]} : vector<2x128xf32> to vector<2x32xf32>
    %376 = vector.extract_strided_slice %367 {offsets = [0, 64], sizes = [2, 32], strides = [1, 1]} : vector<2x128xf32> to vector<2x32xf32>
    %377 = math.tanh %376 : vector<2x32xf32>
    %378 = arith.mulf %374, %363 : vector<2x32xf32>
    %379 = arith.mulf %373, %377 : vector<2x32xf32>
    %380 = arith.addf %378, %379 : vector<2x32xf32>
    %cst_142 = arith.constant -3.000000e+00 : f32
    %cst_143 = arith.constant 3.000000e+00 : f32
    %381 = vector.broadcast %cst_142 : f32 to vector<2x32xf32>
    %382 = arith.maximumf %381, %380 : vector<2x32xf32>
    %383 = vector.broadcast %cst_143 : f32 to vector<2x32xf32>
    %384 = arith.minimumf %383, %382 : vector<2x32xf32>
    %385 = math.tanh %384 : vector<2x32xf32>
    %386 = arith.mulf %375, %385 : vector<2x32xf32>
    %cst_144 = arith.constant dense<0.000000e+00> : vector<2x32xf32>
    %387 = tpu.matmul %386, %362, %cst_144 {dimension_numbers = #tpu.dot_dimension_numbers<[1], [0], [0], [1], [0, 0, 1, 1], [], []>} : vector<2x32xf32>, vector<32x32xf32>, vector<2x32xf32> -> vector<2x32xf32>
    %cst_145 = arith.constant -3.000000e+00 : f32
    %cst_146 = arith.constant 3.000000e+00 : f32
    %388 = vector.broadcast %cst_145 : f32 to vector<2x32xf32>
    %389 = arith.maximumf %388, %387 : vector<2x32xf32>
    %390 = vector.broadcast %cst_146 : f32 to vector<2x32xf32>
    %391 = arith.minimumf %390, %389 : vector<2x32xf32>
    %392 = vector.extract_strided_slice %358 {offsets = [2, 0], sizes = [2, 128], strides = [1, 1]} : vector<16x128xf32> to vector<2x128xf32>
    %cst_147 = arith.constant dense<0.000000e+00> : vector<2x128xf32>
    %393 = tpu.matmul %391, %360, %cst_147 {dimension_numbers = #tpu.dot_dimension_numbers<[1], [0], [0], [1], [0, 0, 1, 1], [], []>} : vector<2x32xf32>, vector<32x128xf32>, vector<2x128xf32> -> vector<2x128xf32>
    %394 = arith.addf %392, %393 : vector<2x128xf32>
    %395 = arith.negf %394 : vector<2x128xf32>
    %396 = math.exp %395 : vector<2x128xf32>
    %cst_148 = arith.constant 1.000000e+00 : f32
    %397 = vector.broadcast %cst_148 : f32 to vector<2x128xf32>
    %398 = arith.addf %397, %396 : vector<2x128xf32>
    %399 = arith.divf %397, %398 : vector<2x128xf32>
    %400 = vector.extract_strided_slice %399 {offsets = [0, 0], sizes = [2, 32], strides = [1, 1]} : vector<2x128xf32> to vector<2x32xf32>
    %401 = vector.extract_strided_slice %399 {offsets = [0, 32], sizes = [2, 32], strides = [1, 1]} : vector<2x128xf32> to vector<2x32xf32>
    %402 = vector.extract_strided_slice %399 {offsets = [0, 96], sizes = [2, 32], strides = [1, 1]} : vector<2x128xf32> to vector<2x32xf32>
    %403 = vector.extract_strided_slice %394 {offsets = [0, 64], sizes = [2, 32], strides = [1, 1]} : vector<2x128xf32> to vector<2x32xf32>
    %404 = math.tanh %403 : vector<2x32xf32>
    %405 = arith.mulf %401, %384 : vector<2x32xf32>
    %406 = arith.mulf %400, %404 : vector<2x32xf32>
    %407 = arith.addf %405, %406 : vector<2x32xf32>
    %cst_149 = arith.constant -3.000000e+00 : f32
    %cst_150 = arith.constant 3.000000e+00 : f32
    %408 = vector.broadcast %cst_149 : f32 to vector<2x32xf32>
    %409 = arith.maximumf %408, %407 : vector<2x32xf32>
    %410 = vector.broadcast %cst_150 : f32 to vector<2x32xf32>
    %411 = arith.minimumf %410, %409 : vector<2x32xf32>
    %412 = math.tanh %411 : vector<2x32xf32>
    %413 = arith.mulf %402, %412 : vector<2x32xf32>
    %cst_151 = arith.constant dense<0.000000e+00> : vector<2x32xf32>
    %414 = tpu.matmul %413, %362, %cst_151 {dimension_numbers = #tpu.dot_dimension_numbers<[1], [0], [0], [1], [0, 0, 1, 1], [], []>} : vector<2x32xf32>, vector<32x32xf32>, vector<2x32xf32> -> vector<2x32xf32>
    %cst_152 = arith.constant -3.000000e+00 : f32
    %cst_153 = arith.constant 3.000000e+00 : f32
    %415 = vector.broadcast %cst_152 : f32 to vector<2x32xf32>
    %416 = arith.maximumf %415, %414 : vector<2x32xf32>
    %417 = vector.broadcast %cst_153 : f32 to vector<2x32xf32>
    %418 = arith.minimumf %417, %416 : vector<2x32xf32>
    %419 = vector.extract_strided_slice %358 {offsets = [4, 0], sizes = [2, 128], strides = [1, 1]} : vector<16x128xf32> to vector<2x128xf32>
    %cst_154 = arith.constant dense<0.000000e+00> : vector<2x128xf32>
    %420 = tpu.matmul %418, %360, %cst_154 {dimension_numbers = #tpu.dot_dimension_numbers<[1], [0], [0], [1], [0, 0, 1, 1], [], []>} : vector<2x32xf32>, vector<32x128xf32>, vector<2x128xf32> -> vector<2x128xf32>
    %421 = arith.addf %419, %420 : vector<2x128xf32>
    %422 = arith.negf %421 : vector<2x128xf32>
    %423 = math.exp %422 : vector<2x128xf32>
    %cst_155 = arith.constant 1.000000e+00 : f32
    %424 = vector.broadcast %cst_155 : f32 to vector<2x128xf32>
    %425 = arith.addf %424, %423 : vector<2x128xf32>
    %426 = arith.divf %424, %425 : vector<2x128xf32>
    %427 = vector.extract_strided_slice %426 {offsets = [0, 0], sizes = [2, 32], strides = [1, 1]} : vector<2x128xf32> to vector<2x32xf32>
    %428 = vector.extract_strided_slice %426 {offsets = [0, 32], sizes = [2, 32], strides = [1, 1]} : vector<2x128xf32> to vector<2x32xf32>
    %429 = vector.extract_strided_slice %426 {offsets = [0, 96], sizes = [2, 32], strides = [1, 1]} : vector<2x128xf32> to vector<2x32xf32>
    %430 = vector.extract_strided_slice %421 {offsets = [0, 64], sizes = [2, 32], strides = [1, 1]} : vector<2x128xf32> to vector<2x32xf32>
    %431 = math.tanh %430 : vector<2x32xf32>
    %432 = arith.mulf %428, %411 : vector<2x32xf32>
    %433 = arith.mulf %427, %431 : vector<2x32xf32>
    %434 = arith.addf %432, %433 : vector<2x32xf32>
    %cst_156 = arith.constant -3.000000e+00 : f32
    %cst_157 = arith.constant 3.000000e+00 : f32
    %435 = vector.broadcast %cst_156 : f32 to vector<2x32xf32>
    %436 = arith.maximumf %435, %434 : vector<2x32xf32>
    %437 = vector.broadcast %cst_157 : f32 to vector<2x32xf32>
    %438 = arith.minimumf %437, %436 : vector<2x32xf32>
    %439 = math.tanh %438 : vector<2x32xf32>
    %440 = arith.mulf %429, %439 : vector<2x32xf32>
    %cst_158 = arith.constant dense<0.000000e+00> : vector<2x32xf32>
    %441 = tpu.matmul %440, %362, %cst_158 {dimension_numbers = #tpu.dot_dimension_numbers<[1], [0], [0], [1], [0, 0, 1, 1], [], []>} : vector<2x32xf32>, vector<32x32xf32>, vector<2x32xf32> -> vector<2x32xf32>
    %cst_159 = arith.constant -3.000000e+00 : f32
    %cst_160 = arith.constant 3.000000e+00 : f32
    %442 = vector.broadcast %cst_159 : f32 to vector<2x32xf32>
    %443 = arith.maximumf %442, %441 : vector<2x32xf32>
    %444 = vector.broadcast %cst_160 : f32 to vector<2x32xf32>
    %445 = arith.minimumf %444, %443 : vector<2x32xf32>
    %446 = vector.extract_strided_slice %358 {offsets = [6, 0], sizes = [2, 128], strides = [1, 1]} : vector<16x128xf32> to vector<2x128xf32>
    %cst_161 = arith.constant dense<0.000000e+00> : vector<2x128xf32>
    %447 = tpu.matmul %445, %360, %cst_161 {dimension_numbers = #tpu.dot_dimension_numbers<[1], [0], [0], [1], [0, 0, 1, 1], [], []>} : vector<2x32xf32>, vector<32x128xf32>, vector<2x128xf32> -> vector<2x128xf32>
    %448 = arith.addf %446, %447 : vector<2x128xf32>
    %449 = arith.negf %448 : vector<2x128xf32>
    %450 = math.exp %449 : vector<2x128xf32>
    %cst_162 = arith.constant 1.000000e+00 : f32
    %451 = vector.broadcast %cst_162 : f32 to vector<2x128xf32>
    %452 = arith.addf %451, %450 : vector<2x128xf32>
    %453 = arith.divf %451, %452 : vector<2x128xf32>
    %454 = vector.extract_strided_slice %453 {offsets = [0, 0], sizes = [2, 32], strides = [1, 1]} : vector<2x128xf32> to vector<2x32xf32>
    %455 = vector.extract_strided_slice %453 {offsets = [0, 32], sizes = [2, 32], strides = [1, 1]} : vector<2x128xf32> to vector<2x32xf32>
    %456 = vector.extract_strided_slice %453 {offsets = [0, 96], sizes = [2, 32], strides = [1, 1]} : vector<2x128xf32> to vector<2x32xf32>
    %457 = vector.extract_strided_slice %448 {offsets = [0, 64], sizes = [2, 32], strides = [1, 1]} : vector<2x128xf32> to vector<2x32xf32>
    %458 = math.tanh %457 : vector<2x32xf32>
    %459 = arith.mulf %455, %438 : vector<2x32xf32>
    %460 = arith.mulf %454, %458 : vector<2x32xf32>
    %461 = arith.addf %459, %460 : vector<2x32xf32>
    %cst_163 = arith.constant -3.000000e+00 : f32
    %cst_164 = arith.constant 3.000000e+00 : f32
    %462 = vector.broadcast %cst_163 : f32 to vector<2x32xf32>
    %463 = arith.maximumf %462, %461 : vector<2x32xf32>
    %464 = vector.broadcast %cst_164 : f32 to vector<2x32xf32>
    %465 = arith.minimumf %464, %463 : vector<2x32xf32>
    %466 = math.tanh %465 : vector<2x32xf32>
    %467 = arith.mulf %456, %466 : vector<2x32xf32>
    %cst_165 = arith.constant dense<0.000000e+00> : vector<2x32xf32>
    %468 = tpu.matmul %467, %362, %cst_165 {dimension_numbers = #tpu.dot_dimension_numbers<[1], [0], [0], [1], [0, 0, 1, 1], [], []>} : vector<2x32xf32>, vector<32x32xf32>, vector<2x32xf32> -> vector<2x32xf32>
    %cst_166 = arith.constant -3.000000e+00 : f32
    %cst_167 = arith.constant 3.000000e+00 : f32
    %469 = vector.broadcast %cst_166 : f32 to vector<2x32xf32>
    %470 = arith.maximumf %469, %468 : vector<2x32xf32>
    %471 = vector.broadcast %cst_167 : f32 to vector<2x32xf32>
    %472 = arith.minimumf %471, %470 : vector<2x32xf32>
    %473 = vector.extract_strided_slice %358 {offsets = [8, 0], sizes = [2, 128], strides = [1, 1]} : vector<16x128xf32> to vector<2x128xf32>
    %cst_168 = arith.constant dense<0.000000e+00> : vector<2x128xf32>
    %474 = tpu.matmul %472, %360, %cst_168 {dimension_numbers = #tpu.dot_dimension_numbers<[1], [0], [0], [1], [0, 0, 1, 1], [], []>} : vector<2x32xf32>, vector<32x128xf32>, vector<2x128xf32> -> vector<2x128xf32>
    %475 = arith.addf %473, %474 : vector<2x128xf32>
    %476 = arith.negf %475 : vector<2x128xf32>
    %477 = math.exp %476 : vector<2x128xf32>
    %cst_169 = arith.constant 1.000000e+00 : f32
    %478 = vector.broadcast %cst_169 : f32 to vector<2x128xf32>
    %479 = arith.addf %478, %477 : vector<2x128xf32>
    %480 = arith.divf %478, %479 : vector<2x128xf32>
    %481 = vector.extract_strided_slice %480 {offsets = [0, 0], sizes = [2, 32], strides = [1, 1]} : vector<2x128xf32> to vector<2x32xf32>
    %482 = vector.extract_strided_slice %480 {offsets = [0, 32], sizes = [2, 32], strides = [1, 1]} : vector<2x128xf32> to vector<2x32xf32>
    %483 = vector.extract_strided_slice %480 {offsets = [0, 96], sizes = [2, 32], strides = [1, 1]} : vector<2x128xf32> to vector<2x32xf32>
    %484 = vector.extract_strided_slice %475 {offsets = [0, 64], sizes = [2, 32], strides = [1, 1]} : vector<2x128xf32> to vector<2x32xf32>
    %485 = math.tanh %484 : vector<2x32xf32>
    %486 = arith.mulf %482, %465 : vector<2x32xf32>
    %487 = arith.mulf %481, %485 : vector<2x32xf32>
    %488 = arith.addf %486, %487 : vector<2x32xf32>
    %cst_170 = arith.constant -3.000000e+00 : f32
    %cst_171 = arith.constant 3.000000e+00 : f32
    %489 = vector.broadcast %cst_170 : f32 to vector<2x32xf32>
    %490 = arith.maximumf %489, %488 : vector<2x32xf32>
    %491 = vector.broadcast %cst_171 : f32 to vector<2x32xf32>
    %492 = arith.minimumf %491, %490 : vector<2x32xf32>
    %493 = math.tanh %492 : vector<2x32xf32>
    %494 = arith.mulf %483, %493 : vector<2x32xf32>
    %cst_172 = arith.constant dense<0.000000e+00> : vector<2x32xf32>
    %495 = tpu.matmul %494, %362, %cst_172 {dimension_numbers = #tpu.dot_dimension_numbers<[1], [0], [0], [1], [0, 0, 1, 1], [], []>} : vector<2x32xf32>, vector<32x32xf32>, vector<2x32xf32> -> vector<2x32xf32>
    %cst_173 = arith.constant -3.000000e+00 : f32
    %cst_174 = arith.constant 3.000000e+00 : f32
    %496 = vector.broadcast %cst_173 : f32 to vector<2x32xf32>
    %497 = arith.maximumf %496, %495 : vector<2x32xf32>
    %498 = vector.broadcast %cst_174 : f32 to vector<2x32xf32>
    %499 = arith.minimumf %498, %497 : vector<2x32xf32>
    %500 = vector.extract_strided_slice %358 {offsets = [10, 0], sizes = [2, 128], strides = [1, 1]} : vector<16x128xf32> to vector<2x128xf32>
    %cst_175 = arith.constant dense<0.000000e+00> : vector<2x128xf32>
    %501 = tpu.matmul %499, %360, %cst_175 {dimension_numbers = #tpu.dot_dimension_numbers<[1], [0], [0], [1], [0, 0, 1, 1], [], []>} : vector<2x32xf32>, vector<32x128xf32>, vector<2x128xf32> -> vector<2x128xf32>
    %502 = arith.addf %500, %501 : vector<2x128xf32>
    %503 = arith.negf %502 : vector<2x128xf32>
    %504 = math.exp %503 : vector<2x128xf32>
    %cst_176 = arith.constant 1.000000e+00 : f32
    %505 = vector.broadcast %cst_176 : f32 to vector<2x128xf32>
    %506 = arith.addf %505, %504 : vector<2x128xf32>
    %507 = arith.divf %505, %506 : vector<2x128xf32>
    %508 = vector.extract_strided_slice %507 {offsets = [0, 0], sizes = [2, 32], strides = [1, 1]} : vector<2x128xf32> to vector<2x32xf32>
    %509 = vector.extract_strided_slice %507 {offsets = [0, 32], sizes = [2, 32], strides = [1, 1]} : vector<2x128xf32> to vector<2x32xf32>
    %510 = vector.extract_strided_slice %507 {offsets = [0, 96], sizes = [2, 32], strides = [1, 1]} : vector<2x128xf32> to vector<2x32xf32>
    %511 = vector.extract_strided_slice %502 {offsets = [0, 64], sizes = [2, 32], strides = [1, 1]} : vector<2x128xf32> to vector<2x32xf32>
    %512 = math.tanh %511 : vector<2x32xf32>
    %513 = arith.mulf %509, %492 : vector<2x32xf32>
    %514 = arith.mulf %508, %512 : vector<2x32xf32>
    %515 = arith.addf %513, %514 : vector<2x32xf32>
    %cst_177 = arith.constant -3.000000e+00 : f32
    %cst_178 = arith.constant 3.000000e+00 : f32
    %516 = vector.broadcast %cst_177 : f32 to vector<2x32xf32>
    %517 = arith.maximumf %516, %515 : vector<2x32xf32>
    %518 = vector.broadcast %cst_178 : f32 to vector<2x32xf32>
    %519 = arith.minimumf %518, %517 : vector<2x32xf32>
    %520 = math.tanh %519 : vector<2x32xf32>
    %521 = arith.mulf %510, %520 : vector<2x32xf32>
    %cst_179 = arith.constant dense<0.000000e+00> : vector<2x32xf32>
    %522 = tpu.matmul %521, %362, %cst_179 {dimension_numbers = #tpu.dot_dimension_numbers<[1], [0], [0], [1], [0, 0, 1, 1], [], []>} : vector<2x32xf32>, vector<32x32xf32>, vector<2x32xf32> -> vector<2x32xf32>
    %cst_180 = arith.constant -3.000000e+00 : f32
    %cst_181 = arith.constant 3.000000e+00 : f32
    %523 = vector.broadcast %cst_180 : f32 to vector<2x32xf32>
    %524 = arith.maximumf %523, %522 : vector<2x32xf32>
    %525 = vector.broadcast %cst_181 : f32 to vector<2x32xf32>
    %526 = arith.minimumf %525, %524 : vector<2x32xf32>
    %527 = vector.extract_strided_slice %358 {offsets = [12, 0], sizes = [2, 128], strides = [1, 1]} : vector<16x128xf32> to vector<2x128xf32>
    %cst_182 = arith.constant dense<0.000000e+00> : vector<2x128xf32>
    %528 = tpu.matmul %526, %360, %cst_182 {dimension_numbers = #tpu.dot_dimension_numbers<[1], [0], [0], [1], [0, 0, 1, 1], [], []>} : vector<2x32xf32>, vector<32x128xf32>, vector<2x128xf32> -> vector<2x128xf32>
    %529 = arith.addf %527, %528 : vector<2x128xf32>
    %530 = arith.negf %529 : vector<2x128xf32>
    %531 = math.exp %530 : vector<2x128xf32>
    %cst_183 = arith.constant 1.000000e+00 : f32
    %532 = vector.broadcast %cst_183 : f32 to vector<2x128xf32>
    %533 = arith.addf %532, %531 : vector<2x128xf32>
    %534 = arith.divf %532, %533 : vector<2x128xf32>
    %535 = vector.extract_strided_slice %534 {offsets = [0, 0], sizes = [2, 32], strides = [1, 1]} : vector<2x128xf32> to vector<2x32xf32>
    %536 = vector.extract_strided_slice %534 {offsets = [0, 32], sizes = [2, 32], strides = [1, 1]} : vector<2x128xf32> to vector<2x32xf32>
    %537 = vector.extract_strided_slice %534 {offsets = [0, 96], sizes = [2, 32], strides = [1, 1]} : vector<2x128xf32> to vector<2x32xf32>
    %538 = vector.extract_strided_slice %529 {offsets = [0, 64], sizes = [2, 32], strides = [1, 1]} : vector<2x128xf32> to vector<2x32xf32>
    %539 = math.tanh %538 : vector<2x32xf32>
    %540 = arith.mulf %536, %519 : vector<2x32xf32>
    %541 = arith.mulf %535, %539 : vector<2x32xf32>
    %542 = arith.addf %540, %541 : vector<2x32xf32>
    %cst_184 = arith.constant -3.000000e+00 : f32
    %cst_185 = arith.constant 3.000000e+00 : f32
    %543 = vector.broadcast %cst_184 : f32 to vector<2x32xf32>
    %544 = arith.maximumf %543, %542 : vector<2x32xf32>
    %545 = vector.broadcast %cst_185 : f32 to vector<2x32xf32>
    %546 = arith.minimumf %545, %544 : vector<2x32xf32>
    %547 = math.tanh %546 : vector<2x32xf32>
    %548 = arith.mulf %537, %547 : vector<2x32xf32>
    %cst_186 = arith.constant dense<0.000000e+00> : vector<2x32xf32>
    %549 = tpu.matmul %548, %362, %cst_186 {dimension_numbers = #tpu.dot_dimension_numbers<[1], [0], [0], [1], [0, 0, 1, 1], [], []>} : vector<2x32xf32>, vector<32x32xf32>, vector<2x32xf32> -> vector<2x32xf32>
    %cst_187 = arith.constant -3.000000e+00 : f32
    %cst_188 = arith.constant 3.000000e+00 : f32
    %550 = vector.broadcast %cst_187 : f32 to vector<2x32xf32>
    %551 = arith.maximumf %550, %549 : vector<2x32xf32>
    %552 = vector.broadcast %cst_188 : f32 to vector<2x32xf32>
    %553 = arith.minimumf %552, %551 : vector<2x32xf32>
    %554 = vector.extract_strided_slice %358 {offsets = [14, 0], sizes = [2, 128], strides = [1, 1]} : vector<16x128xf32> to vector<2x128xf32>
    %cst_189 = arith.constant dense<0.000000e+00> : vector<2x128xf32>
    %555 = tpu.matmul %553, %360, %cst_189 {dimension_numbers = #tpu.dot_dimension_numbers<[1], [0], [0], [1], [0, 0, 1, 1], [], []>} : vector<2x32xf32>, vector<32x128xf32>, vector<2x128xf32> -> vector<2x128xf32>
    %556 = arith.addf %554, %555 : vector<2x128xf32>
    %557 = arith.negf %556 : vector<2x128xf32>
    %558 = math.exp %557 : vector<2x128xf32>
    %cst_190 = arith.constant 1.000000e+00 : f32
    %559 = vector.broadcast %cst_190 : f32 to vector<2x128xf32>
    %560 = arith.addf %559, %558 : vector<2x128xf32>
    %561 = arith.divf %559, %560 : vector<2x128xf32>
    %562 = vector.extract_strided_slice %561 {offsets = [0, 0], sizes = [2, 32], strides = [1, 1]} : vector<2x128xf32> to vector<2x32xf32>
    %563 = vector.extract_strided_slice %561 {offsets = [0, 32], sizes = [2, 32], strides = [1, 1]} : vector<2x128xf32> to vector<2x32xf32>
    %564 = vector.extract_strided_slice %561 {offsets = [0, 96], sizes = [2, 32], strides = [1, 1]} : vector<2x128xf32> to vector<2x32xf32>
    %565 = vector.extract_strided_slice %556 {offsets = [0, 64], sizes = [2, 32], strides = [1, 1]} : vector<2x128xf32> to vector<2x32xf32>
    %566 = math.tanh %565 : vector<2x32xf32>
    %567 = arith.mulf %563, %546 : vector<2x32xf32>
    %568 = arith.mulf %562, %566 : vector<2x32xf32>
    %569 = arith.addf %567, %568 : vector<2x32xf32>
    %cst_191 = arith.constant -3.000000e+00 : f32
    %cst_192 = arith.constant 3.000000e+00 : f32
    %570 = vector.broadcast %cst_191 : f32 to vector<2x32xf32>
    %571 = arith.maximumf %570, %569 : vector<2x32xf32>
    %572 = vector.broadcast %cst_192 : f32 to vector<2x32xf32>
    %573 = arith.minimumf %572, %571 : vector<2x32xf32>
    %574 = math.tanh %573 : vector<2x32xf32>
    %575 = arith.mulf %564, %574 : vector<2x32xf32>
    %cst_193 = arith.constant dense<0.000000e+00> : vector<2x32xf32>
    %576 = tpu.matmul %575, %362, %cst_193 {dimension_numbers = #tpu.dot_dimension_numbers<[1], [0], [0], [1], [0, 0, 1, 1], [], []>} : vector<2x32xf32>, vector<32x32xf32>, vector<2x32xf32> -> vector<2x32xf32>
    %cst_194 = arith.constant -3.000000e+00 : f32
    %cst_195 = arith.constant 3.000000e+00 : f32
    %577 = vector.broadcast %cst_194 : f32 to vector<2x32xf32>
    %578 = arith.maximumf %577, %576 : vector<2x32xf32>
    %579 = vector.broadcast %cst_195 : f32 to vector<2x32xf32>
    %580 = arith.minimumf %579, %578 : vector<2x32xf32>
    %581 = tpu.concatenate %391, %418, %445, %472, %499, %526, %553, %580 in 0 : vector<2x32xf32>, vector<2x32xf32>, vector<2x32xf32>, vector<2x32xf32>, vector<2x32xf32>, vector<2x32xf32>, vector<2x32xf32>, vector<2x32xf32> -> vector<16x32xf32>
    %582 = arith.addf %581, %351 : vector<16x32xf32>
    %c0_196 = arith.constant 0 : index
    %c0_197 = arith.constant 0 : index
    %c0_198 = arith.constant 0 : index
    %583 = vector.load %arg13[%c0_196, %c0_197, %c0_198] : memref<1x16x32xf32, #tpu.memory_space<vmem>>, vector<1x16x32xf32>
    %584 = vector.shape_cast %583 : vector<1x16x32xf32> to vector<16x32xf32>
    %585 = vector.shape_cast %582 : vector<16x32xf32> to vector<1x16x32xf32>
    tpu.vector_store %arg13[%c0_196, %c0_197, %c0_198], %585 {strides = array<i32>} : memref<1x16x32xf32, #tpu.memory_space<vmem>>, vector<1x16x32xf32>,
    return
  }
  func.func @transform_0(%arg0: i32) -> (i32, i32, i32) {
    %c0_i32 = arith.constant 0 : i32
    %c0_i32_0 = arith.constant 0 : i32
    %c0_i32_1 = arith.constant 0 : i32
    return %arg0, %c0_i32, %c0_i32_0 : i32, i32, i32
  }
  func.func @transform_1(%arg0: i32) -> (i32, i32, i32) {
    %c0_i32 = arith.constant 0 : i32
    %c0_i32_0 = arith.constant 0 : i32
    %c0_i32_1 = arith.constant 0 : i32
    return %arg0, %c0_i32, %c0_i32_0 : i32, i32, i32
  }
  func.func @transform_2(%arg0: i32) -> (i32, i32) {
    %c0_i32 = arith.constant 0 : i32
    %c0_i32_0 = arith.constant 0 : i32
    %c0_i32_1 = arith.constant 0 : i32
    return %c0_i32, %c0_i32_0 : i32, i32
  }
  func.func @transform_3(%arg0: i32) -> (i32, i32) {
    %c0_i32 = arith.constant 0 : i32
    %c0_i32_0 = arith.constant 0 : i32
    %c0_i32_1 = arith.constant 0 : i32
    return %c0_i32, %c0_i32_0 : i32, i32
  }
  func.func @transform_4(%arg0: i32) -> (i32, i32) {
    %c0_i32 = arith.constant 0 : i32
    %c0_i32_0 = arith.constant 0 : i32
    %c0_i32_1 = arith.constant 0 : i32
    return %c0_i32, %c0_i32_0 : i32, i32
  }
  func.func @transform_5(%arg0: i32) -> (i32, i32, i32) {
    %c0_i32 = arith.constant 0 : i32
    %c0_i32_0 = arith.constant 0 : i32
    %c0_i32_1 = arith.constant 0 : i32
    %c0_i32_2 = arith.constant 0 : i32
    return %c0_i32, %c0_i32_0, %c0_i32_1 : i32, i32, i32
  }
  func.func @transform_6(%arg0: i32) -> (i32, i32) {
    %c0_i32 = arith.constant 0 : i32
    %c0_i32_0 = arith.constant 0 : i32
    %c0_i32_1 = arith.constant 0 : i32
    return %c0_i32, %c0_i32_0 : i32, i32
  }
  func.func @transform_7(%arg0: i32) -> (i32, i32) {
    %c0_i32 = arith.constant 0 : i32
    %c0_i32_0 = arith.constant 0 : i32
    %c0_i32_1 = arith.constant 0 : i32
    return %c0_i32, %c0_i32_0 : i32, i32
  }
  func.func @transform_8(%arg0: i32) -> (i32, i32, i32) {
    %c0_i32 = arith.constant 0 : i32
    %c0_i32_0 = arith.constant 0 : i32
    %c0_i32_1 = arith.constant 0 : i32
    return %arg0, %c0_i32, %c0_i32_0 : i32, i32, i32
  }
  func.func @transform_9(%arg0: i32) -> (i32, i32, i32) {
    %c0_i32 = arith.constant 0 : i32
    %c0_i32_0 = arith.constant 0 : i32
    %c0_i32_1 = arith.constant 0 : i32
    return %arg0, %c0_i32, %c0_i32_0 : i32, i32, i32
  }
  func.func @transform_10(%arg0: i32) -> (i32, i32, i32) {
    %c0_i32 = arith.constant 0 : i32
    %c0_i32_0 = arith.constant 0 : i32
    %c0_i32_1 = arith.constant 0 : i32
    return %arg0, %c0_i32, %c0_i32_0 : i32, i32, i32
  }
  func.func @transform_11(%arg0: i32) -> (i32, i32, i32) {
    %c0_i32 = arith.constant 0 : i32
    %c0_i32_0 = arith.constant 0 : i32
    %c0_i32_1 = arith.constant 0 : i32
    return %arg0, %c0_i32, %c0_i32_0 : i32, i32, i32
  }
  func.func @transform_12(%arg0: i32) -> (i32, i32, i32) {
    %c0_i32 = arith.constant 0 : i32
    %c0_i32_0 = arith.constant 0 : i32
    %c0_i32_1 = arith.constant 0 : i32
    return %arg0, %c0_i32, %c0_i32_0 : i32, i32, i32
  }
}

</mosaic_0001>

<llo_original>
// kernel: model_forward.1
$region0: #{model_forward.1}
  #allocation0 [shape = 'u32[]', space=smem, size = 0x4, offset = 0x4, fixed_abs, tag = 'smem constant byte address 0x4 - core index']
  #allocation1 [shape = 'u32[144,128]{1,0:T(1,128)}', space=vmem, size = 0x12000, scoped, tag = 'internal scratch']
  %s0 = inlined_call_operand.vmem [shape: s32[2,16,1], index: 0, kind: input, shape index: {}]
  %s1 = inlined_call_operand.vmem [shape: s32[2,128,3], index: 1, kind: input, shape index: {}]
  %s2 = inlined_call_operand.vmem [shape: f32[50,32], index: 2, kind: input, shape index: {}]
  %s3 = inlined_call_operand.vmem [shape: f32[32,16], index: 3, kind: input, shape index: {}]
  %s4 = inlined_call_operand.vmem [shape: f32[48,64], index: 4, kind: input, shape index: {}]
  %s5 = inlined_call_operand.vmem [shape: f32[1,64,128], index: 5, kind: input, shape index: {}]
  %s6 = inlined_call_operand.vmem [shape: f32[96,32], index: 6, kind: input, shape index: {}]
  %s7 = inlined_call_operand.vmem [shape: f32[3,128], index: 7, kind: input, shape index: {}]
  %s8 = inlined_call_operand.vmem [shape: f32[4,32,128], index: 8, kind: input, shape index: {}]
  %s9 = inlined_call_operand.vmem [shape: f32[4,32,128], index: 9, kind: input, shape index: {}]
  %s10 = inlined_call_operand.vmem [shape: f32[4,1,128], index: 10, kind: input, shape index: {}]
  %s11 = inlined_call_operand.vmem [shape: f32[4,32,32], index: 11, kind: input, shape index: {}]
  %s12 = inlined_call_operand.vmem [shape: f32[2,16,32], index: 12, kind: output, shape index: {}]
  %s13 = sld [smem:[#allocation0]]
  $region81: #{model_forward.1} parent=0
    _
  %s15 = ssub.s32 1, %s13
  %s16 = scalar_select 0, %s15, %s13
  loop: start=0, step=1, limit=4
  $region2: #{model_forward.1} parent=0 // loop_pre_header
    _
  $region3: #{model_forward.1} parent=0 // loop_header
    %s18 = sphi 0, %s22
    %p19 = scmp.ge.s32.totalorder %s18, 4
    %s28 = sphi 0, %s30
    %s31 = sphi 0, %s28
    %s32 = sphi 0, %s31
    %s48 = sphi 0, %s32
    %s54 = sphi 0, %s56
    %s57 = sphi 0, %s54
    %s58 = sphi 0, %s57
    %s74 = sphi 0, %s58
    %s78 = sphi 0, %s78
    %s80 = sphi 0, %s78
    %s81 = sphi 0, %s80
    %s95 = sphi 0, %s81
    %s99 = sphi 0, %s99
    %s101 = sphi 0, %s99
    %s102 = sphi 0, %s101
    %s116 = sphi 0, %s102
    %s120 = sphi 0, %s120
    %s122 = sphi 0, %s120
    %s123 = sphi 0, %s122
    %s137 = sphi 0, %s123
    %s141 = sphi 0, %s141
    %s143 = sphi 0, %s141
    %s144 = sphi 0, %s143
    %s158 = sphi 0, %s144
    %s162 = sphi 0, %s162
    %s164 = sphi 0, %s162
    %s165 = sphi 0, %s164
    %s179 = sphi 0, %s165
    %s183 = sphi 0, %s183
    %s185 = sphi 0, %s183
    %s186 = sphi 0, %s185
    %s200 = sphi 0, %s186
    %s206 = sphi 0, %s208
    %s209 = sphi 0, %s206
    %s210 = sphi 0, %s209
    %s226 = sphi 0, %s210
    %s232 = sphi 0, %s234
    %s235 = sphi 0, %s232
    %s236 = sphi 0, %s235
    %s252 = sphi 0, %s236
    %s258 = sphi 0, %s260
    %s261 = sphi 0, %s258
    %s262 = sphi 0, %s261
    %s278 = sphi 0, %s262
    %s284 = sphi 0, %s286
    %s287 = sphi 0, %s284
    %s288 = sphi 0, %s287
    %s304 = sphi 0, %s288
    %s310 = sphi 0, %s312
    %s313 = sphi 0, %s310
    %s314 = sphi 0, %s313
    %s330 = sphi 0, %s314
  $region4: #{model_forward.1} parent=0 // loop_header_branch
    %21 = sbr.rel (%p19) target = $region8
  $region5: #{model_forward.1} parent=0 // loop_body
    %s23 = ssub.s32 %s18, 1
    %s24 = ssub.s32 %s18, 2
    %s25 = sadd.s32 %s18, 1
    %s26 = ssub.s32 %s18, %s25
    %p27 = scmp.eq.s32.totalorder %s26, 0
    %s29 = sadd.s32 %s28, 1
    %s30 = scalar_select %p27, %s28, %s29
    %p33 = pneg %p27
    %p34 = scmp.eq.s32.totalorder %s18, 1
    %p35 = por %p33, %p34
    %p36 = scmp.ne.s32.totalorder %s28, %s31
    %p37 = scmp.eq.s32.totalorder %s18, 0
    %p38 = por %p36, %p37
    %p39 = scmp.ne.s32.totalorder %s28, %s31
    %p40 = scmp.eq.s32.totalorder %s23, 1
    %p41 = por %p39, %p40
    %p42 = scmp.ne.s32.totalorder %s31, %s32
    %p43 = scmp.eq.s32.totalorder %s23, 0
    %p44 = por %p42, %p43
    %p45 = scmp.ne.s32.totalorder %s31, %s32
    %p46 = scmp.eq.s32.totalorder %s24, 1
    %p47 = por %p45, %p46
    %p49 = scmp.ne.s32.totalorder %s32, %s48
    %p50 = scmp.eq.s32.totalorder %s24, 0
    %p51 = por %p49, %p50
    %s52 = ssub.s32 %s18, %s25
    %p53 = scmp.eq.s32.totalorder %s52, 0
    %s55 = sadd.s32 %s54, 1
    %s56 = scalar_select %p53, %s54, %s55
    %p59 = pneg %p53
    %p60 = scmp.eq.s32.totalorder %s18, 1
    %p61 = por %p59, %p60
    %p62 = scmp.ne.s32.totalorder %s54, %s57
    %p63 = scmp.eq.s32.totalorder %s18, 0
    %p64 = por %p62, %p63
    %p65 = scmp.ne.s32.totalorder %s54, %s57
    %p66 = scmp.eq.s32.totalorder %s23, 1
    %p67 = por %p65, %p66
    %p68 = scmp.ne.s32.totalorder %s57, %s58
    %p69 = scmp.eq.s32.totalorder %s23, 0
    %p70 = por %p68, %p69
    %p71 = scmp.ne.s32.totalorder %s57, %s58
    %p72 = scmp.eq.s32.totalorder %s24, 1
    %p73 = por %p71, %p72
    %p75 = scmp.ne.s32.totalorder %s58, %s74
    %p76 = scmp.eq.s32.totalorder %s24, 0
    %p77 = por %p75, %p76
    %s79 = sadd.s32 %s78, 1
    %p82 = scmp.eq.s32.totalorder %s18, 1
    %p83 = scmp.ne.s32.totalorder %s78, %s80
    %p84 = scmp.eq.s32.totalorder %s18, 0
    %p85 = por %p83, %p84
    %p86 = scmp.ne.s32.totalorder %s78, %s80
    %p87 = scmp.eq.s32.totalorder %s23, 1
    %p88 = por %p86, %p87
    %p89 = scmp.ne.s32.totalorder %s80, %s81
    %p90 = scmp.eq.s32.totalorder %s23, 0
    %p91 = por %p89, %p90
    %p92 = scmp.ne.s32.totalorder %s80, %s81
    %p93 = scmp.eq.s32.totalorder %s24, 1
    %p94 = por %p92, %p93
    %p96 = scmp.ne.s32.totalorder %s81, %s95
    %p97 = scmp.eq.s32.totalorder %s24, 0
    %p98 = por %p96, %p97
    %s100 = sadd.s32 %s99, 1
    %p103 = scmp.eq.s32.totalorder %s18, 1
    %p104 = scmp.ne.s32.totalorder %s99, %s101
    %p105 = scmp.eq.s32.totalorder %s18, 0
    %p106 = por %p104, %p105
    %p107 = scmp.ne.s32.totalorder %s99, %s101
    %p108 = scmp.eq.s32.totalorder %s23, 1
    %p109 = por %p107, %p108
    %p110 = scmp.ne.s32.totalorder %s101, %s102
    %p111 = scmp.eq.s32.totalorder %s23, 0
    %p112 = por %p110, %p111
    %p113 = scmp.ne.s32.totalorder %s101, %s102
    %p114 = scmp.eq.s32.totalorder %s24, 1
    %p115 = por %p113, %p114
    %p117 = scmp.ne.s32.totalorder %s102, %s116
    %p118 = scmp.eq.s32.totalorder %s24, 0
    %p119 = por %p117, %p118
    %s121 = sadd.s32 %s120, 1
    %p124 = scmp.eq.s32.totalorder %s18, 1
    %p125 = scmp.ne.s32.totalorder %s120, %s122
    %p126 = scmp.eq.s32.totalorder %s18, 0
    %p127 = por %p125, %p126
    %p128 = scmp.ne.s32.totalorder %s120, %s122
    %p129 = scmp.eq.s32.totalorder %s23, 1
    %p130 = por %p128, %p129
    %p131 = scmp.ne.s32.totalorder %s122, %s123
    %p132 = scmp.eq.s32.totalorder %s23, 0
    %p133 = por %p131, %p132
    %p134 = scmp.ne.s32.totalorder %s122, %s123
    %p135 = scmp.eq.s32.totalorder %s24, 1
    %p136 = por %p134, %p135
    %p138 = scmp.ne.s32.totalorder %s123, %s137
    %p139 = scmp.eq.s32.totalorder %s24, 0
    %p140 = por %p138, %p139
    %s142 = sadd.s32 %s141, 1
    %p145 = scmp.eq.s32.totalorder %s18, 1
    %p146 = scmp.ne.s32.totalorder %s141, %s143
    %p147 = scmp.eq.s32.totalorder %s18, 0
    %p148 = por %p146, %p147
    %p149 = scmp.ne.s32.totalorder %s141, %s143
    %p150 = scmp.eq.s32.totalorder %s23, 1
    %p151 = por %p149, %p150
    %p152 = scmp.ne.s32.totalorder %s143, %s144
    %p153 = scmp.eq.s32.totalorder %s23, 0
    %p154 = por %p152, %p153
    %p155 = scmp.ne.s32.totalorder %s143, %s144
    %p156 = scmp.eq.s32.totalorder %s24, 1
    %p157 = por %p155, %p156
    %p159 = scmp.ne.s32.totalorder %s144, %s158
    %p160 = scmp.eq.s32.totalorder %s24, 0
    %p161 = por %p159, %p160
    %s163 = sadd.s32 %s162, 1
    %p166 = scmp.eq.s32.totalorder %s18, 1
    %p167 = scmp.ne.s32.totalorder %s162, %s164
    %p168 = scmp.eq.s32.totalorder %s18, 0
    %p169 = por %p167, %p168
    %p170 = scmp.ne.s32.totalorder %s162, %s164
    %p171 = scmp.eq.s32.totalorder %s23, 1
    %p172 = por %p170, %p171
    %p173 = scmp.ne.s32.totalorder %s164, %s165
    %p174 = scmp.eq.s32.totalorder %s23, 0
    %p175 = por %p173, %p174
    %p176 = scmp.ne.s32.totalorder %s164, %s165
    %p177 = scmp.eq.s32.totalorder %s24, 1
    %p178 = por %p176, %p177
    %p180 = scmp.ne.s32.totalorder %s165, %s179
    %p181 = scmp.eq.s32.totalorder %s24, 0
    %p182 = por %p180, %p181
    %s184 = sadd.s32 %s183, 1
    %p187 = scmp.eq.s32.totalorder %s18, 1
    %p188 = scmp.ne.s32.totalorder %s183, %s185
    %p189 = scmp.eq.s32.totalorder %s18, 0
    %p190 = por %p188, %p189
    %p191 = scmp.ne.s32.totalorder %s183, %s185
    %p192 = scmp.eq.s32.totalorder %s23, 1
    %p193 = por %p191, %p192
    %p194 = scmp.ne.s32.totalorder %s185, %s186
    %p195 = scmp.eq.s32.totalorder %s23, 0
    %p196 = por %p194, %p195
    %p197 = scmp.ne.s32.totalorder %s185, %s186
    %p198 = scmp.eq.s32.totalorder %s24, 1
    %p199 = por %p197, %p198
    %p201 = scmp.ne.s32.totalorder %s186, %s200
    %p202 = scmp.eq.s32.totalorder %s24, 0
    %p203 = por %p201, %p202
    %s204 = ssub.s32 %s18, %s25
    %p205 = scmp.eq.s32.totalorder %s204, 0
    %s207 = sadd.s32 %s206, 1
    %s208 = scalar_select %p205, %s206, %s207
    %p211 = pneg %p205
    %p212 = scmp.eq.s32.totalorder %s18, 1
    %p213 = por %p211, %p212
    %p214 = scmp.ne.s32.totalorder %s206, %s209
    %p215 = scmp.eq.s32.totalorder %s18, 0
    %p216 = por %p214, %p215
    %p217 = scmp.ne.s32.totalorder %s206, %s209
    %p218 = scmp.eq.s32.totalorder %s23, 1
    %p219 = por %p217, %p218
    %p220 = scmp.ne.s32.totalorder %s209, %s210
    %p221 = scmp.eq.s32.totalorder %s23, 0
    %p222 = por %p220, %p221
    %p223 = scmp.ne.s32.totalorder %s209, %s210
    %p224 = scmp.eq.s32.totalorder %s24, 1
    %p225 = por %p223, %p224
    %p227 = scmp.ne.s32.totalorder %s210, %s226
    %p228 = scmp.eq.s32.totalorder %s24, 0
    %p229 = por %p227, %p228
    %s230 = ssub.s32 %s18, %s25
    %p231 = scmp.eq.s32.totalorder %s230, 0
    %s233 = sadd.s32 %s232, 1
    %s234 = scalar_select %p231, %s232, %s233
    %p237 = pneg %p231
    %p238 = scmp.eq.s32.totalorder %s18, 1
    %p239 = por %p237, %p238
    %p240 = scmp.ne.s32.totalorder %s232, %s235
    %p241 = scmp.eq.s32.totalorder %s18, 0
    %p242 = por %p240, %p241
    %p243 = scmp.ne.s32.totalorder %s232, %s235
    %p244 = scmp.eq.s32.totalorder %s23, 1
    %p245 = por %p243, %p244
    %p246 = scmp.ne.s32.totalorder %s235, %s236
    %p247 = scmp.eq.s32.totalorder %s23, 0
    %p248 = por %p246, %p247
    %p249 = scmp.ne.s32.totalorder %s235, %s236
    %p250 = scmp.eq.s32.totalorder %s24, 1
    %p251 = por %p249, %p250
    %p253 = scmp.ne.s32.totalorder %s236, %s252
    %p254 = scmp.eq.s32.totalorder %s24, 0
    %p255 = por %p253, %p254
    %s256 = ssub.s32 %s18, %s25
    %p257 = scmp.eq.s32.totalorder %s256, 0
    %s259 = sadd.s32 %s258, 1
    %s260 = scalar_select %p257, %s258, %s259
    %p263 = pneg %p257
    %p264 = scmp.eq.s32.totalorder %s18, 1
    %p265 = por %p263, %p264
    %p266 = scmp.ne.s32.totalorder %s258, %s261
    %p267 = scmp.eq.s32.totalorder %s18, 0
    %p268 = por %p266, %p267
    %p269 = scmp.ne.s32.totalorder %s258, %s261
    %p270 = scmp.eq.s32.totalorder %s23, 1
    %p271 = por %p269, %p270
    %p272 = scmp.ne.s32.totalorder %s261, %s262
    %p273 = scmp.eq.s32.totalorder %s23, 0
    %p274 = por %p272, %p273
    %p275 = scmp.ne.s32.totalorder %s261, %s262
    %p276 = scmp.eq.s32.totalorder %s24, 1
    %p277 = por %p275, %p276
    %p279 = scmp.ne.s32.totalorder %s262, %s278
    %p280 = scmp.eq.s32.totalorder %s24, 0
    %p281 = por %p279, %p280
    %s282 = ssub.s32 %s18, %s25
    %p283 = scmp.eq.s32.totalorder %s282, 0
    %s285 = sadd.s32 %s284, 1
    %s286 = scalar_select %p283, %s284, %s285
    %p289 = pneg %p283
    %p290 = scmp.eq.s32.totalorder %s18, 1
    %p291 = por %p289, %p290
    %p292 = scmp.ne.s32.totalorder %s284, %s287
    %p293 = scmp.eq.s32.totalorder %s18, 0
    %p294 = por %p292, %p293
    %p295 = scmp.ne.s32.totalorder %s284, %s287
    %p296 = scmp.eq.s32.totalorder %s23, 1
    %p297 = por %p295, %p296
    %p298 = scmp.ne.s32.totalorder %s287, %s288
    %p299 = scmp.eq.s32.totalorder %s23, 0
    %p300 = por %p298, %p299
    %p301 = scmp.ne.s32.totalorder %s287, %s288
    %p302 = scmp.eq.s32.totalorder %s24, 1
    %p303 = por %p301, %p302
    %p305 = scmp.ne.s32.totalorder %s288, %s304
    %p306 = scmp.eq.s32.totalorder %s24, 0
    %p307 = por %p305, %p306
    %s308 = ssub.s32 %s18, %s25
    %p309 = scmp.eq.s32.totalorder %s308, 0
    %s311 = sadd.s32 %s310, 1
    %s312 = scalar_select %p309, %s310, %s311
    %p315 = pneg %p309
    %p316 = scmp.eq.s32.totalorder %s18, 1
    %p317 = por %p315, %p316
    %p318 = scmp.ne.s32.totalorder %s310, %s313
    %p319 = scmp.eq.s32.totalorder %s18, 0
    %p320 = por %p318, %p319
    %p321 = scmp.ne.s32.totalorder %s310, %s313
    %p322 = scmp.eq.s32.totalorder %s23, 1
    %p323 = por %p321, %p322
    %p324 = scmp.ne.s32.totalorder %s313, %s314
    %p325 = scmp.eq.s32.totalorder %s23, 0
    %p326 = por %p324, %p325
    %p327 = scmp.ne.s32.totalorder %s313, %s314
    %p328 = scmp.eq.s32.totalorder %s24, 1
    %p329 = por %p327, %p328
    %p331 = scmp.ne.s32.totalorder %s314, %s330
    %p332 = scmp.eq.s32.totalorder %s24, 0
    %p333 = por %p331, %p332
    %p334 = scmp.le.s32.totalorder 1, %s18
    %p335 = scmp.lt.s32.totalorder %s18, 3
    %p336 = pnand %p334, %p335
    %p337 = pneg %p336
    // Predicated region
    $region9: #{model_forward.1} parent=5 // pred_check
      _
    $region10: #{model_forward.1} parent=5 // pred_check_branch
      %339 = sbr.rel (%p336) target = $region12
    $region11: #{model_forward.1} parent=5 // pred_region
      %s340 = ssub.s32 %s18, 1
      // Predicated region
      $region13: #{model_forward.1} parent=11 // pred_check
        %p341 = pneg %p91
      $region14: #{model_forward.1} parent=11 // pred_check_branch
        %343 = sbr.rel (%p341) target = $region16
      $region15: #{model_forward.1} parent=11 // pred_region
        _
      $region16: #{model_forward.1} parent=11 // pred_fallthru
        _
      // Predicated region
      $region17: #{model_forward.1} parent=11 // pred_check
        %p344 = pneg %p112
      $region18: #{model_forward.1} parent=11 // pred_check_branch
        %346 = sbr.rel (%p344) target = $region20
      $region19: #{model_forward.1} parent=11 // pred_region
        _
      $region20: #{model_forward.1} parent=11 // pred_fallthru
        _
      // Predicated region
      $region21: #{model_forward.1} parent=11 // pred_check
        %p347 = pneg %p133
      $region22: #{model_forward.1} parent=11 // pred_check_branch
        %349 = sbr.rel (%p347) target = $region24
      $region23: #{model_forward.1} parent=11 // pred_region
        _
      $region24: #{model_forward.1} parent=11 // pred_fallthru
        _
      // Predicated region
      $region25: #{model_forward.1} parent=11 // pred_check
        %p350 = pneg %p154
      $region26: #{model_forward.1} parent=11 // pred_check_branch
        %352 = sbr.rel (%p350) target = $region28
      $region27: #{model_forward.1} parent=11 // pred_region
        _
      $region28: #{model_forward.1} parent=11 // pred_fallthru
        _
      // Predicated region
      $region29: #{model_forward.1} parent=11 // pred_check
        %p353 = pneg %p175
      $region30: #{model_forward.1} parent=11 // pred_check_branch
        %355 = sbr.rel (%p353) target = $region32
      $region31: #{model_forward.1} parent=11 // pred_region
        _
      $region32: #{model_forward.1} parent=11 // pred_fallthru
        _
      // Predicated region
      $region33: #{model_forward.1} parent=11 // pred_check
        %p356 = pneg %p196
      $region34: #{model_forward.1} parent=11 // pred_check_branch
        %358 = sbr.rel (%p356) target = $region36
      $region35: #{model_forward.1} parent=11 // pred_region
        _
      $region36: #{model_forward.1} parent=11 // pred_fallthru
        _
    $region12: #{model_forward.1} parent=5 // pred_fallthru
      _
    %p359 = scmp.lt.s32.totalorder %s18, 2
    // Predicated region
    $region37: #{model_forward.1} parent=5 // pred_check
      %p360 = pneg %p359
    $region38: #{model_forward.1} parent=5 // pred_check_branch
      %362 = sbr.rel (%p360) target = $region40
    $region39: #{model_forward.1} parent=5 // pred_region
      // Predicated region
      $region41: #{model_forward.1} parent=39 // pred_check
        %p363 = pneg %p38
      $region42: #{model_forward.1} parent=39 // pred_check_branch
        %365 = sbr.rel (%p363) target = $region44
      $region43: #{model_forward.1} parent=39 // pred_region
        %p366 = scmp.lt.s32.totalorder %s18, 1
        %s367 = scalar_select %p366, %s18, 1
        %s368 = smul.addr %s367, 2
        %s369 = smul.addr %s368, 8
        %s370 = scalar_lea.vmem %s0, %s369
      $region44: #{model_forward.1} parent=39 // pred_fallthru
        _
      // Predicated region
      $region45: #{model_forward.1} parent=39 // pred_check
        %p371 = pneg %p64
      $region46: #{model_forward.1} parent=39 // pred_check_branch
        %373 = sbr.rel (%p371) target = $region48
      $region47: #{model_forward.1} parent=39 // pred_region
        %p374 = scmp.lt.s32.totalorder %s18, 1
        %s375 = scalar_select %p374, %s18, 1
        %s376 = smul.addr %s375, 16
        %s377 = smul.addr %s376, 8
        %s378 = scalar_lea.vmem %s1, %s377
      $region48: #{model_forward.1} parent=39 // pred_fallthru
        _
      // Predicated region
      $region49: #{model_forward.1} parent=39 // pred_check
        %p379 = pneg %p216
      $region50: #{model_forward.1} parent=39 // pred_check_branch
        %381 = sbr.rel (%p379) target = $region52
      $region51: #{model_forward.1} parent=39 // pred_region
        %s382 = smul.u32 2, %s18
        %p383 = scmp.lt.s32.totalorder %s382, 3
        %s384 = scalar_select %p383, %s382, 3
        %s385 = smul.addr %s384, 4
        %s386 = smul.addr %s385, 8
        %s387 = scalar_lea.vmem %s8, %s386
        %s388 = smul.u32 2, %s18
      $region52: #{model_forward.1} parent=39 // pred_fallthru
        _
      // Predicated region
      $region53: #{model_forward.1} parent=39 // pred_check
        %p389 = pneg %p242
      $region54: #{model_forward.1} parent=39 // pred_check_branch
        %391 = sbr.rel (%p389) target = $region56
      $region55: #{model_forward.1} parent=39 // pred_region
        %s392 = smul.u32 2, %s18
        %p393 = scmp.lt.s32.totalorder %s392, 3
        %s394 = scalar_select %p393, %s392, 3
        %s395 = smul.addr %s394, 4
        %s396 = smul.addr %s395, 8
        %s397 = scalar_lea.vmem %s9, %s396
        %s398 = smul.u32 2, %s18
      $region56: #{model_forward.1} parent=39 // pred_fallthru
        _
      // Predicated region
      $region57: #{model_forward.1} parent=39 // pred_check
        %p399 = pneg %p268
      $region58: #{model_forward.1} parent=39 // pred_check_branch
        %401 = sbr.rel (%p399) target = $region60
      $region59: #{model_forward.1} parent=39 // pred_region
        %s402 = smul.u32 2, %s18
        %p403 = scmp.lt.s32.totalorder %s402, 3
        %s404 = scalar_select %p403, %s402, 3
        %s405 = scalar_lea.vmem %s10, %s404
        %s406 = smul.u32 2, %s18
      $region60: #{model_forward.1} parent=39 // pred_fallthru
        _
      // Predicated region
      $region61: #{model_forward.1} parent=39 // pred_check
        %p407 = pneg %p294
      $region62: #{model_forward.1} parent=39 // pred_check_branch
        %409 = sbr.rel (%p407) target = $region64
      $region63: #{model_forward.1} parent=39 // pred_region
        %s410 = smul.u32 2, %s18
        %p411 = scmp.lt.s32.totalorder %s410, 3
        %s412 = scalar_select %p411, %s410, 3
        %s413 = smul.addr %s412, 4
        %s414 = smul.addr %s413, 8
        %s415 = scalar_lea.vmem %s11, %s414
        %s416 = smul.u32 2, %s18
      $region64: #{model_forward.1} parent=39 // pred_fallthru
        _
    $region40: #{model_forward.1} parent=5 // pred_fallthru
      _
    %p417 = scmp.le.s32.totalorder 1, %s18
    %p418 = scmp.lt.s32.totalorder %s18, 3
    %p419 = pnand %p417, %p418
    %p420 = pneg %p419
    // Predicated region
    $region65: #{model_forward.1} parent=5 // pred_check
      _
    $region66: #{model_forward.1} parent=5 // pred_check_branch
      %422 = sbr.rel (%p419) target = $region68
    $region67: #{model_forward.1} parent=5 // pred_region
      %s423 = ssub.s32 %s18, 1
      %p424 = scmp.lt.s32.totalorder %s23, 1
      %s425 = scalar_select %p424, %s23, 1
      %s426 = smul.addr %s425, 2
      %s427 = smul.addr %s426, 8
      %s428 = scalar_lea.vmem %s0, %s427
      %p429 = pneg %p44
      %p430 = pneg %p41
      %p431 = scmp.lt.s32.totalorder %s23, 1
      %s432 = scalar_select %p431, %s23, 1
      %s433 = smul.addr %s432, 16
      %s434 = smul.addr %s433, 8
      %s435 = scalar_lea.vmem %s1, %s434
      %p436 = pneg %p70
      %p437 = pneg %p67
      %p438 = pneg %p91
      %p439 = pneg %p88
      %p440 = pneg %p112
      %p441 = pneg %p109
      %p442 = pneg %p133
      %p443 = pneg %p130
      %p444 = pneg %p154
      %p445 = pneg %p151
      %p446 = pneg %p175
      %p447 = pneg %p172
      %p448 = pneg %p196
      %p449 = pneg %p193
      %s450 = smul.u32 2, %s23
      %p451 = scmp.lt.s32.totalorder %s450, 3
      %s452 = scalar_select %p451, %s450, 3
      %s453 = smul.addr %s452, 4
      %s454 = smul.addr %s453, 8
      %s455 = scalar_lea.vmem %s8, %s454
      %p456 = pneg %p222
      %p457 = pneg %p219
      %s458 = smul.u32 2, %s23
      %p459 = scmp.lt.s32.totalorder %s458, 3
      %s460 = scalar_select %p459, %s458, 3
      %s461 = smul.addr %s460, 4
      %s462 = smul.addr %s461, 8
      %s463 = scalar_lea.vmem %s9, %s462
      %p464 = pneg %p248
      %p465 = pneg %p245
      %s466 = smul.u32 2, %s23
      %p467 = scmp.lt.s32.totalorder %s466, 3
      %s468 = scalar_select %p467, %s466, 3
      %s469 = scalar_lea.vmem %s10, %s468
      %p470 = pneg %p274
      %p471 = pneg %p271
      %s472 = smul.u32 2, %s23
      %p473 = scmp.lt.s32.totalorder %s472, 3
      %s474 = scalar_select %p473, %s472, 3
      %s475 = smul.addr %s474, 4
      %s476 = smul.addr %s475, 8
      %s477 = scalar_lea.vmem %s11, %s476
      %p478 = pneg %p300
      %p479 = pneg %p297
      %p480 = pneg %p326
      %p481 = pneg %p323
      %p482 = scmp.lt.s32.totalorder %s23, 1
      %s483 = scalar_select %p482, %s23, 1
      %s484 = smul.addr %s483, 2
      %s485 = smul.addr %s484, 8
      %s486 = scalar_lea.vmem %s12, %s485
      %p487 = scmp.lt.s32.totalorder %s23, 1
      %s488 = scalar_select %p487, %s23, 1
      %s489 = smul.addr %s488, 2
      %s490 = smul.addr %s489, 8
      %s491 = scalar_lea.vmem %s0, %s490
      %p492 = scmp.lt.s32.totalorder %s23, 1
      %s493 = scalar_select %p492, %s23, 1
      %s494 = smul.addr %s493, 16
      %s495 = smul.addr %s494, 8
      %s496 = scalar_lea.vmem %s1, %s495
      %s497 = smul.u32 2, %s23
      %p498 = scmp.lt.s32.totalorder %s497, 3
      %s499 = scalar_select %p498, %s497, 3
      %s500 = smul.addr %s499, 4
      %s501 = smul.addr %s500, 8
      %s502 = scalar_lea.vmem %s8, %s501
      %s503 = smul.u32 2, %s23
      %s504 = smul.u32 2, %s23
      %p505 = scmp.lt.s32.totalorder %s504, 3
      %s506 = scalar_select %p505, %s504, 3
      %s507 = smul.addr %s506, 4
      %s508 = smul.addr %s507, 8
      %s509 = scalar_lea.vmem %s9, %s508
      %s510 = smul.u32 2, %s23
      %s511 = smul.u32 2, %s23
      %p512 = scmp.lt.s32.totalorder %s511, 3
      %s513 = scalar_select %p512, %s511, 3
      %s514 = scalar_lea.vmem %s10, %s513
      %s515 = smul.u32 2, %s23
      %s516 = smul.u32 2, %s23
      %p517 = scmp.lt.s32.totalorder %s516, 3
      %s518 = scalar_select %p517, %s516, 3
      %s519 = smul.addr %s518, 4
      %s520 = smul.addr %s519, 8
      %s521 = scalar_lea.vmem %s11, %s520
      %s522 = smul.u32 2, %s23
      %p523 = scmp.lt.s32.totalorder %s23, 1
      %s524 = scalar_select %p523, %s23, 1
      %s525 = smul.addr %s524, 2
      %s526 = smul.addr %s525, 8
      %s527 = scalar_lea.vmem %s12, %s526
      %v528 = vld [vmem:[%s496] sm:$0xff]
      %v529 = vld [vmem:[%s496 + $0x8] sm:$0xff]
      %v530 = vld [vmem:[%s496 + $0x10] sm:$0xff]
      %v531 = vld [vmem:[%s496 + $0x18] sm:$0xff]
      %v532 = vld [vmem:[%s496 + $0x20] sm:$0xff]
      %v533 = vld [vmem:[%s496 + $0x28] sm:$0xff]
      %v534 = vld [vmem:[%s496 + $0x30] sm:$0xff]
      %v535 = vld [vmem:[%s496 + $0x38] sm:$0xff]
      %v536 = vld [vmem:[%s496 + $0x40] sm:$0xff]
      %v537 = vld [vmem:[%s496 + $0x48] sm:$0xff]
      %v538 = vld [vmem:[%s496 + $0x50] sm:$0xff]
      %v539 = vld [vmem:[%s496 + $0x58] sm:$0xff]
      %v540 = vld [vmem:[%s496 + $0x60] sm:$0xff]
      %v541 = vld [vmem:[%s496 + $0x68] sm:$0xff]
      %v542 = vld [vmem:[%s496 + $0x70] sm:$0xff]
      %v543 = vld [vmem:[%s496 + $0x78] sm:$0xff]
      %v544 = vlaneseq
      %v545 = vand.u32 %v544, 127
      %v546 = vld [vmem:[%s3] sm:$0xff]
      %v547 = vld [vmem:[%s3 + $0x8] sm:$0xff]
      %v548 = vld [vmem:[%s3 + $0x10] sm:$0xff]
      %v549 = vld [vmem:[%s3 + $0x18] sm:$0xff]
      %v550 = vld [vmem:[%s4] sm:$0xff]
      %v551 = vld [vmem:[%s4 + $0x8] sm:$0xff]
      %vm552 = vcmask 130048
      %v554 = vsel %vm552, %v546, 0
      %v557 = vsel %vm552, %v547, 0
      %v560 = vsel %vm552, %v548, 0
      %v563 = vsel %vm552, %v549, 0
      %565 = vmatprep.subr.mxu0 0.0
      %566 = vmatpush1.msra.mxu0 %v550
      %567 = vmatprep.subr.mxu0 0.0
      %568 = vmatpush1.msra.mxu0 %v551
      %569 = vmatprep.subr.mxu0 0.0
      %570 = vmatpush1.msra.mxu0 0.0
      %571 = vmatprep.subr.mxu0 0.0
      %572 = vmatpush1.msra.mxu0 0.0
      %573 = vmatprep.subr.mxu0 0.0
      %574 = vmatpush1.msra.mxu0 0.0
      %575 = vmatprep.subr.mxu0 0.0
      %576 = vmatpush1.msra.mxu0 0.0
      %577 = vmatprep.subr.mxu0 0.0
      %578 = vmatpush1.msra.mxu0 0.0
      %579 = vmatprep.subr.mxu0 0.0
      %580 = vmatpush1.msra.mxu0 0.0
      %581 = vmatprep.subr.mxu0 0.0
      %582 = vmatpush1.msra.mxu0 0.0
      %583 = vmatprep.subr.mxu0 0.0
      %584 = vmatpush1.msra.mxu0 0.0
      %585 = vmatprep.subr.mxu0 0.0
      %586 = vmatpush1.msra.mxu0 0.0
      %587 = vmatprep.subr.mxu0 0.0
      %588 = vmatpush1.msra.mxu0 0.0
      %589 = vmatprep.subr.mxu0 0.0
      %590 = vmatpush1.msra.mxu0 0.0
      %591 = vmatprep.subr.mxu0 0.0
      %592 = vmatpush1.msra.mxu0 0.0
      %593 = vmatprep.subr.mxu0 0.0
      %594 = vmatpush1.msra.mxu0 0.0
      %595 = vmatprep.subr.mxu0 0.0
      %596 = vmatpush1.msra.mxu0 0.0
      %597 = vmatprep.subr.mxu0 0.0
      %598 = vmatpush1.msra.mxu0 0.0
      %599 = vmatprep.subr.mxu0 0.0
      %600 = vmatpush1.msra.mxu0 0.0
      %601 = vmatprep.subr.mxu0 0.0
      %602 = vmatpush1.msra.mxu0 0.0
      %603 = vmatprep.subr.mxu0 0.0
      %604 = vmatpush1.msra.mxu0 0.0
      %605 = vmatprep.subr.mxu0 0.0
      %606 = vmatpush1.msra.mxu0 0.0
      %607 = vmatprep.subr.mxu0 0.0
      %608 = vmatpush1.msra.mxu0 0.0
      %609 = vmatprep.subr.mxu0 0.0
      %610 = vmatpush1.msra.mxu0 0.0
      %611 = vmatprep.subr.mxu0 0.0
      %612 = vmatpush1.msra.mxu0 0.0
      %613 = vmatprep.subr.mxu0 0.0
      %614 = vmatpush1.msra.mxu0 0.0
      %615 = vmatprep.subr.mxu0 0.0
      %616 = vmatpush1.msra.mxu0 0.0
      %617 = vmatprep.subr.mxu0 0.0
      %618 = vmatpush1.msra.mxu0 0.0
      %619 = vmatprep.subr.mxu0 0.0
      %620 = vmatpush1.msra.mxu0 0.0
      %621 = vmatprep.subr.mxu0 0.0
      %622 = vmatpush1.msra.mxu0 0.0
      %623 = vmatprep.subr.mxu0 0.0
      %624 = vmatpush1.msra.mxu0 0.0
      %625 = vmatprep.subr.mxu0 0.0
      %626 = vmatpush1.msra.mxu0 0.0
      %627 = vmatprep.subr.mxu0 0.0
      %628 = vmatpush1.msra.mxu0 0.0
      %629 = vmatprep.mubr.f32.mxu0 0.0
      %630 = vmatmul.mubr.f32.gmra.mrb[0].mxu0 %v554
      %v631 = vpop.f32.mrb[0].mxu0
      %v632 = vadd.f32 0.0, %v631
      %v633 = vpop.f32.mrb[0].mxu0
      %634 = vmatprep.mubr.f32.mxu0 0.0
      %635 = vmatmul.mubr.f32.gmra.mrb[0].mxu0 %v557
      %v636 = vpop.f32.mrb[0].mxu0
      %v637 = vadd.f32 0.0, %v636
      %v638 = vpop.f32.mrb[0].mxu0
      %639 = vmatprep.mubr.f32.mxu0 0.0
      %640 = vmatmul.mubr.f32.gmra.mrb[0].mxu0 %v560
      %v641 = vpop.f32.mrb[0].mxu0
      %v642 = vadd.f32 0.0, %v641
      %v643 = vpop.f32.mrb[0].mxu0
      %644 = vmatprep.mubr.f32.mxu0 0.0
      %645 = vmatmul.mubr.f32.gmra.mrb[0].mxu0 %v563
      %v646 = vpop.f32.mrb[0].mxu0
      %v647 = vadd.f32 0.0, %v646
      %v648 = vpop.f32.mrb[0].mxu0
      %649 = vdwg.mxu0
      %650 = vset.pattern.permute.xlu0 0
      %651 = vperm.xlu0 %650, %v528
      %v652 = vpop.permute.xlu0 %651
      %653 = vset.pattern.permute.xlu0 0
      %654 = vperm.xlu0 %653, %v529
      %v655 = vpop.permute.xlu0 %654
      %656 = vset.pattern.permute.xlu0 0
      %657 = vperm.xlu0 %656, %v530
      %v658 = vpop.permute.xlu0 %657
      %659 = vset.pattern.permute.xlu0 0
      %660 = vperm.xlu0 %659, %v531
      %v661 = vpop.permute.xlu0 %660
      %662 = vset.pattern.permute.xlu0 0
      %663 = vperm.xlu0 %662, %v532
      %v664 = vpop.permute.xlu0 %663
      %665 = vset.pattern.permute.xlu0 0
      %666 = vperm.xlu0 %665, %v533
      %v667 = vpop.permute.xlu0 %666
      %668 = vset.pattern.permute.xlu0 0
      %669 = vperm.xlu0 %668, %v534
      %v670 = vpop.permute.xlu0 %669
      %671 = vset.pattern.permute.xlu0 0
      %672 = vperm.xlu0 %671, %v535
      %v673 = vpop.permute.xlu0 %672
      %674 = vset.pattern.permute.xlu0 0
      %675 = vperm.xlu0 %674, %v536
      %v676 = vpop.permute.xlu0 %675
      %677 = vset.pattern.permute.xlu0 0
      %678 = vperm.xlu0 %677, %v537
      %v679 = vpop.permute.xlu0 %678
      %680 = vset.pattern.permute.xlu0 0
      %681 = vperm.xlu0 %680, %v538
      %v682 = vpop.permute.xlu0 %681
      %683 = vset.pattern.permute.xlu0 0
      %684 = vperm.xlu0 %683, %v539
      %v685 = vpop.permute.xlu0 %684
      %686 = vset.pattern.permute.xlu0 0
      %687 = vperm.xlu0 %686, %v540
      %v688 = vpop.permute.xlu0 %687
      %689 = vset.pattern.permute.xlu0 0
      %690 = vperm.xlu0 %689, %v541
      %v691 = vpop.permute.xlu0 %690
      %692 = vset.pattern.permute.xlu0 0
      %693 = vperm.xlu0 %692, %v542
      %v694 = vpop.permute.xlu0 %693
      %695 = vset.pattern.permute.xlu0 0
      %696 = vperm.xlu0 %695, %v543
      %v697 = vpop.permute.xlu0 %696
      %vm698 = vcmp.eq.s32.totalorder %v652, %v545
      %vm699 = vcmp.eq.s32.totalorder %v655, %v545
      %vm700 = vcmp.eq.s32.totalorder %v658, %v545
      %vm701 = vcmp.eq.s32.totalorder %v661, %v545
      %vm702 = vcmp.eq.s32.totalorder %v664, %v545
      %vm703 = vcmp.eq.s32.totalorder %v667, %v545
      %vm704 = vcmp.eq.s32.totalorder %v670, %v545
      %vm705 = vcmp.eq.s32.totalorder %v673, %v545
      %vm706 = vcmp.eq.s32.totalorder %v676, %v545
      %vm707 = vcmp.eq.s32.totalorder %v679, %v545
      %vm708 = vcmp.eq.s32.totalorder %v682, %v545
      %vm709 = vcmp.eq.s32.totalorder %v685, %v545
      %vm710 = vcmp.eq.s32.totalorder %v688, %v545
      %vm711 = vcmp.eq.s32.totalorder %v691, %v545
      %vm712 = vcmp.eq.s32.totalorder %v694, %v545
      %vm713 = vcmp.eq.s32.totalorder %v697, %v545
      %v714 = vsel %vm698, 1.0, 0.0
      %v715 = vsel %vm699, 1.0, 0.0
      %v716 = vsel %vm700, 1.0, 0.0
      %v717 = vsel %vm701, 1.0, 0.0
      %v718 = vsel %vm702, 1.0, 0.0
      %v719 = vsel %vm703, 1.0, 0.0
      %v720 = vsel %vm704, 1.0, 0.0
      %v721 = vsel %vm705, 1.0, 0.0
      %v722 = vsel %vm706, 1.0, 0.0
      %v723 = vsel %vm707, 1.0, 0.0
      %v724 = vsel %vm708, 1.0, 0.0
      %v725 = vsel %vm709, 1.0, 0.0
      %v726 = vsel %vm710, 1.0, 0.0
      %v727 = vsel %vm711, 1.0, 0.0
      %v728 = vsel %vm712, 1.0, 0.0
      %v729 = vsel %vm713, 1.0, 0.0
      %v730 = vld [vmem:[%s4 + $0x10] sm:$0xff]
      %v731 = vld [vmem:[%s4 + $0x18] sm:$0xff]
      %732 = vmatprep.subr.mxu0 0.0
      %733 = vmatpush1.msra.mxu0 %v730
      %734 = vmatprep.subr.mxu0 0.0
      %735 = vmatpush1.msra.mxu0 %v731
      %736 = vmatprep.subr.mxu0 0.0
      %737 = vmatpush1.msra.mxu0 0.0
      %738 = vmatprep.subr.mxu0 0.0
      %739 = vmatpush1.msra.mxu0 0.0
      %740 = vmatprep.subr.mxu0 0.0
      %741 = vmatpush1.msra.mxu0 0.0
      %742 = vmatprep.subr.mxu0 0.0
      %743 = vmatpush1.msra.mxu0 0.0
      %744 = vmatprep.subr.mxu0 0.0
      %745 = vmatpush1.msra.mxu0 0.0
      %746 = vmatprep.subr.mxu0 0.0
      %747 = vmatpush1.msra.mxu0 0.0
      %748 = vmatprep.subr.mxu0 0.0
      %749 = vmatpush1.msra.mxu0 0.0
      %750 = vmatprep.subr.mxu0 0.0
      %751 = vmatpush1.msra.mxu0 0.0
      %752 = vmatprep.subr.mxu0 0.0
      %753 = vmatpush1.msra.mxu0 0.0
      %754 = vmatprep.subr.mxu0 0.0
      %755 = vmatpush1.msra.mxu0 0.0
      %756 = vmatprep.subr.mxu0 0.0
      %757 = vmatpush1.msra.mxu0 0.0
      %758 = vmatprep.subr.mxu0 0.0
      %759 = vmatpush1.msra.mxu0 0.0
      %760 = vmatprep.subr.mxu0 0.0
      %761 = vmatpush1.msra.mxu0 0.0
      %762 = vmatprep.subr.mxu0 0.0
      %763 = vmatpush1.msra.mxu0 0.0
      %764 = vmatprep.subr.mxu0 0.0
      %765 = vmatpush1.msra.mxu0 0.0
      %766 = vmatprep.subr.mxu0 0.0
      %767 = vmatpush1.msra.mxu0 0.0
      %768 = vmatprep.subr.mxu0 0.0
      %769 = vmatpush1.msra.mxu0 0.0
      %770 = vmatprep.subr.mxu0 0.0
      %771 = vmatpush1.msra.mxu0 0.0
      %772 = vmatprep.subr.mxu0 0.0
      %773 = vmatpush1.msra.mxu0 0.0
      %774 = vmatprep.subr.mxu0 0.0
      %775 = vmatpush1.msra.mxu0 0.0
      %776 = vmatprep.subr.mxu0 0.0
      %777 = vmatpush1.msra.mxu0 0.0
      %778 = vmatprep.subr.mxu0 0.0
      %779 = vmatpush1.msra.mxu0 0.0
      %780 = vmatprep.subr.mxu0 0.0
      %781 = vmatpush1.msra.mxu0 0.0
      %782 = vmatprep.subr.mxu0 0.0
      %783 = vmatpush1.msra.mxu0 0.0
      %784 = vmatprep.subr.mxu0 0.0
      %785 = vmatpush1.msra.mxu0 0.0
      %786 = vmatprep.subr.mxu0 0.0
      %787 = vmatpush1.msra.mxu0 0.0
      %788 = vmatprep.subr.mxu0 0.0
      %789 = vmatpush1.msra.mxu0 0.0
      %790 = vmatprep.subr.mxu0 0.0
      %791 = vmatpush1.msra.mxu0 0.0
      %792 = vmatprep.subr.mxu0 0.0
      %793 = vmatpush1.msra.mxu0 0.0
      %794 = vmatprep.subr.mxu0 0.0
      %795 = vmatpush1.msra.mxu0 0.0
      %796 = vmatprep.mubr.f32.mxu0 0.0
      %797 = vmatmul.mubr.f32.gmra.mrb[0].mxu0 %v554
      %v798 = vpop.f32.mrb[0].mxu0
      %v799 = vadd.f32 0.0, %v798
      %v800 = vpop.f32.mrb[0].mxu0
      %801 = vmatprep.mubr.f32.mxu0 0.0
      %802 = vmatmul.mubr.f32.gmra.mrb[0].mxu0 %v557
      %v803 = vpop.f32.mrb[0].mxu0
      %v804 = vadd.f32 0.0, %v803
      %v805 = vpop.f32.mrb[0].mxu0
      %806 = vmatprep.mubr.f32.mxu0 0.0
      %807 = vmatmul.mubr.f32.gmra.mrb[0].mxu0 %v560
      %v808 = vpop.f32.mrb[0].mxu0
      %v809 = vadd.f32 0.0, %v808
      %v810 = vpop.f32.mrb[0].mxu0
      %811 = vmatprep.mubr.f32.mxu0 0.0
      %812 = vmatmul.mubr.f32.gmra.mrb[0].mxu0 %v563
      %v813 = vpop.f32.mrb[0].mxu0
      %v814 = vadd.f32 0.0, %v813
      %v815 = vpop.f32.mrb[0].mxu0
      %816 = vdwg.mxu0
      %817 = vset.pattern.permute.xlu0 1
      %818 = vperm.xlu0 %817, %v528
      %v819 = vpop.permute.xlu0 %818
      %820 = vset.pattern.permute.xlu0 1
      %821 = vperm.xlu0 %820, %v529
      %v822 = vpop.permute.xlu0 %821
      %823 = vset.pattern.permute.xlu0 1
      %824 = vperm.xlu0 %823, %v530
      %v825 = vpop.permute.xlu0 %824
      %826 = vset.pattern.permute.xlu0 1
      %827 = vperm.xlu0 %826, %v531
      %v828 = vpop.permute.xlu0 %827
      %829 = vset.pattern.permute.xlu0 1
      %830 = vperm.xlu0 %829, %v532
      %v831 = vpop.permute.xlu0 %830
      %832 = vset.pattern.permute.xlu0 1
      %833 = vperm.xlu0 %832, %v533
      %v834 = vpop.permute.xlu0 %833
      %835 = vset.pattern.permute.xlu0 1
      %836 = vperm.xlu0 %835, %v534
      %v837 = vpop.permute.xlu0 %836
      %838 = vset.pattern.permute.xlu0 1
      %839 = vperm.xlu0 %838, %v535
      %v840 = vpop.permute.xlu0 %839
      %841 = vset.pattern.permute.xlu0 1
      %842 = vperm.xlu0 %841, %v536
      %v843 = vpop.permute.xlu0 %842
      %844 = vset.pattern.permute.xlu0 1
      %845 = vperm.xlu0 %844, %v537
      %v846 = vpop.permute.xlu0 %845
      %847 = vset.pattern.permute.xlu0 1
      %848 = vperm.xlu0 %847, %v538
      %v849 = vpop.permute.xlu0 %848
      %850 = vset.pattern.permute.xlu0 1
      %851 = vperm.xlu0 %850, %v539
      %v852 = vpop.permute.xlu0 %851
      %853 = vset.pattern.permute.xlu0 1
      %854 = vperm.xlu0 %853, %v540
      %v855 = vpop.permute.xlu0 %854
      %856 = vset.pattern.permute.xlu0 1
      %857 = vperm.xlu0 %856, %v541
      %v858 = vpop.permute.xlu0 %857
      %859 = vset.pattern.permute.xlu0 1
      %860 = vperm.xlu0 %859, %v542
      %v861 = vpop.permute.xlu0 %860
      %862 = vset.pattern.permute.xlu0 1
      %863 = vperm.xlu0 %862, %v543
      %v864 = vpop.permute.xlu0 %863
      %vm865 = vcmp.eq.s32.totalorder %v819, %v545
      %vm866 = vcmp.eq.s32.totalorder %v822, %v545
      %vm867 = vcmp.eq.s32.totalorder %v825, %v545
      %vm868 = vcmp.eq.s32.totalorder %v828, %v545
      %vm869 = vcmp.eq.s32.totalorder %v831, %v545
      %vm870 = vcmp.eq.s32.totalorder %v834, %v545
      %vm871 = vcmp.eq.s32.totalorder %v837, %v545
      %vm872 = vcmp.eq.s32.totalorder %v840, %v545
      %vm873 = vcmp.eq.s32.totalorder %v843, %v545
      %vm874 = vcmp.eq.s32.totalorder %v846, %v545
      %vm875 = vcmp.eq.s32.totalorder %v849, %v545
      %vm876 = vcmp.eq.s32.totalorder %v852, %v545
      %vm877 = vcmp.eq.s32.totalorder %v855, %v545
      %vm878 = vcmp.eq.s32.totalorder %v858, %v545
      %vm879 = vcmp.eq.s32.totalorder %v861, %v545
      %vm880 = vcmp.eq.s32.totalorder %v864, %v545
      %v881 = vsel %vm865, 1.0, 0.0
      %v882 = vsel %vm866, 1.0, 0.0
      %v883 = vsel %vm867, 1.0, 0.0
      %v884 = vsel %vm868, 1.0, 0.0
      %v885 = vsel %vm869, 1.0, 0.0
      %v886 = vsel %vm870, 1.0, 0.0
      %v887 = vsel %vm871, 1.0, 0.0
      %v888 = vsel %vm872, 1.0, 0.0
      %v889 = vsel %vm873, 1.0, 0.0
      %v890 = vsel %vm874, 1.0, 0.0
      %v891 = vsel %vm875, 1.0, 0.0
      %v892 = vsel %vm876, 1.0, 0.0
      %v893 = vsel %vm877, 1.0, 0.0
      %v894 = vsel %vm878, 1.0, 0.0
      %v895 = vsel %vm879, 1.0, 0.0
      %v896 = vsel %vm880, 1.0, 0.0
      %vm897 = vcmask 261120
      %v899 = vsel %vm897, %v881, 0
      %v902 = vsel %vm897, %v882, 0
      %v905 = vsel %vm897, %v883, 0
      %v908 = vsel %vm897, %v884, 0
      %v911 = vsel %vm897, %v885, 0
      %v914 = vsel %vm897, %v886, 0
      %v917 = vsel %vm897, %v887, 0
      %v920 = vsel %vm897, %v888, 0
      %v923 = vsel %vm897, %v889, 0
      %v926 = vsel %vm897, %v890, 0
      %v929 = vsel %vm897, %v891, 0
      %v932 = vsel %vm897, %v892, 0
      %v935 = vsel %vm897, %v893, 0
      %v938 = vsel %vm897, %v894, 0
      %v941 = vsel %vm897, %v895, 0
      %v944 = vsel %vm897, %v896, 0
      %946 = vmatprep.subr.mxu0 0.0
      %947 = vmatpush1.msra.mxu0 %v799
      %948 = vmatprep.subr.mxu0 0.0
      %949 = vmatpush1.msra.mxu0 %v804
      %950 = vmatprep.subr.mxu0 0.0
      %951 = vmatpush1.msra.mxu0 %v809
      %952 = vmatprep.subr.mxu0 0.0
      %953 = vmatpush1.msra.mxu0 %v814
      %954 = vmatprep.subr.mxu0 0.0
      %955 = vmatpush1.msra.mxu0 0.0
      %956 = vmatprep.subr.mxu0 0.0
      %957 = vmatpush1.msra.mxu0 0.0
      %958 = vmatprep.subr.mxu0 0.0
      %959 = vmatpush1.msra.mxu0 0.0
      %960 = vmatprep.subr.mxu0 0.0
      %961 = vmatpush1.msra.mxu0 0.0
      %962 = vmatprep.subr.mxu0 0.0
      %963 = vmatpush1.msra.mxu0 0.0
      %964 = vmatprep.subr.mxu0 0.0
      %965 = vmatpush1.msra.mxu0 0.0
      %966 = vmatprep.subr.mxu0 0.0
      %967 = vmatpush1.msra.mxu0 0.0
      %968 = vmatprep.subr.mxu0 0.0
      %969 = vmatpush1.msra.mxu0 0.0
      %970 = vmatprep.subr.mxu0 0.0
      %971 = vmatpush1.msra.mxu0 0.0
      %972 = vmatprep.subr.mxu0 0.0
      %973 = vmatpush1.msra.mxu0 0.0
      %974 = vmatprep.subr.mxu0 0.0
      %975 = vmatpush1.msra.mxu0 0.0
      %976 = vmatprep.subr.mxu0 0.0
      %977 = vmatpush1.msra.mxu0 0.0
      %978 = vmatprep.subr.mxu0 0.0
      %979 = vmatpush1.msra.mxu0 0.0
      %980 = vmatprep.subr.mxu0 0.0
      %981 = vmatpush1.msra.mxu0 0.0
      %982 = vmatprep.subr.mxu0 0.0
      %983 = vmatpush1.msra.mxu0 0.0
      %984 = vmatprep.subr.mxu0 0.0
      %985 = vmatpush1.msra.mxu0 0.0
      %986 = vmatprep.subr.mxu0 0.0
      %987 = vmatpush1.msra.mxu0 0.0
      %988 = vmatprep.subr.mxu0 0.0
      %989 = vmatpush1.msra.mxu0 0.0
      %990 = vmatprep.subr.mxu0 0.0
      %991 = vmatpush1.msra.mxu0 0.0
      %992 = vmatprep.subr.mxu0 0.0
      %993 = vmatpush1.msra.mxu0 0.0
      %994 = vmatprep.subr.mxu0 0.0
      %995 = vmatpush1.msra.mxu0 0.0
      %996 = vmatprep.subr.mxu0 0.0
      %997 = vmatpush1.msra.mxu0 0.0
      %998 = vmatprep.subr.mxu0 0.0
      %999 = vmatpush1.msra.mxu0 0.0
      %1000 = vmatprep.subr.mxu0 0.0
      %1001 = vmatpush1.msra.mxu0 0.0
      %1002 = vmatprep.subr.mxu0 0.0
      %1003 = vmatpush1.msra.mxu0 0.0
      %1004 = vmatprep.subr.mxu0 0.0
      %1005 = vmatpush1.msra.mxu0 0.0
      %1006 = vmatprep.subr.mxu0 0.0
      %1007 = vmatpush1.msra.mxu0 0.0
      %1008 = vmatprep.subr.mxu0 0.0
      %1009 = vmatpush1.msra.mxu0 0.0
      %1010 = vmatprep.mubr.f32.mxu0 0.0
      %1011 = vmatmul.mubr.f32.gmra.mrb[0].mxu0 %v899
      %v1012 = vpop.f32.mrb[0].mxu0
      %v1013 = vadd.f32 0.0, %v1012
      %v1014 = vpop.f32.mrb[0].mxu0
      %1015 = vmatprep.mubr.f32.mxu0 0.0
      %1016 = vmatmul.mubr.f32.gmra.mrb[0].mxu0 %v902
      %v1017 = vpop.f32.mrb[0].mxu0
      %v1018 = vadd.f32 0.0, %v1017
      %v1019 = vpop.f32.mrb[0].mxu0
      %1020 = vmatprep.mubr.f32.mxu0 0.0
      %1021 = vmatmul.mubr.f32.gmra.mrb[0].mxu0 %v905
      %v1022 = vpop.f32.mrb[0].mxu0
      %v1023 = vadd.f32 0.0, %v1022
      %v1024 = vpop.f32.mrb[0].mxu0
      %1025 = vmatprep.mubr.f32.mxu0 0.0
      %1026 = vmatmul.mubr.f32.gmra.mrb[0].mxu0 %v908
      %v1027 = vpop.f32.mrb[0].mxu0
      %v1028 = vadd.f32 0.0, %v1027
      %v1029 = vpop.f32.mrb[0].mxu0
      %1030 = vmatprep.mubr.f32.mxu0 0.0
      %1031 = vmatmul.mubr.f32.gmra.mrb[0].mxu0 %v911
      %v1032 = vpop.f32.mrb[0].mxu0
      %v1033 = vadd.f32 0.0, %v1032
      %v1034 = vpop.f32.mrb[0].mxu0
      %1035 = vmatprep.mubr.f32.mxu0 0.0
      %1036 = vmatmul.mubr.f32.gmra.mrb[0].mxu0 %v914
      %v1037 = vpop.f32.mrb[0].mxu0
      %v1038 = vadd.f32 0.0, %v1037
      %v1039 = vpop.f32.mrb[0].mxu0
      %1040 = vmatprep.mubr.f32.mxu0 0.0
      %1041 = vmatmul.mubr.f32.gmra.mrb[0].mxu0 %v917
      %v1042 = vpop.f32.mrb[0].mxu0
      %v1043 = vadd.f32 0.0, %v1042
      %v1044 = vpop.f32.mrb[0].mxu0
      %1045 = vmatprep.mubr.f32.mxu0 0.0
      %1046 = vmatmul.mubr.f32.gmra.mrb[0].mxu0 %v920
      %v1047 = vpop.f32.mrb[0].mxu0
      %v1048 = vadd.f32 0.0, %v1047
      %v1049 = vpop.f32.mrb[0].mxu0
      %1050 = vmatprep.mubr.f32.mxu0 0.0
      %1051 = vmatmul.mubr.f32.gmra.mrb[0].mxu0 %v923
      %v1052 = vpop.f32.mrb[0].mxu0
      %v1053 = vadd.f32 0.0, %v1052
      %v1054 = vpop.f32.mrb[0].mxu0
      %1055 = vmatprep.mubr.f32.mxu0 0.0
      %1056 = vmatmul.mubr.f32.gmra.mrb[0].mxu0 %v926
      %v1057 = vpop.f32.mrb[0].mxu0
      %v1058 = vadd.f32 0.0, %v1057
      %v1059 = vpop.f32.mrb[0].mxu0
      %1060 = vmatprep.mubr.f32.mxu0 0.0
      %1061 = vmatmul.mubr.f32.gmra.mrb[0].mxu0 %v929
      %v1062 = vpop.f32.mrb[0].mxu0
      %v1063 = vadd.f32 0.0, %v1062
      %v1064 = vpop.f32.mrb[0].mxu0
      %1065 = vmatprep.mubr.f32.mxu0 0.0
      %1066 = vmatmul.mubr.f32.gmra.mrb[0].mxu0 %v932
      %v1067 = vpop.f32.mrb[0].mxu0
      %v1068 = vadd.f32 0.0, %v1067
      %v1069 = vpop.f32.mrb[0].mxu0
      %1070 = vmatprep.mubr.f32.mxu0 0.0
      %1071 = vmatmul.mubr.f32.gmra.mrb[0].mxu0 %v935
      %v1072 = vpop.f32.mrb[0].mxu0
      %v1073 = vadd.f32 0.0, %v1072
      %v1074 = vpop.f32.mrb[0].mxu0
      %1075 = vmatprep.mubr.f32.mxu0 0.0
      %1076 = vmatmul.mubr.f32.gmra.mrb[0].mxu0 %v938
      %v1077 = vpop.f32.mrb[0].mxu0
      %v1078 = vadd.f32 0.0, %v1077
      %v1079 = vpop.f32.mrb[0].mxu0
      %1080 = vmatprep.mubr.f32.mxu0 0.0
      %1081 = vmatmul.mubr.f32.gmra.mrb[0].mxu0 %v941
      %v1082 = vpop.f32.mrb[0].mxu0
      %v1083 = vadd.f32 0.0, %v1082
      %v1084 = vpop.f32.mrb[0].mxu0
      %1085 = vmatprep.mubr.f32.mxu0 0.0
      %1086 = vmatmul.mubr.f32.gmra.mrb[0].mxu0 %v944
      %v1087 = vpop.f32.mrb[0].mxu0
      %v1088 = vadd.f32 0.0, %v1087
      %v1089 = vpop.f32.mrb[0].mxu0
      %1090 = vdwg.mxu0
      %v1092 = vsel %vm897, %v714, 0
      %v1095 = vsel %vm897, %v715, 0
      %v1098 = vsel %vm897, %v716, 0
      %v1101 = vsel %vm897, %v717, 0
      %v1104 = vsel %vm897, %v718, 0
      %v1107 = vsel %vm897, %v719, 0
      %v1110 = vsel %vm897, %v720, 0
      %v1113 = vsel %vm897, %v721, 0
      %v1116 = vsel %vm897, %v722, 0
      %v1119 = vsel %vm897, %v723, 0
      %v1122 = vsel %vm897, %v724, 0
      %v1125 = vsel %vm897, %v725, 0
      %v1128 = vsel %vm897, %v726, 0
      %v1131 = vsel %vm897, %v727, 0
      %v1134 = vsel %vm897, %v728, 0
      %v1137 = vsel %vm897, %v729, 0
      %1139 = vmatprep.subr.mxu0 0.0
      %1140 = vmatpush1.msra.mxu0 %v632
      %1141 = vmatprep.subr.mxu0 0.0
      %1142 = vmatpush1.msra.mxu0 %v637
      %1143 = vmatprep.subr.mxu0 0.0
      %1144 = vmatpush1.msra.mxu0 %v642
      %1145 = vmatprep.subr.mxu0 0.0
      %1146 = vmatpush1.msra.mxu0 %v647
      %1147 = vmatprep.subr.mxu0 0.0
      %1148 = vmatpush1.msra.mxu0 0.0
      %1149 = vmatprep.subr.mxu0 0.0
      %1150 = vmatpush1.msra.mxu0 0.0
      %1151 = vmatprep.subr.mxu0 0.0
      %1152 = vmatpush1.msra.mxu0 0.0
      %1153 = vmatprep.subr.mxu0 0.0
      %1154 = vmatpush1.msra.mxu0 0.0
      %1155 = vmatprep.subr.mxu0 0.0
      %1156 = vmatpush1.msra.mxu0 0.0
      %1157 = vmatprep.subr.mxu0 0.0
      %1158 = vmatpush1.msra.mxu0 0.0
      %1159 = vmatprep.subr.mxu0 0.0
      %1160 = vmatpush1.msra.mxu0 0.0
      %1161 = vmatprep.subr.mxu0 0.0
      %1162 = vmatpush1.msra.mxu0 0.0
      %1163 = vmatprep.subr.mxu0 0.0
      %1164 = vmatpush1.msra.mxu0 0.0
      %1165 = vmatprep.subr.mxu0 0.0
      %1166 = vmatpush1.msra.mxu0 0.0
      %1167 = vmatprep.subr.mxu0 0.0
      %1168 = vmatpush1.msra.mxu0 0.0
      %1169 = vmatprep.subr.mxu0 0.0
      %1170 = vmatpush1.msra.mxu0 0.0
      %1171 = vmatprep.subr.mxu0 0.0
      %1172 = vmatpush1.msra.mxu0 0.0
      %1173 = vmatprep.subr.mxu0 0.0
      %1174 = vmatpush1.msra.mxu0 0.0
      %1175 = vmatprep.subr.mxu0 0.0
      %1176 = vmatpush1.msra.mxu0 0.0
      %1177 = vmatprep.subr.mxu0 0.0
      %1178 = vmatpush1.msra.mxu0 0.0
      %1179 = vmatprep.subr.mxu0 0.0
      %1180 = vmatpush1.msra.mxu0 0.0
      %1181 = vmatprep.subr.mxu0 0.0
      %1182 = vmatpush1.msra.mxu0 0.0
      %1183 = vmatprep.subr.mxu0 0.0
      %1184 = vmatpush1.msra.mxu0 0.0
      %1185 = vmatprep.subr.mxu0 0.0
      %1186 = vmatpush1.msra.mxu0 0.0
      %1187 = vmatprep.subr.mxu0 0.0
      %1188 = vmatpush1.msra.mxu0 0.0
      %1189 = vmatprep.subr.mxu0 0.0
      %1190 = vmatpush1.msra.mxu0 0.0
      %1191 = vmatprep.subr.mxu0 0.0
      %1192 = vmatpush1.msra.mxu0 0.0
      %1193 = vmatprep.subr.mxu0 0.0
      %1194 = vmatpush1.msra.mxu0 0.0
      %1195 = vmatprep.subr.mxu0 0.0
      %1196 = vmatpush1.msra.mxu0 0.0
      %1197 = vmatprep.subr.mxu0 0.0
      %1198 = vmatpush1.msra.mxu0 0.0
      %1199 = vmatprep.subr.mxu0 0.0
      %1200 = vmatpush1.msra.mxu0 0.0
      %1201 = vmatprep.subr.mxu0 0.0
      %1202 = vmatpush1.msra.mxu0 0.0
      %1203 = vmatprep.mubr.f32.mxu0 0.0
      %1204 = vmatmul.mubr.f32.gmra.mrb[0].mxu0 %v1092
      %v1205 = vpop.f32.mrb[0].mxu0
      %v1206 = vadd.f32 %v1013, %v1205
      %v1207 = vpop.f32.mrb[0].mxu0
      %1208 = vmatprep.mubr.f32.mxu0 0.0
      %1209 = vmatmul.mubr.f32.gmra.mrb[0].mxu0 %v1095
      %v1210 = vpop.f32.mrb[0].mxu0
      %v1211 = vadd.f32 %v1018, %v1210
      %v1212 = vpop.f32.mrb[0].mxu0
      %1213 = vmatprep.mubr.f32.mxu0 0.0
      %1214 = vmatmul.mubr.f32.gmra.mrb[0].mxu0 %v1098
      %v1215 = vpop.f32.mrb[0].mxu0
      %v1216 = vadd.f32 %v1023, %v1215
      %v1217 = vpop.f32.mrb[0].mxu0
      %1218 = vmatprep.mubr.f32.mxu0 0.0
      %1219 = vmatmul.mubr.f32.gmra.mrb[0].mxu0 %v1101
      %v1220 = vpop.f32.mrb[0].mxu0
      %v1221 = vadd.f32 %v1028, %v1220
      %v1222 = vpop.f32.mrb[0].mxu0
      %1223 = vmatprep.mubr.f32.mxu0 0.0
      %1224 = vmatmul.mubr.f32.gmra.mrb[0].mxu0 %v1104
      %v1225 = vpop.f32.mrb[0].mxu0
      %v1226 = vadd.f32 %v1033, %v1225
      %v1227 = vpop.f32.mrb[0].mxu0
      %1228 = vmatprep.mubr.f32.mxu0 0.0
      %1229 = vmatmul.mubr.f32.gmra.mrb[0].mxu0 %v1107
      %v1230 = vpop.f32.mrb[0].mxu0
      %v1231 = vadd.f32 %v1038, %v1230
      %v1232 = vpop.f32.mrb[0].mxu0
      %1233 = vmatprep.mubr.f32.mxu0 0.0
      %1234 = vmatmul.mubr.f32.gmra.mrb[0].mxu0 %v1110
      %v1235 = vpop.f32.mrb[0].mxu0
      %v1236 = vadd.f32 %v1043, %v1235
      %v1237 = vpop.f32.mrb[0].mxu0
      %1238 = vmatprep.mubr.f32.mxu0 0.0
      %1239 = vmatmul.mubr.f32.gmra.mrb[0].mxu0 %v1113
      %v1240 = vpop.f32.mrb[0].mxu0
      %v1241 = vadd.f32 %v1048, %v1240
      %v1242 = vpop.f32.mrb[0].mxu0
      %1243 = vmatprep.mubr.f32.mxu0 0.0
      %1244 = vmatmul.mubr.f32.gmra.mrb[0].mxu0 %v1116
      %v1245 = vpop.f32.mrb[0].mxu0
      %v1246 = vadd.f32 %v1053, %v1245
      %v1247 = vpop.f32.mrb[0].mxu0
      %1248 = vmatprep.mubr.f32.mxu0 0.0
      %1249 = vmatmul.mubr.f32.gmra.mrb[0].mxu0 %v1119
      %v1250 = vpop.f32.mrb[0].mxu0
      %v1251 = vadd.f32 %v1058, %v1250
      %v1252 = vpop.f32.mrb[0].mxu0
      %1253 = vmatprep.mubr.f32.mxu0 0.0
      %1254 = vmatmul.mubr.f32.gmra.mrb[0].mxu0 %v1122
      %v1255 = vpop.f32.mrb[0].mxu0
      %v1256 = vadd.f32 %v1063, %v1255
      %v1257 = vpop.f32.mrb[0].mxu0
      %1258 = vmatprep.mubr.f32.mxu0 0.0
      %1259 = vmatmul.mubr.f32.gmra.mrb[0].mxu0 %v1125
      %v1260 = vpop.f32.mrb[0].mxu0
      %v1261 = vadd.f32 %v1068, %v1260
      %v1262 = vpop.f32.mrb[0].mxu0
      %1263 = vmatprep.mubr.f32.mxu0 0.0
      %1264 = vmatmul.mubr.f32.gmra.mrb[0].mxu0 %v1128
      %v1265 = vpop.f32.mrb[0].mxu0
      %v1266 = vadd.f32 %v1073, %v1265
      %v1267 = vpop.f32.mrb[0].mxu0
      %1268 = vmatprep.mubr.f32.mxu0 0.0
      %1269 = vmatmul.mubr.f32.gmra.mrb[0].mxu0 %v1131
      %v1270 = vpop.f32.mrb[0].mxu0
      %v1271 = vadd.f32 %v1078, %v1270
      %v1272 = vpop.f32.mrb[0].mxu0
      %1273 = vmatprep.mubr.f32.mxu0 0.0
      %1274 = vmatmul.mubr.f32.gmra.mrb[0].mxu0 %v1134
      %v1275 = vpop.f32.mrb[0].mxu0
      %v1276 = vadd.f32 %v1083, %v1275
      %v1277 = vpop.f32.mrb[0].mxu0
      %1278 = vmatprep.mubr.f32.mxu0 0.0
      %1279 = vmatmul.mubr.f32.gmra.mrb[0].mxu0 %v1137
      %v1280 = vpop.f32.mrb[0].mxu0
      %v1281 = vadd.f32 %v1088, %v1280
      %v1282 = vpop.f32.mrb[0].mxu0
      %1283 = vdwg.mxu0
      %v1284 = vld [vmem:[%s4 + $0x20] sm:$0xff]
      %v1285 = vld [vmem:[%s4 + $0x28] sm:$0xff]
      %1286 = vmatprep.subr.mxu0 0.0
      %1287 = vmatpush1.msra.mxu0 %v1284
      %1288 = vmatprep.subr.mxu0 0.0
      %1289 = vmatpush1.msra.mxu0 %v1285
      %1290 = vmatprep.subr.mxu0 0.0
      %1291 = vmatpush1.msra.mxu0 0.0
      %1292 = vmatprep.subr.mxu0 0.0
      %1293 = vmatpush1.msra.mxu0 0.0
      %1294 = vmatprep.subr.mxu0 0.0
      %1295 = vmatpush1.msra.mxu0 0.0
      %1296 = vmatprep.subr.mxu0 0.0
      %1297 = vmatpush1.msra.mxu0 0.0
      %1298 = vmatprep.subr.mxu0 0.0
      %1299 = vmatpush1.msra.mxu0 0.0
      %1300 = vmatprep.subr.mxu0 0.0
      %1301 = vmatpush1.msra.mxu0 0.0
      %1302 = vmatprep.subr.mxu0 0.0
      %1303 = vmatpush1.msra.mxu0 0.0
      %1304 = vmatprep.subr.mxu0 0.0
      %1305 = vmatpush1.msra.mxu0 0.0
      %1306 = vmatprep.subr.mxu0 0.0
      %1307 = vmatpush1.msra.mxu0 0.0
      %1308 = vmatprep.subr.mxu0 0.0
      %1309 = vmatpush1.msra.mxu0 0.0
      %1310 = vmatprep.subr.mxu0 0.0
      %1311 = vmatpush1.msra.mxu0 0.0
      %1312 = vmatprep.subr.mxu0 0.0
      %1313 = vmatpush1.msra.mxu0 0.0
      %1314 = vmatprep.subr.mxu0 0.0
      %1315 = vmatpush1.msra.mxu0 0.0
      %1316 = vmatprep.subr.mxu0 0.0
      %1317 = vmatpush1.msra.mxu0 0.0
      %1318 = vmatprep.subr.mxu0 0.0
      %1319 = vmatpush1.msra.mxu0 0.0
      %1320 = vmatprep.subr.mxu0 0.0
      %1321 = vmatpush1.msra.mxu0 0.0
      %1322 = vmatprep.subr.mxu0 0.0
      %1323 = vmatpush1.msra.mxu0 0.0
      %1324 = vmatprep.subr.mxu0 0.0
      %1325 = vmatpush1.msra.mxu0 0.0
      %1326 = vmatprep.subr.mxu0 0.0
      %1327 = vmatpush1.msra.mxu0 0.0
      %1328 = vmatprep.subr.mxu0 0.0
      %1329 = vmatpush1.msra.mxu0 0.0
      %1330 = vmatprep.subr.mxu0 0.0
      %1331 = vmatpush1.msra.mxu0 0.0
      %1332 = vmatprep.subr.mxu0 0.0
      %1333 = vmatpush1.msra.mxu0 0.0
      %1334 = vmatprep.subr.mxu0 0.0
      %1335 = vmatpush1.msra.mxu0 0.0
      %1336 = vmatprep.subr.mxu0 0.0
      %1337 = vmatpush1.msra.mxu0 0.0
      %1338 = vmatprep.subr.mxu0 0.0
      %1339 = vmatpush1.msra.mxu0 0.0
      %1340 = vmatprep.subr.mxu0 0.0
      %1341 = vmatpush1.msra.mxu0 0.0
      %1342 = vmatprep.subr.mxu0 0.0
      %1343 = vmatpush1.msra.mxu0 0.0
      %1344 = vmatprep.subr.mxu0 0.0
      %1345 = vmatpush1.msra.mxu0 0.0
      %1346 = vmatprep.subr.mxu0 0.0
      %1347 = vmatpush1.msra.mxu0 0.0
      %1348 = vmatprep.subr.mxu0 0.0
      %1349 = vmatpush1.msra.mxu0 0.0
      %1350 = vmatprep.mubr.f32.mxu0 0.0
      %1351 = vmatmul.mubr.f32.gmra.mrb[0].mxu0 %v554
      %v1352 = vpop.f32.mrb[0].mxu0
      %v1353 = vadd.f32 0.0, %v1352
      %v1354 = vpop.f32.mrb[0].mxu0
      %1355 = vmatprep.mubr.f32.mxu0 0.0
      %1356 = vmatmul.mubr.f32.gmra.mrb[0].mxu0 %v557
      %v1357 = vpop.f32.mrb[0].mxu0
      %v1358 = vadd.f32 0.0, %v1357
      %v1359 = vpop.f32.mrb[0].mxu0
      %1360 = vmatprep.mubr.f32.mxu0 0.0
      %1361 = vmatmul.mubr.f32.gmra.mrb[0].mxu0 %v560
      %v1362 = vpop.f32.mrb[0].mxu0
      %v1363 = vadd.f32 0.0, %v1362
      %v1364 = vpop.f32.mrb[0].mxu0
      %1365 = vmatprep.mubr.f32.mxu0 0.0
      %1366 = vmatmul.mubr.f32.gmra.mrb[0].mxu0 %v563
      %v1367 = vpop.f32.mrb[0].mxu0
      %v1368 = vadd.f32 0.0, %v1367
      %v1369 = vpop.f32.mrb[0].mxu0
      %1370 = vdwg.mxu0
      %1371 = vset.pattern.permute.xlu0 2
      %1372 = vperm.xlu0 %1371, %v528
      %v1373 = vpop.permute.xlu0 %1372
      %1374 = vset.pattern.permute.xlu0 2
      %1375 = vperm.xlu0 %1374, %v529
      %v1376 = vpop.permute.xlu0 %1375
      %1377 = vset.pattern.permute.xlu0 2
      %1378 = vperm.xlu0 %1377, %v530
      %v1379 = vpop.permute.xlu0 %1378
      %1380 = vset.pattern.permute.xlu0 2
      %1381 = vperm.xlu0 %1380, %v531
      %v1382 = vpop.permute.xlu0 %1381
      %1383 = vset.pattern.permute.xlu0 2
      %1384 = vperm.xlu0 %1383, %v532
      %v1385 = vpop.permute.xlu0 %1384
      %1386 = vset.pattern.permute.xlu0 2
      %1387 = vperm.xlu0 %1386, %v533
      %v1388 = vpop.permute.xlu0 %1387
      %1389 = vset.pattern.permute.xlu0 2
      %1390 = vperm.xlu0 %1389, %v534
      %v1391 = vpop.permute.xlu0 %1390
      %1392 = vset.pattern.permute.xlu0 2
      %1393 = vperm.xlu0 %1392, %v535
      %v1394 = vpop.permute.xlu0 %1393
      %1395 = vset.pattern.permute.xlu0 2
      %1396 = vperm.xlu0 %1395, %v536
      %v1397 = vpop.permute.xlu0 %1396
      %1398 = vset.pattern.permute.xlu0 2
      %1399 = vperm.xlu0 %1398, %v537
      %v1400 = vpop.permute.xlu0 %1399
      %1401 = vset.pattern.permute.xlu0 2
      %1402 = vperm.xlu0 %1401, %v538
      %v1403 = vpop.permute.xlu0 %1402
      %1404 = vset.pattern.permute.xlu0 2
      %1405 = vperm.xlu0 %1404, %v539
      %v1406 = vpop.permute.xlu0 %1405
      %1407 = vset.pattern.permute.xlu0 2
      %1408 = vperm.xlu0 %1407, %v540
      %v1409 = vpop.permute.xlu0 %1408
      %1410 = vset.pattern.permute.xlu0 2
      %1411 = vperm.xlu0 %1410, %v541
      %v1412 = vpop.permute.xlu0 %1411
      %1413 = vset.pattern.permute.xlu0 2
      %1414 = vperm.xlu0 %1413, %v542
      %v1415 = vpop.permute.xlu0 %1414
      %1416 = vset.pattern.permute.xlu0 2
      %1417 = vperm.xlu0 %1416, %v543
      %v1418 = vpop.permute.xlu0 %1417
      %vm1419 = vcmp.eq.s32.totalorder %v1373, %v545
      %vm1420 = vcmp.eq.s32.totalorder %v1376, %v545
      %vm1421 = vcmp.eq.s32.totalorder %v1379, %v545
      %vm1422 = vcmp.eq.s32.totalorder %v1382, %v545
      %vm1423 = vcmp.eq.s32.totalorder %v1385, %v545
      %vm1424 = vcmp.eq.s32.totalorder %v1388, %v545
      %vm1425 = vcmp.eq.s32.totalorder %v1391, %v545
      %vm1426 = vcmp.eq.s32.totalorder %v1394, %v545
      %vm1427 = vcmp.eq.s32.totalorder %v1397, %v545
      %vm1428 = vcmp.eq.s32.totalorder %v1400, %v545
      %vm1429 = vcmp.eq.s32.totalorder %v1403, %v545
      %vm1430 = vcmp.eq.s32.totalorder %v1406, %v545
      %vm1431 = vcmp.eq.s32.totalorder %v1409, %v545
      %vm1432 = vcmp.eq.s32.totalorder %v1412, %v545
      %vm1433 = vcmp.eq.s32.totalorder %v1415, %v545
      %vm1434 = vcmp.eq.s32.totalorder %v1418, %v545
      %v1435 = vsel %vm1419, 1.0, 0.0
      %v1436 = vsel %vm1420, 1.0, 0.0
      %v1437 = vsel %vm1421, 1.0, 0.0
      %v1438 = vsel %vm1422, 1.0, 0.0
      %v1439 = vsel %vm1423, 1.0, 0.0
      %v1440 = vsel %vm1424, 1.0, 0.0
      %v1441 = vsel %vm1425, 1.0, 0.0
      %v1442 = vsel %vm1426, 1.0, 0.0
      %v1443 = vsel %vm1427, 1.0, 0.0
      %v1444 = vsel %vm1428, 1.0, 0.0
      %v1445 = vsel %vm1429, 1.0, 0.0
      %v1446 = vsel %vm1430, 1.0, 0.0
      %v1447 = vsel %vm1431, 1.0, 0.0
      %v1448 = vsel %vm1432, 1.0, 0.0
      %v1449 = vsel %vm1433, 1.0, 0.0
      %v1450 = vsel %vm1434, 1.0, 0.0
      %v1452 = vsel %vm897, %v1435, 0
      %v1455 = vsel %vm897, %v1436, 0
      %v1458 = vsel %vm897, %v1437, 0
      %v1461 = vsel %vm897, %v1438, 0
      %v1464 = vsel %vm897, %v1439, 0
      %v1467 = vsel %vm897, %v1440, 0
      %v1470 = vsel %vm897, %v1441, 0
      %v1473 = vsel %vm897, %v1442, 0
      %v1476 = vsel %vm897, %v1443, 0
      %v1479 = vsel %vm897, %v1444, 0
      %v1482 = vsel %vm897, %v1445, 0
      %v1485 = vsel %vm897, %v1446, 0
      %v1488 = vsel %vm897, %v1447, 0
      %v1491 = vsel %vm897, %v1448, 0
      %v1494 = vsel %vm897, %v1449, 0
      %v1497 = vsel %vm897, %v1450, 0
      %1499 = vmatprep.subr.mxu0 0.0
      %1500 = vmatpush1.msra.mxu0 %v1353
      %1501 = vmatprep.subr.mxu0 0.0
      %1502 = vmatpush1.msra.mxu0 %v1358
      %1503 = vmatprep.subr.mxu0 0.0
      %1504 = vmatpush1.msra.mxu0 %v1363
      %1505 = vmatprep.subr.mxu0 0.0
      %1506 = vmatpush1.msra.mxu0 %v1368
      %1507 = vmatprep.subr.mxu0 0.0
      %1508 = vmatpush1.msra.mxu0 0.0
      %1509 = vmatprep.subr.mxu0 0.0
      %1510 = vmatpush1.msra.mxu0 0.0
      %1511 = vmatprep.subr.mxu0 0.0
      %1512 = vmatpush1.msra.mxu0 0.0
      %1513 = vmatprep.subr.mxu0 0.0
      %1514 = vmatpush1.msra.mxu0 0.0
      %1515 = vmatprep.subr.mxu0 0.0
      %1516 = vmatpush1.msra.mxu0 0.0
      %1517 = vmatprep.subr.mxu0 0.0
      %1518 = vmatpush1.msra.mxu0 0.0
      %1519 = vmatprep.subr.mxu0 0.0
      %1520 = vmatpush1.msra.mxu0 0.0
      %1521 = vmatprep.subr.mxu0 0.0
      %1522 = vmatpush1.msra.mxu0 0.0
      %1523 = vmatprep.subr.mxu0 0.0
      %1524 = vmatpush1.msra.mxu0 0.0
      %1525 = vmatprep.subr.mxu0 0.0
      %1526 = vmatpush1.msra.mxu0 0.0
      %1527 = vmatprep.subr.mxu0 0.0
      %1528 = vmatpush1.msra.mxu0 0.0
      %1529 = vmatprep.subr.mxu0 0.0
      %1530 = vmatpush1.msra.mxu0 0.0
      %1531 = vmatprep.subr.mxu0 0.0
      %1532 = vmatpush1.msra.mxu0 0.0
      %1533 = vmatprep.subr.mxu0 0.0
      %1534 = vmatpush1.msra.mxu0 0.0
      %1535 = vmatprep.subr.mxu0 0.0
      %1536 = vmatpush1.msra.mxu0 0.0
      %1537 = vmatprep.subr.mxu0 0.0
      %1538 = vmatpush1.msra.mxu0 0.0
      %1539 = vmatprep.subr.mxu0 0.0
      %1540 = vmatpush1.msra.mxu0 0.0
      %1541 = vmatprep.subr.mxu0 0.0
      %1542 = vmatpush1.msra.mxu0 0.0
      %1543 = vmatprep.subr.mxu0 0.0
      %1544 = vmatpush1.msra.mxu0 0.0
      %1545 = vmatprep.subr.mxu0 0.0
      %1546 = vmatpush1.msra.mxu0 0.0
      %1547 = vmatprep.subr.mxu0 0.0
      %1548 = vmatpush1.msra.mxu0 0.0
      %1549 = vmatprep.subr.mxu0 0.0
      %1550 = vmatpush1.msra.mxu0 0.0
      %1551 = vmatprep.subr.mxu0 0.0
      %1552 = vmatpush1.msra.mxu0 0.0
      %1553 = vmatprep.subr.mxu0 0.0
      %1554 = vmatpush1.msra.mxu0 0.0
      %1555 = vmatprep.subr.mxu0 0.0
      %1556 = vmatpush1.msra.mxu0 0.0
      %1557 = vmatprep.subr.mxu0 0.0
      %1558 = vmatpush1.msra.mxu0 0.0
      %1559 = vmatprep.subr.mxu0 0.0
      %1560 = vmatpush1.msra.mxu0 0.0
      %1561 = vmatprep.subr.mxu0 0.0
      %1562 = vmatpush1.msra.mxu0 0.0
      %1563 = vmatprep.mubr.f32.mxu0 0.0
      %1564 = vmatmul.mubr.f32.gmra.mrb[0].mxu0 %v1452
      %v1565 = vpop.f32.mrb[0].mxu0
      %v1566 = vadd.f32 0.0, %v1565
      %v1567 = vpop.f32.mrb[0].mxu0
      %1568 = vmatprep.mubr.f32.mxu0 0.0
      %1569 = vmatmul.mubr.f32.gmra.mrb[0].mxu0 %v1455
      %v1570 = vpop.f32.mrb[0].mxu0
      %v1571 = vadd.f32 0.0, %v1570
      %v1572 = vpop.f32.mrb[0].mxu0
      %1573 = vmatprep.mubr.f32.mxu0 0.0
      %1574 = vmatmul.mubr.f32.gmra.mrb[0].mxu0 %v1458
      %v1575 = vpop.f32.mrb[0].mxu0
      %v1576 = vadd.f32 0.0, %v1575
      %v1577 = vpop.f32.mrb[0].mxu0
      %1578 = vmatprep.mubr.f32.mxu0 0.0
      %1579 = vmatmul.mubr.f32.gmra.mrb[0].mxu0 %v1461
      %v1580 = vpop.f32.mrb[0].mxu0
      %v1581 = vadd.f32 0.0, %v1580
      %v1582 = vpop.f32.mrb[0].mxu0
      %1583 = vmatprep.mubr.f32.mxu0 0.0
      %1584 = vmatmul.mubr.f32.gmra.mrb[0].mxu0 %v1464
      %v1585 = vpop.f32.mrb[0].mxu0
      %v1586 = vadd.f32 0.0, %v1585
      %v1587 = vpop.f32.mrb[0].mxu0
      %1588 = vmatprep.mubr.f32.mxu0 0.0
      %1589 = vmatmul.mubr.f32.gmra.mrb[0].mxu0 %v1467
      %v1590 = vpop.f32.mrb[0].mxu0
      %v1591 = vadd.f32 0.0, %v1590
      %v1592 = vpop.f32.mrb[0].mxu0
      %1593 = vmatprep.mubr.f32.mxu0 0.0
      %1594 = vmatmul.mubr.f32.gmra.mrb[0].mxu0 %v1470
      %v1595 = vpop.f32.mrb[0].mxu0
      %v1596 = vadd.f32 0.0, %v1595
      %v1597 = vpop.f32.mrb[0].mxu0
      %1598 = vmatprep.mubr.f32.mxu0 0.0
      %1599 = vmatmul.mubr.f32.gmra.mrb[0].mxu0 %v1473
      %v1600 = vpop.f32.mrb[0].mxu0
      %v1601 = vadd.f32 0.0, %v1600
      %v1602 = vpop.f32.mrb[0].mxu0
      %1603 = vmatprep.mubr.f32.mxu0 0.0
      %1604 = vmatmul.mubr.f32.gmra.mrb[0].mxu0 %v1476
      %v1605 = vpop.f32.mrb[0].mxu0
      %v1606 = vadd.f32 0.0, %v1605
      %v1607 = vpop.f32.mrb[0].mxu0
      %1608 = vmatprep.mubr.f32.mxu0 0.0
      %1609 = vmatmul.mubr.f32.gmra.mrb[0].mxu0 %v1479
      %v1610 = vpop.f32.mrb[0].mxu0
      %v1611 = vadd.f32 0.0, %v1610
      %v1612 = vpop.f32.mrb[0].mxu0
      %1613 = vmatprep.mubr.f32.mxu0 0.0
      %1614 = vmatmul.mubr.f32.gmra.mrb[0].mxu0 %v1482
      %v1615 = vpop.f32.mrb[0].mxu0
      %v1616 = vadd.f32 0.0, %v1615
      %v1617 = vpop.f32.mrb[0].mxu0
      %1618 = vmatprep.mubr.f32.mxu0 0.0
      %1619 = vmatmul.mubr.f32.gmra.mrb[0].mxu0 %v1485
      %v1620 = vpop.f32.mrb[0].mxu0
      %v1621 = vadd.f32 0.0, %v1620
      %v1622 = vpop.f32.mrb[0].mxu0
      %1623 = vmatprep.mubr.f32.mxu0 0.0
      %1624 = vmatmul.mubr.f32.gmra.mrb[0].mxu0 %v1488
      %v1625 = vpop.f32.mrb[0].mxu0
      %v1626 = vadd.f32 0.0, %v1625
      %v1627 = vpop.f32.mrb[0].mxu0
      %1628 = vmatprep.mubr.f32.mxu0 0.0
      %1629 = vmatmul.mubr.f32.gmra.mrb[0].mxu0 %v1491
      %v1630 = vpop.f32.mrb[0].mxu0
      %v1631 = vadd.f32 0.0, %v1630
      %v1632 = vpop.f32.mrb[0].mxu0
      %1633 = vmatprep.mubr.f32.mxu0 0.0
      %1634 = vmatmul.mubr.f32.gmra.mrb[0].mxu0 %v1494
      %v1635 = vpop.f32.mrb[0].mxu0
      %v1636 = vadd.f32 0.0, %v1635
      %v1637 = vpop.f32.mrb[0].mxu0
      %1638 = vmatprep.mubr.f32.mxu0 0.0
      %1639 = vmatmul.mubr.f32.gmra.mrb[0].mxu0 %v1497
      %v1640 = vpop.f32.mrb[0].mxu0
      %v1641 = vadd.f32 0.0, %v1640
      %v1642 = vpop.f32.mrb[0].mxu0
      %1643 = vdwg.mxu0
      %v1644 = vadd.f32 %v1206, %v1566
      %v1645 = vadd.f32 %v1211, %v1571
      %v1646 = vadd.f32 %v1216, %v1576
      %v1647 = vadd.f32 %v1221, %v1581
      %v1648 = vadd.f32 %v1226, %v1586
      %v1649 = vadd.f32 %v1231, %v1591
      %v1650 = vadd.f32 %v1236, %v1596
      %v1651 = vadd.f32 %v1241, %v1601
      %v1652 = vadd.f32 %v1246, %v1606
      %v1653 = vadd.f32 %v1251, %v1611
      %v1654 = vadd.f32 %v1256, %v1616
      %v1655 = vadd.f32 %v1261, %v1621
      %v1656 = vadd.f32 %v1266, %v1626
      %v1657 = vadd.f32 %v1271, %v1631
      %v1658 = vadd.f32 %v1276, %v1636
      %v1659 = vadd.f32 %v1281, %v1641
      %v1660 = vld [vmem:[%s7] sm:$0x1]
      %v1661 = vlaneseq
      %v1662 = vshrl.u32 %v1661, 7
      %v1663 = vsub.s32 0, %v1662
      %v1664 = vrot.slane %v1660, %v1663
      %v1665 = vadd.f32 %v1644, %v1664
      %v1666 = vadd.f32 %v1645, %v1664
      %v1667 = vadd.f32 %v1646, %v1664
      %v1668 = vadd.f32 %v1647, %v1664
      %v1669 = vadd.f32 %v1648, %v1664
      %v1670 = vadd.f32 %v1649, %v1664
      %v1671 = vadd.f32 %v1650, %v1664
      %v1672 = vadd.f32 %v1651, %v1664
      %v1673 = vadd.f32 %v1652, %v1664
      %v1674 = vadd.f32 %v1653, %v1664
      %v1675 = vadd.f32 %v1654, %v1664
      %v1676 = vadd.f32 %v1655, %v1664
      %v1677 = vadd.f32 %v1656, %v1664
      %v1678 = vadd.f32 %v1657, %v1664
      %v1679 = vadd.f32 %v1658, %v1664
      %v1680 = vadd.f32 %v1659, %v1664
      %v1681 = vlaneseq
      %v1682 = vshrl.u32 %v1681, 7
      %v1683 = vadd.s32 %v1682, 8
      %v1684 = vadd.s32 %v1682, 16
      %v1685 = vadd.s32 %v1682, 24
      %v1686 = vadd.s32 %v1682, 32
      %v1687 = vadd.s32 %v1682, 40
      %v1688 = vadd.s32 %v1682, 48
      %v1689 = vadd.s32 %v1682, 56
      %v1690 = vadd.s32 %v1682, 64
      %v1691 = vadd.s32 %v1682, 72
      %v1692 = vadd.s32 %v1682, 80
      %v1693 = vadd.s32 %v1682, 88
      %v1694 = vadd.s32 %v1682, 96
      %v1695 = vadd.s32 %v1682, 104
      %v1696 = vadd.s32 %v1682, 112
      %v1697 = vadd.s32 %v1682, 120
      %vm1698 = vcmp.ge.s32.totalorder %v545, 0
      %vm1699 = vcmp.lt.s32.totalorder %v545, 16
      %vm1700 = vmand %vm1698, %vm1699
      %v1701 = vsel %vm1700, 128, 0
      %vm1702 = vcmp.ge.s32.totalorder %v545, 16
      %vm1703 = vcmp.lt.s32.totalorder %v545, 32
      %vm1704 = vmand %vm1702, %vm1703
      %v1705 = vsel %vm1704, 112, %v1701
      %vm1706 = vcmp.ge.s32.totalorder %v545, 32
      %vm1707 = vcmp.lt.s32.totalorder %v545, 64
      %vm1708 = vmand %vm1706, %vm1707
      %v1709 = vsel %vm1708, 96, %v1705
      %vm1710 = vcmp.lt.s32.totalorder %v1682, %v1709
      %vm1711 = vcmp.lt.s32.totalorder %v1683, %v1709
      %vm1712 = vcmp.lt.s32.totalorder %v1684, %v1709
      %vm1713 = vcmp.lt.s32.totalorder %v1685, %v1709
      %vm1714 = vcmp.lt.s32.totalorder %v1686, %v1709
      %vm1715 = vcmp.lt.s32.totalorder %v1687, %v1709
      %vm1716 = vcmp.lt.s32.totalorder %v1688, %v1709
      %vm1717 = vcmp.lt.s32.totalorder %v1689, %v1709
      %vm1718 = vcmp.lt.s32.totalorder %v1690, %v1709
      %vm1719 = vcmp.lt.s32.totalorder %v1691, %v1709
      %vm1720 = vcmp.lt.s32.totalorder %v1692, %v1709
      %vm1721 = vcmp.lt.s32.totalorder %v1693, %v1709
      %vm1722 = vcmp.lt.s32.totalorder %v1694, %v1709
      %vm1723 = vcmp.lt.s32.totalorder %v1695, %v1709
      %vm1724 = vcmp.lt.s32.totalorder %v1696, %v1709
      %vm1725 = vcmp.lt.s32.totalorder %v1697, %v1709
      %v1726 = vmax.f32 %v1665, 0.0
      %v1727 = vmax.f32 %v1666, 0.0
      %v1728 = vmax.f32 %v1667, 0.0
      %v1729 = vmax.f32 %v1668, 0.0
      %v1730 = vmax.f32 %v1669, 0.0
      %v1731 = vmax.f32 %v1670, 0.0
      %v1732 = vmax.f32 %v1671, 0.0
      %v1733 = vmax.f32 %v1672, 0.0
      %v1734 = vmax.f32 %v1673, 0.0
      %v1735 = vmax.f32 %v1674, 0.0
      %v1736 = vmax.f32 %v1675, 0.0
      %v1737 = vmax.f32 %v1676, 0.0
      %v1738 = vmax.f32 %v1677, 0.0
      %v1739 = vmax.f32 %v1678, 0.0
      %v1740 = vmax.f32 %v1679, 0.0
      %v1741 = vmax.f32 %v1680, 0.0
      %v1742 = vsel %vm1710, %v1726, 0.0
      %v1743 = vsel %vm1711, %v1727, 0.0
      %v1744 = vsel %vm1712, %v1728, 0.0
      %v1745 = vsel %vm1713, %v1729, 0.0
      %v1746 = vsel %vm1714, %v1730, 0.0
      %v1747 = vsel %vm1715, %v1731, 0.0
      %v1748 = vsel %vm1716, %v1732, 0.0
      %v1749 = vsel %vm1717, %v1733, 0.0
      %v1750 = vsel %vm1718, %v1734, 0.0
      %v1751 = vsel %vm1719, %v1735, 0.0
      %v1752 = vsel %vm1720, %v1736, 0.0
      %v1753 = vsel %vm1721, %v1737, 0.0
      %v1754 = vsel %vm1722, %v1738, 0.0
      %v1755 = vsel %vm1723, %v1739, 0.0
      %v1756 = vsel %vm1724, %v1740, 0.0
      %v1757 = vsel %vm1725, %v1741, 0.0
      %v1758 = vmax.f32 %v1742, %v1744
      %v1759 = vmax.f32 %v1743, %v1745
      %v1760 = vmax.f32 %v1758, %v1746
      %v1761 = vmax.f32 %v1759, %v1747
      %v1762 = vmax.f32 %v1760, %v1748
      %v1763 = vmax.f32 %v1761, %v1749
      %v1764 = vmax.f32 %v1762, %v1750
      %v1765 = vmax.f32 %v1763, %v1751
      %v1766 = vmax.f32 %v1764, %v1752
      %v1767 = vmax.f32 %v1765, %v1753
      %v1768 = vmax.f32 %v1766, %v1754
      %v1769 = vmax.f32 %v1767, %v1755
      %v1770 = vmax.f32 %v1768, %v1756
      %v1771 = vmax.f32 %v1769, %v1757
      %v1772 = vld [vmem:[%s5] sm:$0xff]
      %v1773 = vld [vmem:[%s5 + $0x8] sm:$0xff]
      %v1774 = vld [vmem:[%s5 + $0x10] sm:$0xff]
      %v1775 = vld [vmem:[%s5 + $0x18] sm:$0xff]
      %v1776 = vld [vmem:[%s5 + $0x20] sm:$0xff]
      %v1777 = vld [vmem:[%s5 + $0x28] sm:$0xff]
      %v1778 = vld [vmem:[%s5 + $0x30] sm:$0xff]
      %v1779 = vld [vmem:[%s5 + $0x38] sm:$0xff]
      %v1780 = vld [vmem:[%s7 + $0x1] sm:$0x1]
      %v1781 = vlaneseq
      %v1782 = vshrl.u32 %v1781, 7
      %v1783 = vsub.s32 0, %v1782
      %v1784 = vrot.slane %v1780, %v1783
      %vm1785 = vcmask 523264
      %v1787 = vsel %vm1785, %v1770, 0
      %v1790 = vsel %vm1785, %v1771, 0
      %1792 = vmatprep.subr.mxu0 0.0
      %1793 = vmatpush1.msra.mxu0 %v1772
      %1794 = vmatprep.subr.mxu0 0.0
      %1795 = vmatpush1.msra.mxu0 %v1773
      %1796 = vmatprep.subr.mxu0 0.0
      %1797 = vmatpush1.msra.mxu0 %v1774
      %1798 = vmatprep.subr.mxu0 0.0
      %1799 = vmatpush1.msra.mxu0 %v1775
      %1800 = vmatprep.subr.mxu0 0.0
      %1801 = vmatpush1.msra.mxu0 %v1776
      %1802 = vmatprep.subr.mxu0 0.0
      %1803 = vmatpush1.msra.mxu0 %v1777
      %1804 = vmatprep.subr.mxu0 0.0
      %1805 = vmatpush1.msra.mxu0 %v1778
      %1806 = vmatprep.subr.mxu0 0.0
      %1807 = vmatpush1.msra.mxu0 %v1779
      %1808 = vmatprep.subr.mxu0 0.0
      %1809 = vmatpush1.msra.mxu0 0.0
      %1810 = vmatprep.subr.mxu0 0.0
      %1811 = vmatpush1.msra.mxu0 0.0
      %1812 = vmatprep.subr.mxu0 0.0
      %1813 = vmatpush1.msra.mxu0 0.0
      %1814 = vmatprep.subr.mxu0 0.0
      %1815 = vmatpush1.msra.mxu0 0.0
      %1816 = vmatprep.subr.mxu0 0.0
      %1817 = vmatpush1.msra.mxu0 0.0
      %1818 = vmatprep.subr.mxu0 0.0
      %1819 = vmatpush1.msra.mxu0 0.0
      %1820 = vmatprep.subr.mxu0 0.0
      %1821 = vmatpush1.msra.mxu0 0.0
      %1822 = vmatprep.subr.mxu0 0.0
      %1823 = vmatpush1.msra.mxu0 0.0
      %1824 = vmatprep.subr.mxu0 0.0
      %1825 = vmatpush1.msra.mxu0 0.0
      %1826 = vmatprep.subr.mxu0 0.0
      %1827 = vmatpush1.msra.mxu0 0.0
      %1828 = vmatprep.subr.mxu0 0.0
      %1829 = vmatpush1.msra.mxu0 0.0
      %1830 = vmatprep.subr.mxu0 0.0
      %1831 = vmatpush1.msra.mxu0 0.0
      %1832 = vmatprep.subr.mxu0 0.0
      %1833 = vmatpush1.msra.mxu0 0.0
      %1834 = vmatprep.subr.mxu0 0.0
      %1835 = vmatpush1.msra.mxu0 0.0
      %1836 = vmatprep.subr.mxu0 0.0
      %1837 = vmatpush1.msra.mxu0 0.0
      %1838 = vmatprep.subr.mxu0 0.0
      %1839 = vmatpush1.msra.mxu0 0.0
      %1840 = vmatprep.subr.mxu0 0.0
      %1841 = vmatpush1.msra.mxu0 0.0
      %1842 = vmatprep.subr.mxu0 0.0
      %1843 = vmatpush1.msra.mxu0 0.0
      %1844 = vmatprep.subr.mxu0 0.0
      %1845 = vmatpush1.msra.mxu0 0.0
      %1846 = vmatprep.subr.mxu0 0.0
      %1847 = vmatpush1.msra.mxu0 0.0
      %1848 = vmatprep.subr.mxu0 0.0
      %1849 = vmatpush1.msra.mxu0 0.0
      %1850 = vmatprep.subr.mxu0 0.0
      %1851 = vmatpush1.msra.mxu0 0.0
      %1852 = vmatprep.subr.mxu0 0.0
      %1853 = vmatpush1.msra.mxu0 0.0
      %1854 = vmatprep.subr.mxu0 0.0
      %1855 = vmatpush1.msra.mxu0 0.0
      %1856 = vmatprep.mubr.f32.mxu0 0.0
      %1857 = vmatmul.mubr.f32.gmra.mrb[0].mxu0 %v1787
      %v1858 = vpop.f32.mrb[0].mxu0
      %v1859 = vadd.f32 %v1784, %v1858
      %v1860 = vpop.f32.mrb[0].mxu0
      %1861 = vmatprep.mubr.f32.mxu0 0.0
      %1862 = vmatmul.mubr.f32.gmra.mrb[0].mxu0 %v1790
      %v1863 = vpop.f32.mrb[0].mxu0
      %v1864 = vadd.f32 %v1784, %v1863
      %v1865 = vpop.f32.mrb[0].mxu0
      %1866 = vdwg.mxu0
      %v1867 = vmax.f32 %v1859, 0.0
      %v1868 = vmax.f32 %v1864, 0.0
      %v1869 = vxor.u32 %v1859, 2147483648
      %v1870 = vxor.u32 %v1864, 2147483648
      %v1871 = vmul.f32 %v1869, 1.442695
      %v1872 = vpow.pop %v1871
      %v1873 = vmul.f32 %v1870, 1.442695
      %v1874 = vpow.pop %v1873
      %v1875 = vadd.f32 %v1872, 1.0
      %v1876 = vadd.f32 %v1874, 1.0
      %v1877 = vrcp.pop %v1875
      %v1878 = vmul.f32 1.0, %v1877
      %v1879 = vrcp.pop %v1876
      %v1880 = vmul.f32 1.0, %v1879
      %1883 = vrot.lane.b32.xlu0 %v1867, 64
      %v1884 = vpop.permute.xlu0 %1883
      %1885 = vrot.lane.b32.xlu0 %v1868, 64
      %v1886 = vpop.permute.xlu0 %1885
      %v1889 = vmul.f32 %v1878, %v1884
      %v1890 = vmul.f32 %v1880, %v1886
      %v1891 = vsub.f32 1.0, %v1878
      %v1892 = vsub.f32 1.0, %v1880
      %1893 = vrot.lane.b32.xlu0 %v1770, 64
      %v1894 = vpop.permute.xlu0 %1893
      %1895 = vrot.lane.b32.xlu0 %v1771, 64
      %v1896 = vpop.permute.xlu0 %1895
      %v1899 = vmul.f32 %v1891, %v1894
      %v1900 = vmul.f32 %v1892, %v1896
      %v1901 = vadd.f32 %v1889, %v1899
      %v1902 = vadd.f32 %v1890, %v1900
      %v1903 = vld [vmem:[%s491] sm:$0xff]
      %v1904 = vld [vmem:[%s491 + $0x8] sm:$0xff]
      %1905 = vset.pattern.permute.xlu0 0
      %1906 = vperm.xlu0 %1905, %v1903
      %v1907 = vpop.permute.xlu0 %1906
      %1908 = vset.pattern.permute.xlu0 0
      %1909 = vperm.xlu0 %1908, %v1904
      %v1910 = vpop.permute.xlu0 %1909
      %vm1911 = vcmp.eq.s32.totalorder %v1907, %v545
      %vm1912 = vcmp.eq.s32.totalorder %v1910, %v545
      %v1913 = vsel %vm1911, 1.0, 0.0
      %v1914 = vsel %vm1912, 1.0, 0.0
      %v1915 = vld [vmem:[%s2] sm:$0xff]
      %v1916 = vld [vmem:[%s2 + $0x8] sm:$0xff]
      %v1917 = vld [vmem:[%s2 + $0x10] sm:$0xff]
      %v1918 = vld [vmem:[%s2 + $0x18] sm:$0xff]
      %v1919 = vld [vmem:[%s2 + $0x20] sm:$0xff]
      %v1920 = vld [vmem:[%s2 + $0x28] sm:$0xff]
      %v1921 = vld [vmem:[%s2 + $0x30] sm:$0x3]
      %vm1922 = vcmask 408576
      %v1924 = vsel %vm1922, %v1913, 0
      %v1927 = vsel %vm1922, %v1914, 0
      %vm1929 = vcmask 1041408
      %v1931 = vsel %vm1929, %v1921, 0
      %1933 = vmatprep.subr.mxu0 0.0
      %1934 = vmatpush1.msra.mxu0 %v1915
      %1935 = vmatprep.subr.mxu0 0.0
      %1936 = vmatpush1.msra.mxu0 %v1916
      %1937 = vmatprep.subr.mxu0 0.0
      %1938 = vmatpush1.msra.mxu0 %v1917
      %1939 = vmatprep.subr.mxu0 0.0
      %1940 = vmatpush1.msra.mxu0 %v1918
      %1941 = vmatprep.subr.mxu0 0.0
      %1942 = vmatpush1.msra.mxu0 %v1919
      %1943 = vmatprep.subr.mxu0 0.0
      %1944 = vmatpush1.msra.mxu0 %v1920
      %1945 = vmatprep.subr.mxu0 0.0
      %1946 = vmatpush1.msra.mxu0 %v1931
      %1947 = vmatprep.subr.mxu0 0.0
      %1948 = vmatpush1.msra.mxu0 0.0
      %1949 = vmatprep.subr.mxu0 0.0
      %1950 = vmatpush1.msra.mxu0 0.0
      %1951 = vmatprep.subr.mxu0 0.0
      %1952 = vmatpush1.msra.mxu0 0.0
      %1953 = vmatprep.subr.mxu0 0.0
      %1954 = vmatpush1.msra.mxu0 0.0
      %1955 = vmatprep.subr.mxu0 0.0
      %1956 = vmatpush1.msra.mxu0 0.0
      %1957 = vmatprep.subr.mxu0 0.0
      %1958 = vmatpush1.msra.mxu0 0.0
      %1959 = vmatprep.subr.mxu0 0.0
      %1960 = vmatpush1.msra.mxu0 0.0
      %1961 = vmatprep.subr.mxu0 0.0
      %1962 = vmatpush1.msra.mxu0 0.0
      %1963 = vmatprep.subr.mxu0 0.0
      %1964 = vmatpush1.msra.mxu0 0.0
      %1965 = vmatprep.subr.mxu0 0.0
      %1966 = vmatpush1.msra.mxu0 0.0
      %1967 = vmatprep.subr.mxu0 0.0
      %1968 = vmatpush1.msra.mxu0 0.0
      %1969 = vmatprep.subr.mxu0 0.0
      %1970 = vmatpush1.msra.mxu0 0.0
      %1971 = vmatprep.subr.mxu0 0.0
      %1972 = vmatpush1.msra.mxu0 0.0
      %1973 = vmatprep.subr.mxu0 0.0
      %1974 = vmatpush1.msra.mxu0 0.0
      %1975 = vmatprep.subr.mxu0 0.0
      %1976 = vmatpush1.msra.mxu0 0.0
      %1977 = vmatprep.subr.mxu0 0.0
      %1978 = vmatpush1.msra.mxu0 0.0
      %1979 = vmatprep.subr.mxu0 0.0
      %1980 = vmatpush1.msra.mxu0 0.0
      %1981 = vmatprep.subr.mxu0 0.0
      %1982 = vmatpush1.msra.mxu0 0.0
      %1983 = vmatprep.subr.mxu0 0.0
      %1984 = vmatpush1.msra.mxu0 0.0
      %1985 = vmatprep.subr.mxu0 0.0
      %1986 = vmatpush1.msra.mxu0 0.0
      %1987 = vmatprep.subr.mxu0 0.0
      %1988 = vmatpush1.msra.mxu0 0.0
      %1989 = vmatprep.subr.mxu0 0.0
      %1990 = vmatpush1.msra.mxu0 0.0
      %1991 = vmatprep.subr.mxu0 0.0
      %1992 = vmatpush1.msra.mxu0 0.0
      %1993 = vmatprep.subr.mxu0 0.0
      %1994 = vmatpush1.msra.mxu0 0.0
      %1995 = vmatprep.subr.mxu0 0.0
      %1996 = vmatpush1.msra.mxu0 0.0
      %1997 = vmatprep.mubr.f32.mxu0 0.0
      %1998 = vmatmul.mubr.f32.gmra.mrb[0].mxu0 %v1924
      %v1999 = vpop.f32.mrb[0].mxu0
      %v2000 = vadd.f32 0.0, %v1999
      %v2001 = vpop.f32.mrb[0].mxu0
      %2002 = vmatprep.mubr.f32.mxu0 0.0
      %2003 = vmatmul.mubr.f32.gmra.mrb[0].mxu0 %v1927
      %v2004 = vpop.f32.mrb[0].mxu0
      %v2005 = vadd.f32 0.0, %v2004
      %v2006 = vpop.f32.mrb[0].mxu0
      %2007 = vdwg.mxu0
      %v2008 = vld [vmem:[%s6] sm:$0xff]
      %v2009 = vld [vmem:[%s6 + $0x8] sm:$0xff]
      %v2010 = vld [vmem:[%s6 + $0x10] sm:$0xff]
      %v2011 = vld [vmem:[%s6 + $0x18] sm:$0xff]
      %v2012 = vld [vmem:[%s6 + $0x20] sm:$0xff]
      %v2013 = vld [vmem:[%s6 + $0x28] sm:$0xff]
      %v2014 = vld [vmem:[%s6 + $0x30] sm:$0xff]
      %v2015 = vld [vmem:[%s6 + $0x38] sm:$0xff]
      %v2016 = vld [vmem:[%s6 + $0x40] sm:$0xff]
      %v2017 = vld [vmem:[%s6 + $0x48] sm:$0xff]
      %v2018 = vld [vmem:[%s6 + $0x50] sm:$0xff]
      %v2019 = vld [vmem:[%s6 + $0x58] sm:$0xff]
      %2022 = vrot.lane.b32.xlu0 %v1901, 64
      %v2023 = vpop.permute.xlu0 %2022
      %2024 = vrot.lane.b32.xlu0 %v1902, 64
      %v2025 = vpop.permute.xlu0 %2024
      %v2026 = vsel %vm1785, %v2023, 0
      %v2028 = vsel %vm1785, %v2025, 0
      %2030 = vmatprep.subr.mxu0 0.0
      %2031 = vmatpush1.msra.mxu0 %v2012
      %2032 = vmatprep.subr.mxu0 0.0
      %2033 = vmatpush1.msra.mxu0 %v2013
      %2034 = vmatprep.subr.mxu0 0.0
      %2035 = vmatpush1.msra.mxu0 %v2014
      %2036 = vmatprep.subr.mxu0 0.0
      %2037 = vmatpush1.msra.mxu0 %v2015
      %2038 = vmatprep.subr.mxu0 0.0
      %2039 = vmatpush1.msra.mxu0 %v2016
      %2040 = vmatprep.subr.mxu0 0.0
      %2041 = vmatpush1.msra.mxu0 %v2017
      %2042 = vmatprep.subr.mxu0 0.0
      %2043 = vmatpush1.msra.mxu0 %v2018
      %2044 = vmatprep.subr.mxu0 0.0
      %2045 = vmatpush1.msra.mxu0 %v2019
      %2046 = vmatprep.subr.mxu0 0.0
      %2047 = vmatpush1.msra.mxu0 0.0
      %2048 = vmatprep.subr.mxu0 0.0
      %2049 = vmatpush1.msra.mxu0 0.0
      %2050 = vmatprep.subr.mxu0 0.0
      %2051 = vmatpush1.msra.mxu0 0.0
      %2052 = vmatprep.subr.mxu0 0.0
      %2053 = vmatpush1.msra.mxu0 0.0
      %2054 = vmatprep.subr.mxu0 0.0
      %2055 = vmatpush1.msra.mxu0 0.0
      %2056 = vmatprep.subr.mxu0 0.0
      %2057 = vmatpush1.msra.mxu0 0.0
      %2058 = vmatprep.subr.mxu0 0.0
      %2059 = vmatpush1.msra.mxu0 0.0
      %2060 = vmatprep.subr.mxu0 0.0
      %2061 = vmatpush1.msra.mxu0 0.0
      %2062 = vmatprep.subr.mxu0 0.0
      %2063 = vmatpush1.msra.mxu0 0.0
      %2064 = vmatprep.subr.mxu0 0.0
      %2065 = vmatpush1.msra.mxu0 0.0
      %2066 = vmatprep.subr.mxu0 0.0
      %2067 = vmatpush1.msra.mxu0 0.0
      %2068 = vmatprep.subr.mxu0 0.0
      %2069 = vmatpush1.msra.mxu0 0.0
      %2070 = vmatprep.subr.mxu0 0.0
      %2071 = vmatpush1.msra.mxu0 0.0
      %2072 = vmatprep.subr.mxu0 0.0
      %2073 = vmatpush1.msra.mxu0 0.0
      %2074 = vmatprep.subr.mxu0 0.0
      %2075 = vmatpush1.msra.mxu0 0.0
      %2076 = vmatprep.subr.mxu0 0.0
      %2077 = vmatpush1.msra.mxu0 0.0
      %2078 = vmatprep.subr.mxu0 0.0
      %2079 = vmatpush1.msra.mxu0 0.0
      %2080 = vmatprep.subr.mxu0 0.0
      %2081 = vmatpush1.msra.mxu0 0.0
      %2082 = vmatprep.subr.mxu0 0.0
      %2083 = vmatpush1.msra.mxu0 0.0
      %2084 = vmatprep.subr.mxu0 0.0
      %2085 = vmatpush1.msra.mxu0 0.0
      %2086 = vmatprep.subr.mxu0 0.0
      %2087 = vmatpush1.msra.mxu0 0.0
      %2088 = vmatprep.subr.mxu0 0.0
      %2089 = vmatpush1.msra.mxu0 0.0
      %2090 = vmatprep.subr.mxu0 0.0
      %2091 = vmatpush1.msra.mxu0 0.0
      %2092 = vmatprep.subr.mxu0 0.0
      %2093 = vmatpush1.msra.mxu0 0.0
      %2094 = vmatprep.mubr.f32.mxu0 0.0
      %2095 = vmatmul.mubr.f32.gmra.mrb[0].mxu0 %v2026
      %v2096 = vpop.f32.mrb[0].mxu0
      %v2097 = vadd.f32 0.0, %v2096
      %v2098 = vpop.f32.mrb[0].mxu0
      %2099 = vmatprep.mubr.f32.mxu0 0.0
      %2100 = vmatmul.mubr.f32.gmra.mrb[0].mxu0 %v2028
      %v2101 = vpop.f32.mrb[0].mxu0
      %v2102 = vadd.f32 0.0, %v2101
      %v2103 = vpop.f32.mrb[0].mxu0
      %2104 = vdwg.mxu0
      %v2106 = vsel %vm897, %v2000, 0
      %v2109 = vsel %vm897, %v2005, 0
      %2111 = vmatprep.subr.mxu0 0.0
      %2112 = vmatpush1.msra.mxu0 %v2008
      %2113 = vmatprep.subr.mxu0 0.0
      %2114 = vmatpush1.msra.mxu0 %v2009
      %2115 = vmatprep.subr.mxu0 0.0
      %2116 = vmatpush1.msra.mxu0 %v2010
      %2117 = vmatprep.subr.mxu0 0.0
      %2118 = vmatpush1.msra.mxu0 %v2011
      %2119 = vmatprep.subr.mxu0 0.0
      %2120 = vmatpush1.msra.mxu0 0.0
      %2121 = vmatprep.subr.mxu0 0.0
      %2122 = vmatpush1.msra.mxu0 0.0
      %2123 = vmatprep.subr.mxu0 0.0
      %2124 = vmatpush1.msra.mxu0 0.0
      %2125 = vmatprep.subr.mxu0 0.0
      %2126 = vmatpush1.msra.mxu0 0.0
      %2127 = vmatprep.subr.mxu0 0.0
      %2128 = vmatpush1.msra.mxu0 0.0
      %2129 = vmatprep.subr.mxu0 0.0
      %2130 = vmatpush1.msra.mxu0 0.0
      %2131 = vmatprep.subr.mxu0 0.0
      %2132 = vmatpush1.msra.mxu0 0.0
      %2133 = vmatprep.subr.mxu0 0.0
      %2134 = vmatpush1.msra.mxu0 0.0
      %2135 = vmatprep.subr.mxu0 0.0
      %2136 = vmatpush1.msra.mxu0 0.0
      %2137 = vmatprep.subr.mxu0 0.0
      %2138 = vmatpush1.msra.mxu0 0.0
      %2139 = vmatprep.subr.mxu0 0.0
      %2140 = vmatpush1.msra.mxu0 0.0
      %2141 = vmatprep.subr.mxu0 0.0
      %2142 = vmatpush1.msra.mxu0 0.0
      %2143 = vmatprep.subr.mxu0 0.0
      %2144 = vmatpush1.msra.mxu0 0.0
      %2145 = vmatprep.subr.mxu0 0.0
      %2146 = vmatpush1.msra.mxu0 0.0
      %2147 = vmatprep.subr.mxu0 0.0
      %2148 = vmatpush1.msra.mxu0 0.0
      %2149 = vmatprep.subr.mxu0 0.0
      %2150 = vmatpush1.msra.mxu0 0.0
      %2151 = vmatprep.subr.mxu0 0.0
      %2152 = vmatpush1.msra.mxu0 0.0
      %2153 = vmatprep.subr.mxu0 0.0
      %2154 = vmatpush1.msra.mxu0 0.0
      %2155 = vmatprep.subr.mxu0 0.0
      %2156 = vmatpush1.msra.mxu0 0.0
      %2157 = vmatprep.subr.mxu0 0.0
      %2158 = vmatpush1.msra.mxu0 0.0
      %2159 = vmatprep.subr.mxu0 0.0
      %2160 = vmatpush1.msra.mxu0 0.0
      %2161 = vmatprep.subr.mxu0 0.0
      %2162 = vmatpush1.msra.mxu0 0.0
      %2163 = vmatprep.subr.mxu0 0.0
      %2164 = vmatpush1.msra.mxu0 0.0
      %2165 = vmatprep.subr.mxu0 0.0
      %2166 = vmatpush1.msra.mxu0 0.0
      %2167 = vmatprep.subr.mxu0 0.0
      %2168 = vmatpush1.msra.mxu0 0.0
      %2169 = vmatprep.subr.mxu0 0.0
      %2170 = vmatpush1.msra.mxu0 0.0
      %2171 = vmatprep.subr.mxu0 0.0
      %2172 = vmatpush1.msra.mxu0 0.0
      %2173 = vmatprep.subr.mxu0 0.0
      %2174 = vmatpush1.msra.mxu0 0.0
      %2175 = vmatprep.mubr.f32.mxu0 0.0
      %2176 = vmatmul.mubr.f32.gmra.mrb[0].mxu0 %v2106
      %v2177 = vpop.f32.mrb[0].mxu0
      %v2178 = vadd.f32 %v2097, %v2177
      %v2179 = vpop.f32.mrb[0].mxu0
      %2180 = vmatprep.mubr.f32.mxu0 0.0
      %2181 = vmatmul.mubr.f32.gmra.mrb[0].mxu0 %v2109
      %v2182 = vpop.f32.mrb[0].mxu0
      %v2183 = vadd.f32 %v2102, %v2182
      %v2184 = vpop.f32.mrb[0].mxu0
      %2185 = vdwg.mxu0
      %v2186 = vld [vmem:[%s7 + $0x2] sm:$0x1]
      %v2187 = vlaneseq
      %v2188 = vshrl.u32 %v2187, 7
      %v2189 = vsub.s32 0, %v2188
      %v2190 = vrot.slane %v2186, %v2189
      %v2191 = vadd.f32 %v2178, %v2190
      %v2192 = vadd.f32 %v2183, %v2190
      %v2193 = vld [vmem:[%s502] sm:$0xff]
      %v2194 = vld [vmem:[%s502 + $0x8] sm:$0xff]
      %v2195 = vld [vmem:[%s502 + $0x10] sm:$0xff]
      %v2196 = vld [vmem:[%s502 + $0x18] sm:$0xff]
      %v2197 = vld [vmem:[%s514] sm:$0x1]
      %v2199 = vlaneseq
      %v2200 = vshrl.u32 %v2199, 7
      %v2201 = vsub.s32 0, %v2200
      %v2202 = vrot.slane %v2197, %v2201
      %v2205 = vsel %vm897, %v2191, 0
      %v2208 = vsel %vm897, %v2192, 0
      %2210 = vmatprep.subr.mxu0 0.0
      %2211 = vmatpush1.msra.mxu0 %v2193
      %2212 = vmatprep.subr.mxu0 0.0
      %2213 = vmatpush1.msra.mxu0 %v2194
      %2214 = vmatprep.subr.mxu0 0.0
      %2215 = vmatpush1.msra.mxu0 %v2195
      %2216 = vmatprep.subr.mxu0 0.0
      %2217 = vmatpush1.msra.mxu0 %v2196
      %2218 = vmatprep.subr.mxu0 0.0
      %2219 = vmatpush1.msra.mxu0 0.0
      %2220 = vmatprep.subr.mxu0 0.0
      %2221 = vmatpush1.msra.mxu0 0.0
      %2222 = vmatprep.subr.mxu0 0.0
      %2223 = vmatpush1.msra.mxu0 0.0
      %2224 = vmatprep.subr.mxu0 0.0
      %2225 = vmatpush1.msra.mxu0 0.0
      %2226 = vmatprep.subr.mxu0 0.0
      %2227 = vmatpush1.msra.mxu0 0.0
      %2228 = vmatprep.subr.mxu0 0.0
      %2229 = vmatpush1.msra.mxu0 0.0
      %2230 = vmatprep.subr.mxu0 0.0
      %2231 = vmatpush1.msra.mxu0 0.0
      %2232 = vmatprep.subr.mxu0 0.0
      %2233 = vmatpush1.msra.mxu0 0.0
      %2234 = vmatprep.subr.mxu0 0.0
      %2235 = vmatpush1.msra.mxu0 0.0
      %2236 = vmatprep.subr.mxu0 0.0
      %2237 = vmatpush1.msra.mxu0 0.0
      %2238 = vmatprep.subr.mxu0 0.0
      %2239 = vmatpush1.msra.mxu0 0.0
      %2240 = vmatprep.subr.mxu0 0.0
      %2241 = vmatpush1.msra.mxu0 0.0
      %2242 = vmatprep.subr.mxu0 0.0
      %2243 = vmatpush1.msra.mxu0 0.0
      %2244 = vmatprep.subr.mxu0 0.0
      %2245 = vmatpush1.msra.mxu0 0.0
      %2246 = vmatprep.subr.mxu0 0.0
      %2247 = vmatpush1.msra.mxu0 0.0
      %2248 = vmatprep.subr.mxu0 0.0
      %2249 = vmatpush1.msra.mxu0 0.0
      %2250 = vmatprep.subr.mxu0 0.0
      %2251 = vmatpush1.msra.mxu0 0.0
      %2252 = vmatprep.subr.mxu0 0.0
      %2253 = vmatpush1.msra.mxu0 0.0
      %2254 = vmatprep.subr.mxu0 0.0
      %2255 = vmatpush1.msra.mxu0 0.0
      %2256 = vmatprep.subr.mxu0 0.0
      %2257 = vmatpush1.msra.mxu0 0.0
      %2258 = vmatprep.subr.mxu0 0.0
      %2259 = vmatpush1.msra.mxu0 0.0
      %2260 = vmatprep.subr.mxu0 0.0
      %2261 = vmatpush1.msra.mxu0 0.0
      %2262 = vmatprep.subr.mxu0 0.0
      %2263 = vmatpush1.msra.mxu0 0.0
      %2264 = vmatprep.subr.mxu0 0.0
      %2265 = vmatpush1.msra.mxu0 0.0
      %2266 = vmatprep.subr.mxu0 0.0
      %2267 = vmatpush1.msra.mxu0 0.0
      %2268 = vmatprep.subr.mxu0 0.0
      %2269 = vmatpush1.msra.mxu0 0.0
      %2270 = vmatprep.subr.mxu0 0.0
      %2271 = vmatpush1.msra.mxu0 0.0
      %2272 = vmatprep.subr.mxu0 0.0
      %2273 = vmatpush1.msra.mxu0 0.0
      %2274 = vmatprep.mubr.f32.mxu0 0.0
      %2275 = vmatmul.mubr.f32.gmra.mrb[0].mxu0 %v2205
      %v2276 = vpop.f32.mrb[0].mxu0
      %v2277 = vadd.f32 %v2202, %v2276
      %v2278 = vpop.f32.mrb[0].mxu0
      %2279 = vmatprep.mubr.f32.mxu0 0.0
      %2280 = vmatmul.mubr.f32.gmra.mrb[0].mxu0 %v2208
      %v2281 = vpop.f32.mrb[0].mxu0
      %v2282 = vadd.f32 %v2202, %v2281
      %v2283 = vpop.f32.mrb[0].mxu0
      %2284 = vdwg.mxu0
      %v2285 = vld [vmem:[%s509] sm:$0xff]
      %v2286 = vld [vmem:[%s509 + $0x8] sm:$0xff]
      %v2287 = vld [vmem:[%s509 + $0x10] sm:$0xff]
      %v2288 = vld [vmem:[%s509 + $0x18] sm:$0xff]
      %v2289 = vld [vmem:[%s521] sm:$0xff]
      %v2290 = vld [vmem:[%s521 + $0x8] sm:$0xff]
      %v2291 = vld [vmem:[%s521 + $0x10] sm:$0xff]
      %v2292 = vld [vmem:[%s521 + $0x18] sm:$0xff]
      %v2294 = vsel %vm897, 0.0, 0
      %2296 = vmatprep.subr.mxu0 0.0
      %2297 = vmatpush1.msra.mxu0 %v2285
      %2298 = vmatprep.subr.mxu0 0.0
      %2299 = vmatpush1.msra.mxu0 %v2286
      %2300 = vmatprep.subr.mxu0 0.0
      %2301 = vmatpush1.msra.mxu0 %v2287
      %2302 = vmatprep.subr.mxu0 0.0
      %2303 = vmatpush1.msra.mxu0 %v2288
      %2304 = vmatprep.subr.mxu0 0.0
      %2305 = vmatpush1.msra.mxu0 0.0
      %2306 = vmatprep.subr.mxu0 0.0
      %2307 = vmatpush1.msra.mxu0 0.0
      %2308 = vmatprep.subr.mxu0 0.0
      %2309 = vmatpush1.msra.mxu0 0.0
      %2310 = vmatprep.subr.mxu0 0.0
      %2311 = vmatpush1.msra.mxu0 0.0
      %2312 = vmatprep.subr.mxu0 0.0
      %2313 = vmatpush1.msra.mxu0 0.0
      %2314 = vmatprep.subr.mxu0 0.0
      %2315 = vmatpush1.msra.mxu0 0.0
      %2316 = vmatprep.subr.mxu0 0.0
      %2317 = vmatpush1.msra.mxu0 0.0
      %2318 = vmatprep.subr.mxu0 0.0
      %2319 = vmatpush1.msra.mxu0 0.0
      %2320 = vmatprep.subr.mxu0 0.0
      %2321 = vmatpush1.msra.mxu0 0.0
      %2322 = vmatprep.subr.mxu0 0.0
      %2323 = vmatpush1.msra.mxu0 0.0
      %2324 = vmatprep.subr.mxu0 0.0
      %2325 = vmatpush1.msra.mxu0 0.0
      %2326 = vmatprep.subr.mxu0 0.0
      %2327 = vmatpush1.msra.mxu0 0.0
      %2328 = vmatprep.subr.mxu0 0.0
      %2329 = vmatpush1.msra.mxu0 0.0
      %2330 = vmatprep.subr.mxu0 0.0
      %2331 = vmatpush1.msra.mxu0 0.0
      %2332 = vmatprep.subr.mxu0 0.0
      %2333 = vmatpush1.msra.mxu0 0.0
      %2334 = vmatprep.subr.mxu0 0.0
      %2335 = vmatpush1.msra.mxu0 0.0
      %2336 = vmatprep.subr.mxu0 0.0
      %2337 = vmatpush1.msra.mxu0 0.0
      %2338 = vmatprep.subr.mxu0 0.0
      %2339 = vmatpush1.msra.mxu0 0.0
      %2340 = vmatprep.subr.mxu0 0.0
      %2341 = vmatpush1.msra.mxu0 0.0
      %2342 = vmatprep.subr.mxu0 0.0
      %2343 = vmatpush1.msra.mxu0 0.0
      %2344 = vmatprep.subr.mxu0 0.0
      %2345 = vmatpush1.msra.mxu0 0.0
      %2346 = vmatprep.subr.mxu0 0.0
      %2347 = vmatpush1.msra.mxu0 0.0
      %2348 = vmatprep.subr.mxu0 0.0
      %2349 = vmatpush1.msra.mxu0 0.0
      %2350 = vmatprep.subr.mxu0 0.0
      %2351 = vmatpush1.msra.mxu0 0.0
      %2352 = vmatprep.subr.mxu0 0.0
      %2353 = vmatpush1.msra.mxu0 0.0
      %2354 = vmatprep.subr.mxu0 0.0
      %2355 = vmatpush1.msra.mxu0 0.0
      %2356 = vmatprep.subr.mxu0 0.0
      %2357 = vmatpush1.msra.mxu0 0.0
      %2358 = vmatprep.subr.mxu0 0.0
      %2359 = vmatpush1.msra.mxu0 0.0
      %2360 = vmatprep.mubr.f32.mxu0 0.0
      %2361 = vmatmul.mubr.f32.gmra.mrb[0].mxu0 %v2294
      %v2362 = vpop.f32.mrb[0].mxu0
      %v2363 = vadd.f32 0.0, %v2362
      %v2364 = vpop.f32.mrb[0].mxu0
      %2365 = vdwg.mxu0
      %v2366 = vadd.f32 %v2277, %v2363
      %v2367 = vxor.u32 %v2366, 2147483648
      %v2368 = vmul.f32 %v2367, 1.442695
      %v2369 = vpow.pop %v2368
      %v2370 = vadd.f32 %v2369, 1.0
      %v2371 = vrcp.pop %v2370
      %v2372 = vmul.f32 1.0, %v2371
      %v2373 = vtanh.pop %v2366
      %v2374 = vmul.f32 %v2372, 0.0
      %2376 = vrot.lane.b32.xlu0 %v2373, 64
      %v2377 = vpop.permute.xlu0 %2376
      %v2379 = vmul.f32 %v2372, %v2377
      %2381 = vrot.lane.b32.xlu0 %v2379, 32
      %v2382 = vpop.permute.xlu0 %2381
      %v2384 = vadd.f32 %v2374, %v2382
      %v2385 = vmax.f32 %v2384, -3.0
      %v2386 = vmin.f32 %v2385, 3.0
      %v2387 = vtanh.pop %v2386
      %2389 = vrot.lane.b32.xlu0 %v2387, 64
      %v2390 = vpop.permute.xlu0 %2389
      %v2392 = vmul.f32 %v2372, %v2390
      %2394 = vrot.lane.b32.xlu0 %v2392, 32
      %v2395 = vpop.permute.xlu0 %2394
      %v2396 = vsel %vm897, %v2395, 0
      %2398 = vmatprep.subr.mxu0 0.0
      %2399 = vmatpush1.msra.mxu0 %v2289
      %2400 = vmatprep.subr.mxu0 0.0
      %2401 = vmatpush1.msra.mxu0 %v2290
      %2402 = vmatprep.subr.mxu0 0.0
      %2403 = vmatpush1.msra.mxu0 %v2291
      %2404 = vmatprep.subr.mxu0 0.0
      %2405 = vmatpush1.msra.mxu0 %v2292
      %2406 = vmatprep.subr.mxu0 0.0
      %2407 = vmatpush1.msra.mxu0 0.0
      %2408 = vmatprep.subr.mxu0 0.0
      %2409 = vmatpush1.msra.mxu0 0.0
      %2410 = vmatprep.subr.mxu0 0.0
      %2411 = vmatpush1.msra.mxu0 0.0
      %2412 = vmatprep.subr.mxu0 0.0
      %2413 = vmatpush1.msra.mxu0 0.0
      %2414 = vmatprep.subr.mxu0 0.0
      %2415 = vmatpush1.msra.mxu0 0.0
      %2416 = vmatprep.subr.mxu0 0.0
      %2417 = vmatpush1.msra.mxu0 0.0
      %2418 = vmatprep.subr.mxu0 0.0
      %2419 = vmatpush1.msra.mxu0 0.0
      %2420 = vmatprep.subr.mxu0 0.0
      %2421 = vmatpush1.msra.mxu0 0.0
      %2422 = vmatprep.subr.mxu0 0.0
      %2423 = vmatpush1.msra.mxu0 0.0
      %2424 = vmatprep.subr.mxu0 0.0
      %2425 = vmatpush1.msra.mxu0 0.0
      %2426 = vmatprep.subr.mxu0 0.0
      %2427 = vmatpush1.msra.mxu0 0.0
      %2428 = vmatprep.subr.mxu0 0.0
      %2429 = vmatpush1.msra.mxu0 0.0
      %2430 = vmatprep.subr.mxu0 0.0
      %2431 = vmatpush1.msra.mxu0 0.0
      %2432 = vmatprep.subr.mxu0 0.0
      %2433 = vmatpush1.msra.mxu0 0.0
      %2434 = vmatprep.subr.mxu0 0.0
      %2435 = vmatpush1.msra.mxu0 0.0
      %2436 = vmatprep.subr.mxu0 0.0
      %2437 = vmatpush1.msra.mxu0 0.0
      %2438 = vmatprep.subr.mxu0 0.0
      %2439 = vmatpush1.msra.mxu0 0.0
      %2440 = vmatprep.subr.mxu0 0.0
      %2441 = vmatpush1.msra.mxu0 0.0
      %2442 = vmatprep.subr.mxu0 0.0
      %2443 = vmatpush1.msra.mxu0 0.0
      %2444 = vmatprep.subr.mxu0 0.0
      %2445 = vmatpush1.msra.mxu0 0.0
      %2446 = vmatprep.subr.mxu0 0.0
      %2447 = vmatpush1.msra.mxu0 0.0
      %2448 = vmatprep.subr.mxu0 0.0
      %2449 = vmatpush1.msra.mxu0 0.0
      %2450 = vmatprep.subr.mxu0 0.0
      %2451 = vmatpush1.msra.mxu0 0.0
      %2452 = vmatprep.subr.mxu0 0.0
      %2453 = vmatpush1.msra.mxu0 0.0
      %2454 = vmatprep.subr.mxu0 0.0
      %2455 = vmatpush1.msra.mxu0 0.0
      %2456 = vmatprep.subr.mxu0 0.0
      %2457 = vmatpush1.msra.mxu0 0.0
      %2458 = vmatprep.subr.mxu0 0.0
      %2459 = vmatpush1.msra.mxu0 0.0
      %2460 = vmatprep.subr.mxu0 0.0
      %2461 = vmatpush1.msra.mxu0 0.0
      %2462 = vmatprep.mubr.f32.mxu0 0.0
      %2463 = vmatmul.mubr.f32.gmra.mrb[0].mxu0 %v2396
      %v2464 = vpop.f32.mrb[0].mxu0
      %v2465 = vadd.f32 0.0, %v2464
      %v2466 = vpop.f32.mrb[0].mxu0
      %2467 = vdwg.mxu0
      %v2468 = vmax.f32 %v2465, -3.0
      %v2469 = vmin.f32 %v2468, 3.0
      %v2471 = vsel %vm897, %v2469, 0
      %2473 = vmatprep.subr.mxu0 0.0
      %2474 = vmatpush1.msra.mxu0 %v2285
      %2475 = vmatprep.subr.mxu0 0.0
      %2476 = vmatpush1.msra.mxu0 %v2286
      %2477 = vmatprep.subr.mxu0 0.0
      %2478 = vmatpush1.msra.mxu0 %v2287
      %2479 = vmatprep.subr.mxu0 0.0
      %2480 = vmatpush1.msra.mxu0 %v2288
      %2481 = vmatprep.subr.mxu0 0.0
      %2482 = vmatpush1.msra.mxu0 0.0
      %2483 = vmatprep.subr.mxu0 0.0
      %2484 = vmatpush1.msra.mxu0 0.0
      %2485 = vmatprep.subr.mxu0 0.0
      %2486 = vmatpush1.msra.mxu0 0.0
      %2487 = vmatprep.subr.mxu0 0.0
      %2488 = vmatpush1.msra.mxu0 0.0
      %2489 = vmatprep.subr.mxu0 0.0
      %2490 = vmatpush1.msra.mxu0 0.0
      %2491 = vmatprep.subr.mxu0 0.0
      %2492 = vmatpush1.msra.mxu0 0.0
      %2493 = vmatprep.subr.mxu0 0.0
      %2494 = vmatpush1.msra.mxu0 0.0
      %2495 = vmatprep.subr.mxu0 0.0
      %2496 = vmatpush1.msra.mxu0 0.0
      %2497 = vmatprep.subr.mxu0 0.0
      %2498 = vmatpush1.msra.mxu0 0.0
      %2499 = vmatprep.subr.mxu0 0.0
      %2500 = vmatpush1.msra.mxu0 0.0
      %2501 = vmatprep.subr.mxu0 0.0
      %2502 = vmatpush1.msra.mxu0 0.0
      %2503 = vmatprep.subr.mxu0 0.0
      %2504 = vmatpush1.msra.mxu0 0.0
      %2505 = vmatprep.subr.mxu0 0.0
      %2506 = vmatpush1.msra.mxu0 0.0
      %2507 = vmatprep.subr.mxu0 0.0
      %2508 = vmatpush1.msra.mxu0 0.0
      %2509 = vmatprep.subr.mxu0 0.0
      %2510 = vmatpush1.msra.mxu0 0.0
      %2511 = vmatprep.subr.mxu0 0.0
      %2512 = vmatpush1.msra.mxu0 0.0
      %2513 = vmatprep.subr.mxu0 0.0
      %2514 = vmatpush1.msra.mxu0 0.0
      %2515 = vmatprep.subr.mxu0 0.0
      %2516 = vmatpush1.msra.mxu0 0.0
      %2517 = vmatprep.subr.mxu0 0.0
      %2518 = vmatpush1.msra.mxu0 0.0
      %2519 = vmatprep.subr.mxu0 0.0
      %2520 = vmatpush1.msra.mxu0 0.0
      %2521 = vmatprep.subr.mxu0 0.0
      %2522 = vmatpush1.msra.mxu0 0.0
      %2523 = vmatprep.subr.mxu0 0.0
      %2524 = vmatpush1.msra.mxu0 0.0
      %2525 = vmatprep.subr.mxu0 0.0
      %2526 = vmatpush1.msra.mxu0 0.0
      %2527 = vmatprep.subr.mxu0 0.0
      %2528 = vmatpush1.msra.mxu0 0.0
      %2529 = vmatprep.subr.mxu0 0.0
      %2530 = vmatpush1.msra.mxu0 0.0
      %2531 = vmatprep.subr.mxu0 0.0
      %2532 = vmatpush1.msra.mxu0 0.0
      %2533 = vmatprep.subr.mxu0 0.0
      %2534 = vmatpush1.msra.mxu0 0.0
      %2535 = vmatprep.subr.mxu0 0.0
      %2536 = vmatpush1.msra.mxu0 0.0
      %2537 = vmatprep.mubr.f32.mxu0 0.0
      %2538 = vmatmul.mubr.f32.gmra.mrb[0].mxu0 %v2471
      %v2539 = vpop.f32.mrb[0].mxu0
      %v2540 = vadd.f32 0.0, %v2539
      %v2541 = vpop.f32.mrb[0].mxu0
      %2542 = vdwg.mxu0
      %v2544 = vrot.slane %v2540, 6
      %v2546 = vadd.f32 %v2277, %v2544
      %v2547 = vxor.u32 %v2546, 2147483648
      %v2548 = vmul.f32 %v2547, 1.442695
      %v2549 = vpow.pop %v2548
      %v2550 = vadd.f32 %v2549, 1.0
      %v2551 = vrcp.pop %v2550
      %v2552 = vmul.f32 1.0, %v2551
      %v2553 = vtanh.pop %v2546
      %v2555 = vrot.slane %v2386, 6
      %v2557 = vmul.f32 %v2552, %v2555
      %2559 = vrot.lane.b32.xlu0 %v2553, 64
      %v2560 = vpop.permute.xlu0 %2559
      %v2562 = vmul.f32 %v2552, %v2560
      %2564 = vrot.lane.b32.xlu0 %v2562, 32
      %v2565 = vpop.permute.xlu0 %2564
      %v2567 = vadd.f32 %v2557, %v2565
      %v2568 = vmax.f32 %v2567, -3.0
      %v2569 = vmin.f32 %v2568, 3.0
      %v2570 = vtanh.pop %v2569
      %2572 = vrot.lane.b32.xlu0 %v2570, 64
      %v2573 = vpop.permute.xlu0 %2572
      %v2575 = vmul.f32 %v2552, %v2573
      %v2577 = vrot.slane %v2575, 2
      %2578 = vrot.lane.b32.xlu0 %v2577, 32
      %v2579 = vpop.permute.xlu0 %2578
      %v2580 = vsel %vm897, %v2579, 0
      %2582 = vmatprep.subr.mxu0 0.0
      %2583 = vmatpush1.msra.mxu0 %v2289
      %2584 = vmatprep.subr.mxu0 0.0
      %2585 = vmatpush1.msra.mxu0 %v2290
      %2586 = vmatprep.subr.mxu0 0.0
      %2587 = vmatpush1.msra.mxu0 %v2291
      %2588 = vmatprep.subr.mxu0 0.0
      %2589 = vmatpush1.msra.mxu0 %v2292
      %2590 = vmatprep.subr.mxu0 0.0
      %2591 = vmatpush1.msra.mxu0 0.0
      %2592 = vmatprep.subr.mxu0 0.0
      %2593 = vmatpush1.msra.mxu0 0.0
      %2594 = vmatprep.subr.mxu0 0.0
      %2595 = vmatpush1.msra.mxu0 0.0
      %2596 = vmatprep.subr.mxu0 0.0
      %2597 = vmatpush1.msra.mxu0 0.0
      %2598 = vmatprep.subr.mxu0 0.0
      %2599 = vmatpush1.msra.mxu0 0.0
      %2600 = vmatprep.subr.mxu0 0.0
      %2601 = vmatpush1.msra.mxu0 0.0
      %2602 = vmatprep.subr.mxu0 0.0
      %2603 = vmatpush1.msra.mxu0 0.0
      %2604 = vmatprep.subr.mxu0 0.0
      %2605 = vmatpush1.msra.mxu0 0.0
      %2606 = vmatprep.subr.mxu0 0.0
      %2607 = vmatpush1.msra.mxu0 0.0
      %2608 = vmatprep.subr.mxu0 0.0
      %2609 = vmatpush1.msra.mxu0 0.0
      %2610 = vmatprep.subr.mxu0 0.0
      %2611 = vmatpush1.msra.mxu0 0.0
      %2612 = vmatprep.subr.mxu0 0.0
      %2613 = vmatpush1.msra.mxu0 0.0
      %2614 = vmatprep.subr.mxu0 0.0
      %2615 = vmatpush1.msra.mxu0 0.0
      %2616 = vmatprep.subr.mxu0 0.0
      %2617 = vmatpush1.msra.mxu0 0.0
      %2618 = vmatprep.subr.mxu0 0.0
      %2619 = vmatpush1.msra.mxu0 0.0
      %2620 = vmatprep.subr.mxu0 0.0
      %2621 = vmatpush1.msra.mxu0 0.0
      %2622 = vmatprep.subr.mxu0 0.0
      %2623 = vmatpush1.msra.mxu0 0.0
      %2624 = vmatprep.subr.mxu0 0.0
      %2625 = vmatpush1.msra.mxu0 0.0
      %2626 = vmatprep.subr.mxu0 0.0
      %2627 = vmatpush1.msra.mxu0 0.0
      %2628 = vmatprep.subr.mxu0 0.0
      %2629 = vmatpush1.msra.mxu0 0.0
      %2630 = vmatprep.subr.mxu0 0.0
      %2631 = vmatpush1.msra.mxu0 0.0
      %2632 = vmatprep.subr.mxu0 0.0
      %2633 = vmatpush1.msra.mxu0 0.0
      %2634 = vmatprep.subr.mxu0 0.0
      %2635 = vmatpush1.msra.mxu0 0.0
      %2636 = vmatprep.subr.mxu0 0.0
      %2637 = vmatpush1.msra.mxu0 0.0
      %2638 = vmatprep.subr.mxu0 0.0
      %2639 = vmatpush1.msra.mxu0 0.0
      %2640 = vmatprep.subr.mxu0 0.0
      %2641 = vmatpush1.msra.mxu0 0.0
      %2642 = vmatprep.subr.mxu0 0.0
      %2643 = vmatpush1.msra.mxu0 0.0
      %2644 = vmatprep.subr.mxu0 0.0
      %2645 = vmatpush1.msra.mxu0 0.0
      %2646 = vmatprep.mubr.f32.mxu0 0.0
      %2647 = vmatmul.mubr.f32.gmra.mrb[0].mxu0 %v2580
      %v2648 = vpop.f32.mrb[0].mxu0
      %v2649 = vadd.f32 0.0, %v2648
      %v2650 = vpop.f32.mrb[0].mxu0
      %2651 = vdwg.mxu0
      %v2652 = vmax.f32 %v2649, -3.0
      %v2653 = vmin.f32 %v2652, 3.0
      %v2655 = vsel %vm897, %v2653, 0
      %2657 = vmatprep.subr.mxu0 0.0
      %2658 = vmatpush1.msra.mxu0 %v2285
      %2659 = vmatprep.subr.mxu0 0.0
      %2660 = vmatpush1.msra.mxu0 %v2286
      %2661 = vmatprep.subr.mxu0 0.0
      %2662 = vmatpush1.msra.mxu0 %v2287
      %2663 = vmatprep.subr.mxu0 0.0
      %2664 = vmatpush1.msra.mxu0 %v2288
      %2665 = vmatprep.subr.mxu0 0.0
      %2666 = vmatpush1.msra.mxu0 0.0
      %2667 = vmatprep.subr.mxu0 0.0
      %2668 = vmatpush1.msra.mxu0 0.0
      %2669 = vmatprep.subr.mxu0 0.0
      %2670 = vmatpush1.msra.mxu0 0.0
      %2671 = vmatprep.subr.mxu0 0.0
      %2672 = vmatpush1.msra.mxu0 0.0
      %2673 = vmatprep.subr.mxu0 0.0
      %2674 = vmatpush1.msra.mxu0 0.0
      %2675 = vmatprep.subr.mxu0 0.0
      %2676 = vmatpush1.msra.mxu0 0.0
      %2677 = vmatprep.subr.mxu0 0.0
      %2678 = vmatpush1.msra.mxu0 0.0
      %2679 = vmatprep.subr.mxu0 0.0
      %2680 = vmatpush1.msra.mxu0 0.0
      %2681 = vmatprep.subr.mxu0 0.0
      %2682 = vmatpush1.msra.mxu0 0.0
      %2683 = vmatprep.subr.mxu0 0.0
      %2684 = vmatpush1.msra.mxu0 0.0
      %2685 = vmatprep.subr.mxu0 0.0
      %2686 = vmatpush1.msra.mxu0 0.0
      %2687 = vmatprep.subr.mxu0 0.0
      %2688 = vmatpush1.msra.mxu0 0.0
      %2689 = vmatprep.subr.mxu0 0.0
      %2690 = vmatpush1.msra.mxu0 0.0
      %2691 = vmatprep.subr.mxu0 0.0
      %2692 = vmatpush1.msra.mxu0 0.0
      %2693 = vmatprep.subr.mxu0 0.0
      %2694 = vmatpush1.msra.mxu0 0.0
      %2695 = vmatprep.subr.mxu0 0.0
      %2696 = vmatpush1.msra.mxu0 0.0
      %2697 = vmatprep.subr.mxu0 0.0
      %2698 = vmatpush1.msra.mxu0 0.0
      %2699 = vmatprep.subr.mxu0 0.0
      %2700 = vmatpush1.msra.mxu0 0.0
      %2701 = vmatprep.subr.mxu0 0.0
      %2702 = vmatpush1.msra.mxu0 0.0
      %2703 = vmatprep.subr.mxu0 0.0
      %2704 = vmatpush1.msra.mxu0 0.0
      %2705 = vmatprep.subr.mxu0 0.0
      %2706 = vmatpush1.msra.mxu0 0.0
      %2707 = vmatprep.subr.mxu0 0.0
      %2708 = vmatpush1.msra.mxu0 0.0
      %2709 = vmatprep.subr.mxu0 0.0
      %2710 = vmatpush1.msra.mxu0 0.0
      %2711 = vmatprep.subr.mxu0 0.0
      %2712 = vmatpush1.msra.mxu0 0.0
      %2713 = vmatprep.subr.mxu0 0.0
      %2714 = vmatpush1.msra.mxu0 0.0
      %2715 = vmatprep.subr.mxu0 0.0
      %2716 = vmatpush1.msra.mxu0 0.0
      %2717 = vmatprep.subr.mxu0 0.0
      %2718 = vmatpush1.msra.mxu0 0.0
      %2719 = vmatprep.subr.mxu0 0.0
      %2720 = vmatpush1.msra.mxu0 0.0
      %2721 = vmatprep.mubr.f32.mxu0 0.0
      %2722 = vmatmul.mubr.f32.gmra.mrb[0].mxu0 %v2655
      %v2723 = vpop.f32.mrb[0].mxu0
      %v2724 = vadd.f32 0.0, %v2723
      %v2725 = vpop.f32.mrb[0].mxu0
      %2726 = vdwg.mxu0
      %v2728 = vrot.slane %v2724, 4
      %v2730 = vadd.f32 %v2277, %v2728
      %v2731 = vxor.u32 %v2730, 2147483648
      %v2732 = vmul.f32 %v2731, 1.442695
      %v2733 = vpow.pop %v2732
      %v2734 = vadd.f32 %v2733, 1.0
      %v2735 = vrcp.pop %v2734
      %v2736 = vmul.f32 1.0, %v2735
      %v2737 = vtanh.pop %v2730
      %v2739 = vrot.slane %v2569, 6
      %v2741 = vmul.f32 %v2736, %v2739
      %2743 = vrot.lane.b32.xlu0 %v2737, 64
      %v2744 = vpop.permute.xlu0 %2743
      %v2746 = vmul.f32 %v2736, %v2744
      %2748 = vrot.lane.b32.xlu0 %v2746, 32
      %v2749 = vpop.permute.xlu0 %2748
      %v2751 = vadd.f32 %v2741, %v2749
      %v2752 = vmax.f32 %v2751, -3.0
      %v2753 = vmin.f32 %v2752, 3.0
      %v2754 = vtanh.pop %v2753
      %2756 = vrot.lane.b32.xlu0 %v2754, 64
      %v2757 = vpop.permute.xlu0 %2756
      %v2759 = vmul.f32 %v2736, %v2757
      %v2761 = vrot.slane %v2759, 4
      %2762 = vrot.lane.b32.xlu0 %v2761, 32
      %v2763 = vpop.permute.xlu0 %2762
      %v2764 = vsel %vm897, %v2763, 0
      %2766 = vmatprep.subr.mxu0 0.0
      %2767 = vmatpush1.msra.mxu0 %v2289
      %2768 = vmatprep.subr.mxu0 0.0
      %2769 = vmatpush1.msra.mxu0 %v2290
      %2770 = vmatprep.subr.mxu0 0.0
      %2771 = vmatpush1.msra.mxu0 %v2291
      %2772 = vmatprep.subr.mxu0 0.0
      %2773 = vmatpush1.msra.mxu0 %v2292
      %2774 = vmatprep.subr.mxu0 0.0
      %2775 = vmatpush1.msra.mxu0 0.0
      %2776 = vmatprep.subr.mxu0 0.0
      %2777 = vmatpush1.msra.mxu0 0.0
      %2778 = vmatprep.subr.mxu0 0.0
      %2779 = vmatpush1.msra.mxu0 0.0
      %2780 = vmatprep.subr.mxu0 0.0
      %2781 = vmatpush1.msra.mxu0 0.0
      %2782 = vmatprep.subr.mxu0 0.0
      %2783 = vmatpush1.msra.mxu0 0.0
      %2784 = vmatprep.subr.mxu0 0.0
      %2785 = vmatpush1.msra.mxu0 0.0
      %2786 = vmatprep.subr.mxu0 0.0
      %2787 = vmatpush1.msra.mxu0 0.0
      %2788 = vmatprep.subr.mxu0 0.0
      %2789 = vmatpush1.msra.mxu0 0.0
      %2790 = vmatprep.subr.mxu0 0.0
      %2791 = vmatpush1.msra.mxu0 0.0
      %2792 = vmatprep.subr.mxu0 0.0
      %2793 = vmatpush1.msra.mxu0 0.0
      %2794 = vmatprep.subr.mxu0 0.0
      %2795 = vmatpush1.msra.mxu0 0.0
      %2796 = vmatprep.subr.mxu0 0.0
      %2797 = vmatpush1.msra.mxu0 0.0
      %2798 = vmatprep.subr.mxu0 0.0
      %2799 = vmatpush1.msra.mxu0 0.0
      %2800 = vmatprep.subr.mxu0 0.0
      %2801 = vmatpush1.msra.mxu0 0.0
      %2802 = vmatprep.subr.mxu0 0.0
      %2803 = vmatpush1.msra.mxu0 0.0
      %2804 = vmatprep.subr.mxu0 0.0
      %2805 = vmatpush1.msra.mxu0 0.0
      %2806 = vmatprep.subr.mxu0 0.0
      %2807 = vmatpush1.msra.mxu0 0.0
      %2808 = vmatprep.subr.mxu0 0.0
      %2809 = vmatpush1.msra.mxu0 0.0
      %2810 = vmatprep.subr.mxu0 0.0
      %2811 = vmatpush1.msra.mxu0 0.0
      %2812 = vmatprep.subr.mxu0 0.0
      %2813 = vmatpush1.msra.mxu0 0.0
      %2814 = vmatprep.subr.mxu0 0.0
      %2815 = vmatpush1.msra.mxu0 0.0
      %2816 = vmatprep.subr.mxu0 0.0
      %2817 = vmatpush1.msra.mxu0 0.0
      %2818 = vmatprep.subr.mxu0 0.0
      %2819 = vmatpush1.msra.mxu0 0.0
      %2820 = vmatprep.subr.mxu0 0.0
      %2821 = vmatpush1.msra.mxu0 0.0
      %2822 = vmatprep.subr.mxu0 0.0
      %2823 = vmatpush1.msra.mxu0 0.0
      %2824 = vmatprep.subr.mxu0 0.0
      %2825 = vmatpush1.msra.mxu0 0.0
      %2826 = vmatprep.subr.mxu0 0.0
      %2827 = vmatpush1.msra.mxu0 0.0
      %2828 = vmatprep.subr.mxu0 0.0
      %2829 = vmatpush1.msra.mxu0 0.0
      %2830 = vmatprep.mubr.f32.mxu0 0.0
      %2831 = vmatmul.mubr.f32.gmra.mrb[0].mxu0 %v2764
      %v2832 = vpop.f32.mrb[0].mxu0
      %v2833 = vadd.f32 0.0, %v2832
      %v2834 = vpop.f32.mrb[0].mxu0
      %2835 = vdwg.mxu0
      %v2836 = vmax.f32 %v2833, -3.0
      %v2837 = vmin.f32 %v2836, 3.0
      %v2839 = vsel %vm897, %v2837, 0
      %2841 = vmatprep.subr.mxu0 0.0
      %2842 = vmatpush1.msra.mxu0 %v2285
      %2843 = vmatprep.subr.mxu0 0.0
      %2844 = vmatpush1.msra.mxu0 %v2286
      %2845 = vmatprep.subr.mxu0 0.0
      %2846 = vmatpush1.msra.mxu0 %v2287
      %2847 = vmatprep.subr.mxu0 0.0
      %2848 = vmatpush1.msra.mxu0 %v2288
      %2849 = vmatprep.subr.mxu0 0.0
      %2850 = vmatpush1.msra.mxu0 0.0
      %2851 = vmatprep.subr.mxu0 0.0
      %2852 = vmatpush1.msra.mxu0 0.0
      %2853 = vmatprep.subr.mxu0 0.0
      %2854 = vmatpush1.msra.mxu0 0.0
      %2855 = vmatprep.subr.mxu0 0.0
      %2856 = vmatpush1.msra.mxu0 0.0
      %2857 = vmatprep.subr.mxu0 0.0
      %2858 = vmatpush1.msra.mxu0 0.0
      %2859 = vmatprep.subr.mxu0 0.0
      %2860 = vmatpush1.msra.mxu0 0.0
      %2861 = vmatprep.subr.mxu0 0.0
      %2862 = vmatpush1.msra.mxu0 0.0
      %2863 = vmatprep.subr.mxu0 0.0
      %2864 = vmatpush1.msra.mxu0 0.0
      %2865 = vmatprep.subr.mxu0 0.0
      %2866 = vmatpush1.msra.mxu0 0.0
      %2867 = vmatprep.subr.mxu0 0.0
      %2868 = vmatpush1.msra.mxu0 0.0
      %2869 = vmatprep.subr.mxu0 0.0
      %2870 = vmatpush1.msra.mxu0 0.0
      %2871 = vmatprep.subr.mxu0 0.0
      %2872 = vmatpush1.msra.mxu0 0.0
      %2873 = vmatprep.subr.mxu0 0.0
      %2874 = vmatpush1.msra.mxu0 0.0
      %2875 = vmatprep.subr.mxu0 0.0
      %2876 = vmatpush1.msra.mxu0 0.0
      %2877 = vmatprep.subr.mxu0 0.0
      %2878 = vmatpush1.msra.mxu0 0.0
      %2879 = vmatprep.subr.mxu0 0.0
      %2880 = vmatpush1.msra.mxu0 0.0
      %2881 = vmatprep.subr.mxu0 0.0
      %2882 = vmatpush1.msra.mxu0 0.0
      %2883 = vmatprep.subr.mxu0 0.0
      %2884 = vmatpush1.msra.mxu0 0.0
      %2885 = vmatprep.subr.mxu0 0.0
      %2886 = vmatpush1.msra.mxu0 0.0
      %2887 = vmatprep.subr.mxu0 0.0
      %2888 = vmatpush1.msra.mxu0 0.0
      %2889 = vmatprep.subr.mxu0 0.0
      %2890 = vmatpush1.msra.mxu0 0.0
      %2891 = vmatprep.subr.mxu0 0.0
      %2892 = vmatpush1.msra.mxu0 0.0
      %2893 = vmatprep.subr.mxu0 0.0
      %2894 = vmatpush1.msra.mxu0 0.0
      %2895 = vmatprep.subr.mxu0 0.0
      %2896 = vmatpush1.msra.mxu0 0.0
      %2897 = vmatprep.subr.mxu0 0.0
      %2898 = vmatpush1.msra.mxu0 0.0
      %2899 = vmatprep.subr.mxu0 0.0
      %2900 = vmatpush1.msra.mxu0 0.0
      %2901 = vmatprep.subr.mxu0 0.0
      %2902 = vmatpush1.msra.mxu0 0.0
      %2903 = vmatprep.subr.mxu0 0.0
      %2904 = vmatpush1.msra.mxu0 0.0
      %2905 = vmatprep.mubr.f32.mxu0 0.0
      %2906 = vmatmul.mubr.f32.gmra.mrb[0].mxu0 %v2839
      %v2907 = vpop.f32.mrb[0].mxu0
      %v2908 = vadd.f32 0.0, %v2907
      %v2909 = vpop.f32.mrb[0].mxu0
      %2910 = vdwg.mxu0
      %v2912 = vrot.slane %v2908, 2
      %v2914 = vadd.f32 %v2277, %v2912
      %v2915 = vxor.u32 %v2914, 2147483648
      %v2916 = vmul.f32 %v2915, 1.442695
      %v2917 = vpow.pop %v2916
      %v2918 = vadd.f32 %v2917, 1.0
      %v2919 = vrcp.pop %v2918
      %v2920 = vmul.f32 1.0, %v2919
      %v2921 = vtanh.pop %v2914
      %v2923 = vrot.slane %v2753, 6
      %v2925 = vmul.f32 %v2920, %v2923
      %2927 = vrot.lane.b32.xlu0 %v2921, 64
      %v2928 = vpop.permute.xlu0 %2927
      %v2930 = vmul.f32 %v2920, %v2928
      %2932 = vrot.lane.b32.xlu0 %v2930, 32
      %v2933 = vpop.permute.xlu0 %2932
      %v2935 = vadd.f32 %v2925, %v2933
      %v2936 = vmax.f32 %v2935, -3.0
      %v2937 = vmin.f32 %v2936, 3.0
      %v2938 = vtanh.pop %v2937
      %2940 = vrot.lane.b32.xlu0 %v2938, 64
      %v2941 = vpop.permute.xlu0 %2940
      %v2943 = vmul.f32 %v2920, %v2941
      %v2945 = vrot.slane %v2943, 6
      %2946 = vrot.lane.b32.xlu0 %v2945, 32
      %v2947 = vpop.permute.xlu0 %2946
      %v2948 = vsel %vm897, %v2947, 0
      %2950 = vmatprep.subr.mxu0 0.0
      %2951 = vmatpush1.msra.mxu0 %v2289
      %2952 = vmatprep.subr.mxu0 0.0
      %2953 = vmatpush1.msra.mxu0 %v2290
      %2954 = vmatprep.subr.mxu0 0.0
      %2955 = vmatpush1.msra.mxu0 %v2291
      %2956 = vmatprep.subr.mxu0 0.0
      %2957 = vmatpush1.msra.mxu0 %v2292
      %2958 = vmatprep.subr.mxu0 0.0
      %2959 = vmatpush1.msra.mxu0 0.0
      %2960 = vmatprep.subr.mxu0 0.0
      %2961 = vmatpush1.msra.mxu0 0.0
      %2962 = vmatprep.subr.mxu0 0.0
      %2963 = vmatpush1.msra.mxu0 0.0
      %2964 = vmatprep.subr.mxu0 0.0
      %2965 = vmatpush1.msra.mxu0 0.0
      %2966 = vmatprep.subr.mxu0 0.0
      %2967 = vmatpush1.msra.mxu0 0.0
      %2968 = vmatprep.subr.mxu0 0.0
      %2969 = vmatpush1.msra.mxu0 0.0
      %2970 = vmatprep.subr.mxu0 0.0
      %2971 = vmatpush1.msra.mxu0 0.0
      %2972 = vmatprep.subr.mxu0 0.0
      %2973 = vmatpush1.msra.mxu0 0.0
      %2974 = vmatprep.subr.mxu0 0.0
      %2975 = vmatpush1.msra.mxu0 0.0
      %2976 = vmatprep.subr.mxu0 0.0
      %2977 = vmatpush1.msra.mxu0 0.0
      %2978 = vmatprep.subr.mxu0 0.0
      %2979 = vmatpush1.msra.mxu0 0.0
      %2980 = vmatprep.subr.mxu0 0.0
      %2981 = vmatpush1.msra.mxu0 0.0
      %2982 = vmatprep.subr.mxu0 0.0
      %2983 = vmatpush1.msra.mxu0 0.0
      %2984 = vmatprep.subr.mxu0 0.0
      %2985 = vmatpush1.msra.mxu0 0.0
      %2986 = vmatprep.subr.mxu0 0.0
      %2987 = vmatpush1.msra.mxu0 0.0
      %2988 = vmatprep.subr.mxu0 0.0
      %2989 = vmatpush1.msra.mxu0 0.0
      %2990 = vmatprep.subr.mxu0 0.0
      %2991 = vmatpush1.msra.mxu0 0.0
      %2992 = vmatprep.subr.mxu0 0.0
      %2993 = vmatpush1.msra.mxu0 0.0
      %2994 = vmatprep.subr.mxu0 0.0
      %2995 = vmatpush1.msra.mxu0 0.0
      %2996 = vmatprep.subr.mxu0 0.0
      %2997 = vmatpush1.msra.mxu0 0.0
      %2998 = vmatprep.subr.mxu0 0.0
      %2999 = vmatpush1.msra.mxu0 0.0
      %3000 = vmatprep.subr.mxu0 0.0
      %3001 = vmatpush1.msra.mxu0 0.0
      %3002 = vmatprep.subr.mxu0 0.0
      %3003 = vmatpush1.msra.mxu0 0.0
      %3004 = vmatprep.subr.mxu0 0.0
      %3005 = vmatpush1.msra.mxu0 0.0
      %3006 = vmatprep.subr.mxu0 0.0
      %3007 = vmatpush1.msra.mxu0 0.0
      %3008 = vmatprep.subr.mxu0 0.0
      %3009 = vmatpush1.msra.mxu0 0.0
      %3010 = vmatprep.subr.mxu0 0.0
      %3011 = vmatpush1.msra.mxu0 0.0
      %3012 = vmatprep.subr.mxu0 0.0
      %3013 = vmatpush1.msra.mxu0 0.0
      %3014 = vmatprep.mubr.f32.mxu0 0.0
      %3015 = vmatmul.mubr.f32.gmra.mrb[0].mxu0 %v2948
      %v3016 = vpop.f32.mrb[0].mxu0
      %v3017 = vadd.f32 0.0, %v3016
      %v3018 = vpop.f32.mrb[0].mxu0
      %3019 = vdwg.mxu0
      %v3020 = vmax.f32 %v3017, -3.0
      %v3021 = vmin.f32 %v3020, 3.0
      %v3023 = vsel %vm897, %v3021, 0
      %3025 = vmatprep.subr.mxu0 0.0
      %3026 = vmatpush1.msra.mxu0 %v2285
      %3027 = vmatprep.subr.mxu0 0.0
      %3028 = vmatpush1.msra.mxu0 %v2286
      %3029 = vmatprep.subr.mxu0 0.0
      %3030 = vmatpush1.msra.mxu0 %v2287
      %3031 = vmatprep.subr.mxu0 0.0
      %3032 = vmatpush1.msra.mxu0 %v2288
      %3033 = vmatprep.subr.mxu0 0.0
      %3034 = vmatpush1.msra.mxu0 0.0
      %3035 = vmatprep.subr.mxu0 0.0
      %3036 = vmatpush1.msra.mxu0 0.0
      %3037 = vmatprep.subr.mxu0 0.0
      %3038 = vmatpush1.msra.mxu0 0.0
      %3039 = vmatprep.subr.mxu0 0.0
      %3040 = vmatpush1.msra.mxu0 0.0
      %3041 = vmatprep.subr.mxu0 0.0
      %3042 = vmatpush1.msra.mxu0 0.0
      %3043 = vmatprep.subr.mxu0 0.0
      %3044 = vmatpush1.msra.mxu0 0.0
      %3045 = vmatprep.subr.mxu0 0.0
      %3046 = vmatpush1.msra.mxu0 0.0
      %3047 = vmatprep.subr.mxu0 0.0
      %3048 = vmatpush1.msra.mxu0 0.0
      %3049 = vmatprep.subr.mxu0 0.0
      %3050 = vmatpush1.msra.mxu0 0.0
      %3051 = vmatprep.subr.mxu0 0.0
      %3052 = vmatpush1.msra.mxu0 0.0
      %3053 = vmatprep.subr.mxu0 0.0
      %3054 = vmatpush1.msra.mxu0 0.0
      %3055 = vmatprep.subr.mxu0 0.0
      %3056 = vmatpush1.msra.mxu0 0.0
      %3057 = vmatprep.subr.mxu0 0.0
      %3058 = vmatpush1.msra.mxu0 0.0
      %3059 = vmatprep.subr.mxu0 0.0
      %3060 = vmatpush1.msra.mxu0 0.0
      %3061 = vmatprep.subr.mxu0 0.0
      %3062 = vmatpush1.msra.mxu0 0.0
      %3063 = vmatprep.subr.mxu0 0.0
      %3064 = vmatpush1.msra.mxu0 0.0
      %3065 = vmatprep.subr.mxu0 0.0
      %3066 = vmatpush1.msra.mxu0 0.0
      %3067 = vmatprep.subr.mxu0 0.0
      %3068 = vmatpush1.msra.mxu0 0.0
      %3069 = vmatprep.subr.mxu0 0.0
      %3070 = vmatpush1.msra.mxu0 0.0
      %3071 = vmatprep.subr.mxu0 0.0
      %3072 = vmatpush1.msra.mxu0 0.0
      %3073 = vmatprep.subr.mxu0 0.0
      %3074 = vmatpush1.msra.mxu0 0.0
      %3075 = vmatprep.subr.mxu0 0.0
      %3076 = vmatpush1.msra.mxu0 0.0
      %3077 = vmatprep.subr.mxu0 0.0
      %3078 = vmatpush1.msra.mxu0 0.0
      %3079 = vmatprep.subr.mxu0 0.0
      %3080 = vmatpush1.msra.mxu0 0.0
      %3081 = vmatprep.subr.mxu0 0.0
      %3082 = vmatpush1.msra.mxu0 0.0
      %3083 = vmatprep.subr.mxu0 0.0
      %3084 = vmatpush1.msra.mxu0 0.0
      %3085 = vmatprep.subr.mxu0 0.0
      %3086 = vmatpush1.msra.mxu0 0.0
      %3087 = vmatprep.subr.mxu0 0.0
      %3088 = vmatpush1.msra.mxu0 0.0
      %3089 = vmatprep.mubr.f32.mxu0 0.0
      %3090 = vmatmul.mubr.f32.gmra.mrb[0].mxu0 %v3023
      %v3091 = vpop.f32.mrb[0].mxu0
      %v3092 = vadd.f32 0.0, %v3091
      %v3093 = vpop.f32.mrb[0].mxu0
      %3094 = vdwg.mxu0
      %v3095 = vadd.f32 %v2282, %v3092
      %v3096 = vxor.u32 %v3095, 2147483648
      %v3097 = vmul.f32 %v3096, 1.442695
      %v3098 = vpow.pop %v3097
      %v3099 = vadd.f32 %v3098, 1.0
      %v3100 = vrcp.pop %v3099
      %v3101 = vmul.f32 1.0, %v3100
      %v3102 = vtanh.pop %v3095
      %v3104 = vrot.slane %v2937, 6
      %v3106 = vmul.f32 %v3101, %v3104
      %3108 = vrot.lane.b32.xlu0 %v3102, 64
      %v3109 = vpop.permute.xlu0 %3108
      %v3111 = vmul.f32 %v3101, %v3109
      %3113 = vrot.lane.b32.xlu0 %v3111, 32
      %v3114 = vpop.permute.xlu0 %3113
      %v3116 = vadd.f32 %v3106, %v3114
      %v3117 = vmax.f32 %v3116, -3.0
      %v3118 = vmin.f32 %v3117, 3.0
      %v3119 = vtanh.pop %v3118
      %3121 = vrot.lane.b32.xlu0 %v3119, 64
      %v3122 = vpop.permute.xlu0 %3121
      %v3124 = vmul.f32 %v3101, %v3122
      %3126 = vrot.lane.b32.xlu0 %v3124, 32
      %v3127 = vpop.permute.xlu0 %3126
      %v3128 = vsel %vm897, %v3127, 0
      %3130 = vmatprep.subr.mxu0 0.0
      %3131 = vmatpush1.msra.mxu0 %v2289
      %3132 = vmatprep.subr.mxu0 0.0
      %3133 = vmatpush1.msra.mxu0 %v2290
      %3134 = vmatprep.subr.mxu0 0.0
      %3135 = vmatpush1.msra.mxu0 %v2291
      %3136 = vmatprep.subr.mxu0 0.0
      %3137 = vmatpush1.msra.mxu0 %v2292
      %3138 = vmatprep.subr.mxu0 0.0
      %3139 = vmatpush1.msra.mxu0 0.0
      %3140 = vmatprep.subr.mxu0 0.0
      %3141 = vmatpush1.msra.mxu0 0.0
      %3142 = vmatprep.subr.mxu0 0.0
      %3143 = vmatpush1.msra.mxu0 0.0
      %3144 = vmatprep.subr.mxu0 0.0
      %3145 = vmatpush1.msra.mxu0 0.0
      %3146 = vmatprep.subr.mxu0 0.0
      %3147 = vmatpush1.msra.mxu0 0.0
      %3148 = vmatprep.subr.mxu0 0.0
      %3149 = vmatpush1.msra.mxu0 0.0
      %3150 = vmatprep.subr.mxu0 0.0
      %3151 = vmatpush1.msra.mxu0 0.0
      %3152 = vmatprep.subr.mxu0 0.0
      %3153 = vmatpush1.msra.mxu0 0.0
      %3154 = vmatprep.subr.mxu0 0.0
      %3155 = vmatpush1.msra.mxu0 0.0
      %3156 = vmatprep.subr.mxu0 0.0
      %3157 = vmatpush1.msra.mxu0 0.0
      %3158 = vmatprep.subr.mxu0 0.0
      %3159 = vmatpush1.msra.mxu0 0.0
      %3160 = vmatprep.subr.mxu0 0.0
      %3161 = vmatpush1.msra.mxu0 0.0
      %3162 = vmatprep.subr.mxu0 0.0
      %3163 = vmatpush1.msra.mxu0 0.0
      %3164 = vmatprep.subr.mxu0 0.0
      %3165 = vmatpush1.msra.mxu0 0.0
      %3166 = vmatprep.subr.mxu0 0.0
      %3167 = vmatpush1.msra.mxu0 0.0
      %3168 = vmatprep.subr.mxu0 0.0
      %3169 = vmatpush1.msra.mxu0 0.0
      %3170 = vmatprep.subr.mxu0 0.0
      %3171 = vmatpush1.msra.mxu0 0.0
      %3172 = vmatprep.subr.mxu0 0.0
      %3173 = vmatpush1.msra.mxu0 0.0
      %3174 = vmatprep.subr.mxu0 0.0
      %3175 = vmatpush1.msra.mxu0 0.0
      %3176 = vmatprep.subr.mxu0 0.0
      %3177 = vmatpush1.msra.mxu0 0.0
      %3178 = vmatprep.subr.mxu0 0.0
      %3179 = vmatpush1.msra.mxu0 0.0
      %3180 = vmatprep.subr.mxu0 0.0
      %3181 = vmatpush1.msra.mxu0 0.0
      %3182 = vmatprep.subr.mxu0 0.0
      %3183 = vmatpush1.msra.mxu0 0.0
      %3184 = vmatprep.subr.mxu0 0.0
      %3185 = vmatpush1.msra.mxu0 0.0
      %3186 = vmatprep.subr.mxu0 0.0
      %3187 = vmatpush1.msra.mxu0 0.0
      %3188 = vmatprep.subr.mxu0 0.0
      %3189 = vmatpush1.msra.mxu0 0.0
      %3190 = vmatprep.subr.mxu0 0.0
      %3191 = vmatpush1.msra.mxu0 0.0
      %3192 = vmatprep.subr.mxu0 0.0
      %3193 = vmatpush1.msra.mxu0 0.0
      %3194 = vmatprep.mubr.f32.mxu0 0.0
      %3195 = vmatmul.mubr.f32.gmra.mrb[0].mxu0 %v3128
      %v3196 = vpop.f32.mrb[0].mxu0
      %v3197 = vadd.f32 0.0, %v3196
      %v3198 = vpop.f32.mrb[0].mxu0
      %3199 = vdwg.mxu0
      %v3200 = vmax.f32 %v3197, -3.0
      %v3201 = vmin.f32 %v3200, 3.0
      %v3203 = vsel %vm897, %v3201, 0
      %3205 = vmatprep.subr.mxu0 0.0
      %3206 = vmatpush1.msra.mxu0 %v2285
      %3207 = vmatprep.subr.mxu0 0.0
      %3208 = vmatpush1.msra.mxu0 %v2286
      %3209 = vmatprep.subr.mxu0 0.0
      %3210 = vmatpush1.msra.mxu0 %v2287
      %3211 = vmatprep.subr.mxu0 0.0
      %3212 = vmatpush1.msra.mxu0 %v2288
      %3213 = vmatprep.subr.mxu0 0.0
      %3214 = vmatpush1.msra.mxu0 0.0
      %3215 = vmatprep.subr.mxu0 0.0
      %3216 = vmatpush1.msra.mxu0 0.0
      %3217 = vmatprep.subr.mxu0 0.0
      %3218 = vmatpush1.msra.mxu0 0.0
      %3219 = vmatprep.subr.mxu0 0.0
      %3220 = vmatpush1.msra.mxu0 0.0
      %3221 = vmatprep.subr.mxu0 0.0
      %3222 = vmatpush1.msra.mxu0 0.0
      %3223 = vmatprep.subr.mxu0 0.0
      %3224 = vmatpush1.msra.mxu0 0.0
      %3225 = vmatprep.subr.mxu0 0.0
      %3226 = vmatpush1.msra.mxu0 0.0
      %3227 = vmatprep.subr.mxu0 0.0
      %3228 = vmatpush1.msra.mxu0 0.0
      %3229 = vmatprep.subr.mxu0 0.0
      %3230 = vmatpush1.msra.mxu0 0.0
      %3231 = vmatprep.subr.mxu0 0.0
      %3232 = vmatpush1.msra.mxu0 0.0
      %3233 = vmatprep.subr.mxu0 0.0
      %3234 = vmatpush1.msra.mxu0 0.0
      %3235 = vmatprep.subr.mxu0 0.0
      %3236 = vmatpush1.msra.mxu0 0.0
      %3237 = vmatprep.subr.mxu0 0.0
      %3238 = vmatpush1.msra.mxu0 0.0
      %3239 = vmatprep.subr.mxu0 0.0
      %3240 = vmatpush1.msra.mxu0 0.0
      %3241 = vmatprep.subr.mxu0 0.0
      %3242 = vmatpush1.msra.mxu0 0.0
      %3243 = vmatprep.subr.mxu0 0.0
      %3244 = vmatpush1.msra.mxu0 0.0
      %3245 = vmatprep.subr.mxu0 0.0
      %3246 = vmatpush1.msra.mxu0 0.0
      %3247 = vmatprep.subr.mxu0 0.0
      %3248 = vmatpush1.msra.mxu0 0.0
      %3249 = vmatprep.subr.mxu0 0.0
      %3250 = vmatpush1.msra.mxu0 0.0
      %3251 = vmatprep.subr.mxu0 0.0
      %3252 = vmatpush1.msra.mxu0 0.0
      %3253 = vmatprep.subr.mxu0 0.0
      %3254 = vmatpush1.msra.mxu0 0.0
      %3255 = vmatprep.subr.mxu0 0.0
      %3256 = vmatpush1.msra.mxu0 0.0
      %3257 = vmatprep.subr.mxu0 0.0
      %3258 = vmatpush1.msra.mxu0 0.0
      %3259 = vmatprep.subr.mxu0 0.0
      %3260 = vmatpush1.msra.mxu0 0.0
      %3261 = vmatprep.subr.mxu0 0.0
      %3262 = vmatpush1.msra.mxu0 0.0
      %3263 = vmatprep.subr.mxu0 0.0
      %3264 = vmatpush1.msra.mxu0 0.0
      %3265 = vmatprep.subr.mxu0 0.0
      %3266 = vmatpush1.msra.mxu0 0.0
      %3267 = vmatprep.subr.mxu0 0.0
      %3268 = vmatpush1.msra.mxu0 0.0
      %3269 = vmatprep.mubr.f32.mxu0 0.0
      %3270 = vmatmul.mubr.f32.gmra.mrb[0].mxu0 %v3203
      %v3271 = vpop.f32.mrb[0].mxu0
      %v3272 = vadd.f32 0.0, %v3271
      %v3273 = vpop.f32.mrb[0].mxu0
      %3274 = vdwg.mxu0
      %v3276 = vrot.slane %v3272, 6
      %v3278 = vadd.f32 %v2282, %v3276
      %v3279 = vxor.u32 %v3278, 2147483648
      %v3280 = vmul.f32 %v3279, 1.442695
      %v3281 = vpow.pop %v3280
      %v3282 = vadd.f32 %v3281, 1.0
      %v3283 = vrcp.pop %v3282
      %v3284 = vmul.f32 1.0, %v3283
      %v3285 = vtanh.pop %v3278
      %v3287 = vrot.slane %v3118, 6
      %v3289 = vmul.f32 %v3284, %v3287
      %3291 = vrot.lane.b32.xlu0 %v3285, 64
      %v3292 = vpop.permute.xlu0 %3291
      %v3294 = vmul.f32 %v3284, %v3292
      %3296 = vrot.lane.b32.xlu0 %v3294, 32
      %v3297 = vpop.permute.xlu0 %3296
      %v3299 = vadd.f32 %v3289, %v3297
      %v3300 = vmax.f32 %v3299, -3.0
      %v3301 = vmin.f32 %v3300, 3.0
      %v3302 = vtanh.pop %v3301
      %3304 = vrot.lane.b32.xlu0 %v3302, 64
      %v3305 = vpop.permute.xlu0 %3304
      %v3307 = vmul.f32 %v3284, %v3305
      %v3309 = vrot.slane %v3307, 2
      %3310 = vrot.lane.b32.xlu0 %v3309, 32
      %v3311 = vpop.permute.xlu0 %3310
      %v3312 = vsel %vm897, %v3311, 0
      %3314 = vmatprep.subr.mxu0 0.0
      %3315 = vmatpush1.msra.mxu0 %v2289
      %3316 = vmatprep.subr.mxu0 0.0
      %3317 = vmatpush1.msra.mxu0 %v2290
      %3318 = vmatprep.subr.mxu0 0.0
      %3319 = vmatpush1.msra.mxu0 %v2291
      %3320 = vmatprep.subr.mxu0 0.0
      %3321 = vmatpush1.msra.mxu0 %v2292
      %3322 = vmatprep.subr.mxu0 0.0
      %3323 = vmatpush1.msra.mxu0 0.0
      %3324 = vmatprep.subr.mxu0 0.0
      %3325 = vmatpush1.msra.mxu0 0.0
      %3326 = vmatprep.subr.mxu0 0.0
      %3327 = vmatpush1.msra.mxu0 0.0
      %3328 = vmatprep.subr.mxu0 0.0
      %3329 = vmatpush1.msra.mxu0 0.0
      %3330 = vmatprep.subr.mxu0 0.0
      %3331 = vmatpush1.msra.mxu0 0.0
      %3332 = vmatprep.subr.mxu0 0.0
      %3333 = vmatpush1.msra.mxu0 0.0
      %3334 = vmatprep.subr.mxu0 0.0
      %3335 = vmatpush1.msra.mxu0 0.0
      %3336 = vmatprep.subr.mxu0 0.0
      %3337 = vmatpush1.msra.mxu0 0.0
      %3338 = vmatprep.subr.mxu0 0.0
      %3339 = vmatpush1.msra.mxu0 0.0
      %3340 = vmatprep.subr.mxu0 0.0
      %3341 = vmatpush1.msra.mxu0 0.0
      %3342 = vmatprep.subr.mxu0 0.0
      %3343 = vmatpush1.msra.mxu0 0.0
      %3344 = vmatprep.subr.mxu0 0.0
      %3345 = vmatpush1.msra.mxu0 0.0
      %3346 = vmatprep.subr.mxu0 0.0
      %3347 = vmatpush1.msra.mxu0 0.0
      %3348 = vmatprep.subr.mxu0 0.0
      %3349 = vmatpush1.msra.mxu0 0.0
      %3350 = vmatprep.subr.mxu0 0.0
      %3351 = vmatpush1.msra.mxu0 0.0
      %3352 = vmatprep.subr.mxu0 0.0
      %3353 = vmatpush1.msra.mxu0 0.0
      %3354 = vmatprep.subr.mxu0 0.0
      %3355 = vmatpush1.msra.mxu0 0.0
      %3356 = vmatprep.subr.mxu0 0.0
      %3357 = vmatpush1.msra.mxu0 0.0
      %3358 = vmatprep.subr.mxu0 0.0
      %3359 = vmatpush1.msra.mxu0 0.0
      %3360 = vmatprep.subr.mxu0 0.0
      %3361 = vmatpush1.msra.mxu0 0.0
      %3362 = vmatprep.subr.mxu0 0.0
      %3363 = vmatpush1.msra.mxu0 0.0
      %3364 = vmatprep.subr.mxu0 0.0
      %3365 = vmatpush1.msra.mxu0 0.0
      %3366 = vmatprep.subr.mxu0 0.0
      %3367 = vmatpush1.msra.mxu0 0.0
      %3368 = vmatprep.subr.mxu0 0.0
      %3369 = vmatpush1.msra.mxu0 0.0
      %3370 = vmatprep.subr.mxu0 0.0
      %3371 = vmatpush1.msra.mxu0 0.0
      %3372 = vmatprep.subr.mxu0 0.0
      %3373 = vmatpush1.msra.mxu0 0.0
      %3374 = vmatprep.subr.mxu0 0.0
      %3375 = vmatpush1.msra.mxu0 0.0
      %3376 = vmatprep.subr.mxu0 0.0
      %3377 = vmatpush1.msra.mxu0 0.0
      %3378 = vmatprep.mubr.f32.mxu0 0.0
      %3379 = vmatmul.mubr.f32.gmra.mrb[0].mxu0 %v3312
      %v3380 = vpop.f32.mrb[0].mxu0
      %v3381 = vadd.f32 0.0, %v3380
      %v3382 = vpop.f32.mrb[0].mxu0
      %3383 = vdwg.mxu0
      %v3384 = vmax.f32 %v3381, -3.0
      %v3385 = vmin.f32 %v3384, 3.0
      %v3387 = vsel %vm897, %v3385, 0
      %3389 = vmatprep.subr.mxu0 0.0
      %3390 = vmatpush1.msra.mxu0 %v2285
      %3391 = vmatprep.subr.mxu0 0.0
      %3392 = vmatpush1.msra.mxu0 %v2286
      %3393 = vmatprep.subr.mxu0 0.0
      %3394 = vmatpush1.msra.mxu0 %v2287
      %3395 = vmatprep.subr.mxu0 0.0
      %3396 = vmatpush1.msra.mxu0 %v2288
      %3397 = vmatprep.subr.mxu0 0.0
      %3398 = vmatpush1.msra.mxu0 0.0
      %3399 = vmatprep.subr.mxu0 0.0
      %3400 = vmatpush1.msra.mxu0 0.0
      %3401 = vmatprep.subr.mxu0 0.0
      %3402 = vmatpush1.msra.mxu0 0.0
      %3403 = vmatprep.subr.mxu0 0.0
      %3404 = vmatpush1.msra.mxu0 0.0
      %3405 = vmatprep.subr.mxu0 0.0
      %3406 = vmatpush1.msra.mxu0 0.0
      %3407 = vmatprep.subr.mxu0 0.0
      %3408 = vmatpush1.msra.mxu0 0.0
      %3409 = vmatprep.subr.mxu0 0.0
      %3410 = vmatpush1.msra.mxu0 0.0
      %3411 = vmatprep.subr.mxu0 0.0
      %3412 = vmatpush1.msra.mxu0 0.0
      %3413 = vmatprep.subr.mxu0 0.0
      %3414 = vmatpush1.msra.mxu0 0.0
      %3415 = vmatprep.subr.mxu0 0.0
      %3416 = vmatpush1.msra.mxu0 0.0
      %3417 = vmatprep.subr.mxu0 0.0
      %3418 = vmatpush1.msra.mxu0 0.0
      %3419 = vmatprep.subr.mxu0 0.0
      %3420 = vmatpush1.msra.mxu0 0.0
      %3421 = vmatprep.subr.mxu0 0.0
      %3422 = vmatpush1.msra.mxu0 0.0
      %3423 = vmatprep.subr.mxu0 0.0
      %3424 = vmatpush1.msra.mxu0 0.0
      %3425 = vmatprep.subr.mxu0 0.0
      %3426 = vmatpush1.msra.mxu0 0.0
      %3427 = vmatprep.subr.mxu0 0.0
      %3428 = vmatpush1.msra.mxu0 0.0
      %3429 = vmatprep.subr.mxu0 0.0
      %3430 = vmatpush1.msra.mxu0 0.0
      %3431 = vmatprep.subr.mxu0 0.0
      %3432 = vmatpush1.msra.mxu0 0.0
      %3433 = vmatprep.subr.mxu0 0.0
      %3434 = vmatpush1.msra.mxu0 0.0
      %3435 = vmatprep.subr.mxu0 0.0
      %3436 = vmatpush1.msra.mxu0 0.0
      %3437 = vmatprep.subr.mxu0 0.0
      %3438 = vmatpush1.msra.mxu0 0.0
      %3439 = vmatprep.subr.mxu0 0.0
      %3440 = vmatpush1.msra.mxu0 0.0
      %3441 = vmatprep.subr.mxu0 0.0
      %3442 = vmatpush1.msra.mxu0 0.0
      %3443 = vmatprep.subr.mxu0 0.0
      %3444 = vmatpush1.msra.mxu0 0.0
      %3445 = vmatprep.subr.mxu0 0.0
      %3446 = vmatpush1.msra.mxu0 0.0
      %3447 = vmatprep.subr.mxu0 0.0
      %3448 = vmatpush1.msra.mxu0 0.0
      %3449 = vmatprep.subr.mxu0 0.0
      %3450 = vmatpush1.msra.mxu0 0.0
      %3451 = vmatprep.subr.mxu0 0.0
      %3452 = vmatpush1.msra.mxu0 0.0
      %3453 = vmatprep.mubr.f32.mxu0 0.0
      %3454 = vmatmul.mubr.f32.gmra.mrb[0].mxu0 %v3387
      %v3455 = vpop.f32.mrb[0].mxu0
      %v3456 = vadd.f32 0.0, %v3455
      %v3457 = vpop.f32.mrb[0].mxu0
      %3458 = vdwg.mxu0
      %v3460 = vrot.slane %v3456, 4
      %v3462 = vadd.f32 %v2282, %v3460
      %v3463 = vxor.u32 %v3462, 2147483648
      %v3464 = vmul.f32 %v3463, 1.442695
      %v3465 = vpow.pop %v3464
      %v3466 = vadd.f32 %v3465, 1.0
      %v3467 = vrcp.pop %v3466
      %v3468 = vmul.f32 1.0, %v3467
      %v3469 = vtanh.pop %v3462
      %v3471 = vrot.slane %v3301, 6
      %v3473 = vmul.f32 %v3468, %v3471
      %3475 = vrot.lane.b32.xlu0 %v3469, 64
      %v3476 = vpop.permute.xlu0 %3475
      %v3478 = vmul.f32 %v3468, %v3476
      %3480 = vrot.lane.b32.xlu0 %v3478, 32
      %v3481 = vpop.permute.xlu0 %3480
      %v3483 = vadd.f32 %v3473, %v3481
      %v3484 = vmax.f32 %v3483, -3.0
      %v3485 = vmin.f32 %v3484, 3.0
      %v3486 = vtanh.pop %v3485
      %3488 = vrot.lane.b32.xlu0 %v3486, 64
      %v3489 = vpop.permute.xlu0 %3488
      %v3491 = vmul.f32 %v3468, %v3489
      %v3493 = vrot.slane %v3491, 4
      %3494 = vrot.lane.b32.xlu0 %v3493, 32
      %v3495 = vpop.permute.xlu0 %3494
      %v3496 = vsel %vm897, %v3495, 0
      %3498 = vmatprep.subr.mxu0 0.0
      %3499 = vmatpush1.msra.mxu0 %v2289
      %3500 = vmatprep.subr.mxu0 0.0
      %3501 = vmatpush1.msra.mxu0 %v2290
      %3502 = vmatprep.subr.mxu0 0.0
      %3503 = vmatpush1.msra.mxu0 %v2291
      %3504 = vmatprep.subr.mxu0 0.0
      %3505 = vmatpush1.msra.mxu0 %v2292
      %3506 = vmatprep.subr.mxu0 0.0
      %3507 = vmatpush1.msra.mxu0 0.0
      %3508 = vmatprep.subr.mxu0 0.0
      %3509 = vmatpush1.msra.mxu0 0.0
      %3510 = vmatprep.subr.mxu0 0.0
      %3511 = vmatpush1.msra.mxu0 0.0
      %3512 = vmatprep.subr.mxu0 0.0
      %3513 = vmatpush1.msra.mxu0 0.0
      %3514 = vmatprep.subr.mxu0 0.0
      %3515 = vmatpush1.msra.mxu0 0.0
      %3516 = vmatprep.subr.mxu0 0.0
      %3517 = vmatpush1.msra.mxu0 0.0
      %3518 = vmatprep.subr.mxu0 0.0
      %3519 = vmatpush1.msra.mxu0 0.0
      %3520 = vmatprep.subr.mxu0 0.0
      %3521 = vmatpush1.msra.mxu0 0.0
      %3522 = vmatprep.subr.mxu0 0.0
      %3523 = vmatpush1.msra.mxu0 0.0
      %3524 = vmatprep.subr.mxu0 0.0
      %3525 = vmatpush1.msra.mxu0 0.0
      %3526 = vmatprep.subr.mxu0 0.0
      %3527 = vmatpush1.msra.mxu0 0.0
      %3528 = vmatprep.subr.mxu0 0.0
      %3529 = vmatpush1.msra.mxu0 0.0
      %3530 = vmatprep.subr.mxu0 0.0
      %3531 = vmatpush1.msra.mxu0 0.0
      %3532 = vmatprep.subr.mxu0 0.0
      %3533 = vmatpush1.msra.mxu0 0.0
      %3534 = vmatprep.subr.mxu0 0.0
      %3535 = vmatpush1.msra.mxu0 0.0
      %3536 = vmatprep.subr.mxu0 0.0
      %3537 = vmatpush1.msra.mxu0 0.0
      %3538 = vmatprep.subr.mxu0 0.0
      %3539 = vmatpush1.msra.mxu0 0.0
      %3540 = vmatprep.subr.mxu0 0.0
      %3541 = vmatpush1.msra.mxu0 0.0
      %3542 = vmatprep.subr.mxu0 0.0
      %3543 = vmatpush1.msra.mxu0 0.0
      %3544 = vmatprep.subr.mxu0 0.0
      %3545 = vmatpush1.msra.mxu0 0.0
      %3546 = vmatprep.subr.mxu0 0.0
      %3547 = vmatpush1.msra.mxu0 0.0
      %3548 = vmatprep.subr.mxu0 0.0
      %3549 = vmatpush1.msra.mxu0 0.0
      %3550 = vmatprep.subr.mxu0 0.0
      %3551 = vmatpush1.msra.mxu0 0.0
      %3552 = vmatprep.subr.mxu0 0.0
      %3553 = vmatpush1.msra.mxu0 0.0
      %3554 = vmatprep.subr.mxu0 0.0
      %3555 = vmatpush1.msra.mxu0 0.0
      %3556 = vmatprep.subr.mxu0 0.0
      %3557 = vmatpush1.msra.mxu0 0.0
      %3558 = vmatprep.subr.mxu0 0.0
      %3559 = vmatpush1.msra.mxu0 0.0
      %3560 = vmatprep.subr.mxu0 0.0
      %3561 = vmatpush1.msra.mxu0 0.0
      %3562 = vmatprep.mubr.f32.mxu0 0.0
      %3563 = vmatmul.mubr.f32.gmra.mrb[0].mxu0 %v3496
      %v3564 = vpop.f32.mrb[0].mxu0
      %v3565 = vadd.f32 0.0, %v3564
      %v3566 = vpop.f32.mrb[0].mxu0
      %3567 = vdwg.mxu0
      %v3568 = vmax.f32 %v3565, -3.0
      %v3569 = vmin.f32 %v3568, 3.0
      %v3571 = vsel %vm897, %v3569, 0
      %3573 = vmatprep.subr.mxu0 0.0
      %3574 = vmatpush1.msra.mxu0 %v2285
      %3575 = vmatprep.subr.mxu0 0.0
      %3576 = vmatpush1.msra.mxu0 %v2286
      %3577 = vmatprep.subr.mxu0 0.0
      %3578 = vmatpush1.msra.mxu0 %v2287
      %3579 = vmatprep.subr.mxu0 0.0
      %3580 = vmatpush1.msra.mxu0 %v2288
      %3581 = vmatprep.subr.mxu0 0.0
      %3582 = vmatpush1.msra.mxu0 0.0
      %3583 = vmatprep.subr.mxu0 0.0
      %3584 = vmatpush1.msra.mxu0 0.0
      %3585 = vmatprep.subr.mxu0 0.0
      %3586 = vmatpush1.msra.mxu0 0.0
      %3587 = vmatprep.subr.mxu0 0.0
      %3588 = vmatpush1.msra.mxu0 0.0
      %3589 = vmatprep.subr.mxu0 0.0
      %3590 = vmatpush1.msra.mxu0 0.0
      %3591 = vmatprep.subr.mxu0 0.0
      %3592 = vmatpush1.msra.mxu0 0.0
      %3593 = vmatprep.subr.mxu0 0.0
      %3594 = vmatpush1.msra.mxu0 0.0
      %3595 = vmatprep.subr.mxu0 0.0
      %3596 = vmatpush1.msra.mxu0 0.0
      %3597 = vmatprep.subr.mxu0 0.0
      %3598 = vmatpush1.msra.mxu0 0.0
      %3599 = vmatprep.subr.mxu0 0.0
      %3600 = vmatpush1.msra.mxu0 0.0
      %3601 = vmatprep.subr.mxu0 0.0
      %3602 = vmatpush1.msra.mxu0 0.0
      %3603 = vmatprep.subr.mxu0 0.0
      %3604 = vmatpush1.msra.mxu0 0.0
      %3605 = vmatprep.subr.mxu0 0.0
      %3606 = vmatpush1.msra.mxu0 0.0
      %3607 = vmatprep.subr.mxu0 0.0
      %3608 = vmatpush1.msra.mxu0 0.0
      %3609 = vmatprep.subr.mxu0 0.0
      %3610 = vmatpush1.msra.mxu0 0.0
      %3611 = vmatprep.subr.mxu0 0.0
      %3612 = vmatpush1.msra.mxu0 0.0
      %3613 = vmatprep.subr.mxu0 0.0
      %3614 = vmatpush1.msra.mxu0 0.0
      %3615 = vmatprep.subr.mxu0 0.0
      %3616 = vmatpush1.msra.mxu0 0.0
      %3617 = vmatprep.subr.mxu0 0.0
      %3618 = vmatpush1.msra.mxu0 0.0
      %3619 = vmatprep.subr.mxu0 0.0
      %3620 = vmatpush1.msra.mxu0 0.0
      %3621 = vmatprep.subr.mxu0 0.0
      %3622 = vmatpush1.msra.mxu0 0.0
      %3623 = vmatprep.subr.mxu0 0.0
      %3624 = vmatpush1.msra.mxu0 0.0
      %3625 = vmatprep.subr.mxu0 0.0
      %3626 = vmatpush1.msra.mxu0 0.0
      %3627 = vmatprep.subr.mxu0 0.0
      %3628 = vmatpush1.msra.mxu0 0.0
      %3629 = vmatprep.subr.mxu0 0.0
      %3630 = vmatpush1.msra.mxu0 0.0
      %3631 = vmatprep.subr.mxu0 0.0
      %3632 = vmatpush1.msra.mxu0 0.0
      %3633 = vmatprep.subr.mxu0 0.0
      %3634 = vmatpush1.msra.mxu0 0.0
      %3635 = vmatprep.subr.mxu0 0.0
      %3636 = vmatpush1.msra.mxu0 0.0
      %3637 = vmatprep.mubr.f32.mxu0 0.0
      %3638 = vmatmul.mubr.f32.gmra.mrb[0].mxu0 %v3571
      %v3639 = vpop.f32.mrb[0].mxu0
      %v3640 = vadd.f32 0.0, %v3639
      %v3641 = vpop.f32.mrb[0].mxu0
      %3642 = vdwg.mxu0
      %v3644 = vrot.slane %v3640, 2
      %v3646 = vadd.f32 %v2282, %v3644
      %v3647 = vxor.u32 %v3646, 2147483648
      %v3648 = vmul.f32 %v3647, 1.442695
      %v3649 = vpow.pop %v3648
      %v3650 = vadd.f32 %v3649, 1.0
      %v3651 = vrcp.pop %v3650
      %v3652 = vmul.f32 1.0, %v3651
      %v3653 = vtanh.pop %v3646
      %v3655 = vrot.slane %v3485, 6
      %v3657 = vmul.f32 %v3652, %v3655
      %3659 = vrot.lane.b32.xlu0 %v3653, 64
      %v3660 = vpop.permute.xlu0 %3659
      %v3662 = vmul.f32 %v3652, %v3660
      %3664 = vrot.lane.b32.xlu0 %v3662, 32
      %v3665 = vpop.permute.xlu0 %3664
      %v3667 = vadd.f32 %v3657, %v3665
      %v3668 = vmax.f32 %v3667, -3.0
      %v3669 = vmin.f32 %v3668, 3.0
      %v3670 = vtanh.pop %v3669
      %3672 = vrot.lane.b32.xlu0 %v3670, 64
      %v3673 = vpop.permute.xlu0 %3672
      %v3675 = vmul.f32 %v3652, %v3673
      %v3677 = vrot.slane %v3675, 6
      %3678 = vrot.lane.b32.xlu0 %v3677, 32
      %v3679 = vpop.permute.xlu0 %3678
      %v3680 = vsel %vm897, %v3679, 0
      %3682 = vmatprep.subr.mxu0 0.0
      %3683 = vmatpush1.msra.mxu0 %v2289
      %3684 = vmatprep.subr.mxu0 0.0
      %3685 = vmatpush1.msra.mxu0 %v2290
      %3686 = vmatprep.subr.mxu0 0.0
      %3687 = vmatpush1.msra.mxu0 %v2291
      %3688 = vmatprep.subr.mxu0 0.0
      %3689 = vmatpush1.msra.mxu0 %v2292
      %3690 = vmatprep.subr.mxu0 0.0
      %3691 = vmatpush1.msra.mxu0 0.0
      %3692 = vmatprep.subr.mxu0 0.0
      %3693 = vmatpush1.msra.mxu0 0.0
      %3694 = vmatprep.subr.mxu0 0.0
      %3695 = vmatpush1.msra.mxu0 0.0
      %3696 = vmatprep.subr.mxu0 0.0
      %3697 = vmatpush1.msra.mxu0 0.0
      %3698 = vmatprep.subr.mxu0 0.0
      %3699 = vmatpush1.msra.mxu0 0.0
      %3700 = vmatprep.subr.mxu0 0.0
      %3701 = vmatpush1.msra.mxu0 0.0
      %3702 = vmatprep.subr.mxu0 0.0
      %3703 = vmatpush1.msra.mxu0 0.0
      %3704 = vmatprep.subr.mxu0 0.0
      %3705 = vmatpush1.msra.mxu0 0.0
      %3706 = vmatprep.subr.mxu0 0.0
      %3707 = vmatpush1.msra.mxu0 0.0
      %3708 = vmatprep.subr.mxu0 0.0
      %3709 = vmatpush1.msra.mxu0 0.0
      %3710 = vmatprep.subr.mxu0 0.0
      %3711 = vmatpush1.msra.mxu0 0.0
      %3712 = vmatprep.subr.mxu0 0.0
      %3713 = vmatpush1.msra.mxu0 0.0
      %3714 = vmatprep.subr.mxu0 0.0
      %3715 = vmatpush1.msra.mxu0 0.0
      %3716 = vmatprep.subr.mxu0 0.0
      %3717 = vmatpush1.msra.mxu0 0.0
      %3718 = vmatprep.subr.mxu0 0.0
      %3719 = vmatpush1.msra.mxu0 0.0
      %3720 = vmatprep.subr.mxu0 0.0
      %3721 = vmatpush1.msra.mxu0 0.0
      %3722 = vmatprep.subr.mxu0 0.0
      %3723 = vmatpush1.msra.mxu0 0.0
      %3724 = vmatprep.subr.mxu0 0.0
      %3725 = vmatpush1.msra.mxu0 0.0
      %3726 = vmatprep.subr.mxu0 0.0
      %3727 = vmatpush1.msra.mxu0 0.0
      %3728 = vmatprep.subr.mxu0 0.0
      %3729 = vmatpush1.msra.mxu0 0.0
      %3730 = vmatprep.subr.mxu0 0.0
      %3731 = vmatpush1.msra.mxu0 0.0
      %3732 = vmatprep.subr.mxu0 0.0
      %3733 = vmatpush1.msra.mxu0 0.0
      %3734 = vmatprep.subr.mxu0 0.0
      %3735 = vmatpush1.msra.mxu0 0.0
      %3736 = vmatprep.subr.mxu0 0.0
      %3737 = vmatpush1.msra.mxu0 0.0
      %3738 = vmatprep.subr.mxu0 0.0
      %3739 = vmatpush1.msra.mxu0 0.0
      %3740 = vmatprep.subr.mxu0 0.0
      %3741 = vmatpush1.msra.mxu0 0.0
      %3742 = vmatprep.subr.mxu0 0.0
      %3743 = vmatpush1.msra.mxu0 0.0
      %3744 = vmatprep.subr.mxu0 0.0
      %3745 = vmatpush1.msra.mxu0 0.0
      %3746 = vmatprep.mubr.f32.mxu0 0.0
      %3747 = vmatmul.mubr.f32.gmra.mrb[0].mxu0 %v3680
      %v3748 = vpop.f32.mrb[0].mxu0
      %v3749 = vadd.f32 0.0, %v3748
      %v3750 = vpop.f32.mrb[0].mxu0
      %3751 = vdwg.mxu0
      %v3752 = vmax.f32 %v3749, -3.0
      %v3753 = vmin.f32 %v3752, 3.0
      %v3754 = vrot.slane %v2653, 6
      %v3756 = vrot.slane %v2837, 4
      %v3758 = vrot.slane %v3021, 2
      %v3760 = vrot.slane %v3385, 6
      %v3762 = vrot.slane %v3569, 4
      %v3765 = vrot.slane %v3753, 2
      %v3767 = vsel %vm1929, %v2469, %v3754
      %vm3768 = vcmask 1043456
      %v3769 = vsel %vm3768, %v3767, %v3756
      %vm3770 = vcmask 1045504
      %v3771 = vsel %vm3770, %v3769, %v3758
      %v3772 = vsel %vm1929, %v3201, %v3760
      %v3773 = vsel %vm3768, %v3772, %v3762
      %v3774 = vsel %vm3770, %v3773, %v3765
      %s3775 = scalar_lea.vmem %s502, 32
      %v3776 = vld [vmem:[%s3775] sm:$0xff]
      %v3777 = vld [vmem:[%s3775 + $0x8] sm:$0xff]
      %v3778 = vld [vmem:[%s3775 + $0x10] sm:$0xff]
      %v3779 = vld [vmem:[%s3775 + $0x18] sm:$0xff]
      %s3780 = scalar_lea.vmem %s514, 1
      %v3781 = vld [vmem:[%s3780] sm:$0x1]
      %v3783 = vlaneseq
      %v3784 = vshrl.u32 %v3783, 7
      %v3785 = vsub.s32 0, %v3784
      %v3786 = vrot.slane %v3781, %v3785
      %v3789 = vsel %vm897, %v3771, 0
      %v3792 = vsel %vm897, %v3774, 0
      %3794 = vmatprep.subr.mxu0 0.0
      %3795 = vmatpush1.msra.mxu0 %v3776
      %3796 = vmatprep.subr.mxu0 0.0
      %3797 = vmatpush1.msra.mxu0 %v3777
      %3798 = vmatprep.subr.mxu0 0.0
      %3799 = vmatpush1.msra.mxu0 %v3778
      %3800 = vmatprep.subr.mxu0 0.0
      %3801 = vmatpush1.msra.mxu0 %v3779
      %3802 = vmatprep.subr.mxu0 0.0
      %3803 = vmatpush1.msra.mxu0 0.0
      %3804 = vmatprep.subr.mxu0 0.0
      %3805 = vmatpush1.msra.mxu0 0.0
      %3806 = vmatprep.subr.mxu0 0.0
      %3807 = vmatpush1.msra.mxu0 0.0
      %3808 = vmatprep.subr.mxu0 0.0
      %3809 = vmatpush1.msra.mxu0 0.0
      %3810 = vmatprep.subr.mxu0 0.0
      %3811 = vmatpush1.msra.mxu0 0.0
      %3812 = vmatprep.subr.mxu0 0.0
      %3813 = vmatpush1.msra.mxu0 0.0
      %3814 = vmatprep.subr.mxu0 0.0
      %3815 = vmatpush1.msra.mxu0 0.0
      %3816 = vmatprep.subr.mxu0 0.0
      %3817 = vmatpush1.msra.mxu0 0.0
      %3818 = vmatprep.subr.mxu0 0.0
      %3819 = vmatpush1.msra.mxu0 0.0
      %3820 = vmatprep.subr.mxu0 0.0
      %3821 = vmatpush1.msra.mxu0 0.0
      %3822 = vmatprep.subr.mxu0 0.0
      %3823 = vmatpush1.msra.mxu0 0.0
      %3824 = vmatprep.subr.mxu0 0.0
      %3825 = vmatpush1.msra.mxu0 0.0
      %3826 = vmatprep.subr.mxu0 0.0
      %3827 = vmatpush1.msra.mxu0 0.0
      %3828 = vmatprep.subr.mxu0 0.0
      %3829 = vmatpush1.msra.mxu0 0.0
      %3830 = vmatprep.subr.mxu0 0.0
      %3831 = vmatpush1.msra.mxu0 0.0
      %3832 = vmatprep.subr.mxu0 0.0
      %3833 = vmatpush1.msra.mxu0 0.0
      %3834 = vmatprep.subr.mxu0 0.0
      %3835 = vmatpush1.msra.mxu0 0.0
      %3836 = vmatprep.subr.mxu0 0.0
      %3837 = vmatpush1.msra.mxu0 0.0
      %3838 = vmatprep.subr.mxu0 0.0
      %3839 = vmatpush1.msra.mxu0 0.0
      %3840 = vmatprep.subr.mxu0 0.0
      %3841 = vmatpush1.msra.mxu0 0.0
      %3842 = vmatprep.subr.mxu0 0.0
      %3843 = vmatpush1.msra.mxu0 0.0
      %3844 = vmatprep.subr.mxu0 0.0
      %3845 = vmatpush1.msra.mxu0 0.0
      %3846 = vmatprep.subr.mxu0 0.0
      %3847 = vmatpush1.msra.mxu0 0.0
      %3848 = vmatprep.subr.mxu0 0.0
      %3849 = vmatpush1.msra.mxu0 0.0
      %3850 = vmatprep.subr.mxu0 0.0
      %3851 = vmatpush1.msra.mxu0 0.0
      %3852 = vmatprep.subr.mxu0 0.0
      %3853 = vmatpush1.msra.mxu0 0.0
      %3854 = vmatprep.subr.mxu0 0.0
      %3855 = vmatpush1.msra.mxu0 0.0
      %3856 = vmatprep.subr.mxu0 0.0
      %3857 = vmatpush1.msra.mxu0 0.0
      %3858 = vmatprep.mubr.f32.mxu0 0.0
      %3859 = vmatmul.mubr.f32.gmra.mrb[0].mxu0 %v3789
      %v3860 = vpop.f32.mrb[0].mxu0
      %v3861 = vadd.f32 %v3786, %v3860
      %v3862 = vpop.f32.mrb[0].mxu0
      %3863 = vmatprep.mubr.f32.mxu0 0.0
      %3864 = vmatmul.mubr.f32.gmra.mrb[0].mxu0 %v3792
      %v3865 = vpop.f32.mrb[0].mxu0
      %v3866 = vadd.f32 %v3786, %v3865
      %v3867 = vpop.f32.mrb[0].mxu0
      %3868 = vdwg.mxu0
      %s3869 = scalar_lea.vmem %s509, 32
      %v3870 = vld [vmem:[%s3869] sm:$0xff]
      %v3871 = vld [vmem:[%s3869 + $0x8] sm:$0xff]
      %v3872 = vld [vmem:[%s3869 + $0x10] sm:$0xff]
      %v3873 = vld [vmem:[%s3869 + $0x18] sm:$0xff]
      %s3874 = scalar_lea.vmem %s521, 32
      %v3875 = vld [vmem:[%s3874] sm:$0xff]
      %v3876 = vld [vmem:[%s3874 + $0x8] sm:$0xff]
      %v3877 = vld [vmem:[%s3874 + $0x10] sm:$0xff]
      %v3878 = vld [vmem:[%s3874 + $0x18] sm:$0xff]
      %3879 = vmatprep.subr.mxu0 0.0
      %3880 = vmatpush1.msra.mxu0 %v3870
      %3881 = vmatprep.subr.mxu0 0.0
      %3882 = vmatpush1.msra.mxu0 %v3871
      %3883 = vmatprep.subr.mxu0 0.0
      %3884 = vmatpush1.msra.mxu0 %v3872
      %3885 = vmatprep.subr.mxu0 0.0
      %3886 = vmatpush1.msra.mxu0 %v3873
      %3887 = vmatprep.subr.mxu0 0.0
      %3888 = vmatpush1.msra.mxu0 0.0
      %3889 = vmatprep.subr.mxu0 0.0
      %3890 = vmatpush1.msra.mxu0 0.0
      %3891 = vmatprep.subr.mxu0 0.0
      %3892 = vmatpush1.msra.mxu0 0.0
      %3893 = vmatprep.subr.mxu0 0.0
      %3894 = vmatpush1.msra.mxu0 0.0
      %3895 = vmatprep.subr.mxu0 0.0
      %3896 = vmatpush1.msra.mxu0 0.0
      %3897 = vmatprep.subr.mxu0 0.0
      %3898 = vmatpush1.msra.mxu0 0.0
      %3899 = vmatprep.subr.mxu0 0.0
      %3900 = vmatpush1.msra.mxu0 0.0
      %3901 = vmatprep.subr.mxu0 0.0
      %3902 = vmatpush1.msra.mxu0 0.0
      %3903 = vmatprep.subr.mxu0 0.0
      %3904 = vmatpush1.msra.mxu0 0.0
      %3905 = vmatprep.subr.mxu0 0.0
      %3906 = vmatpush1.msra.mxu0 0.0
      %3907 = vmatprep.subr.mxu0 0.0
      %3908 = vmatpush1.msra.mxu0 0.0
      %3909 = vmatprep.subr.mxu0 0.0
      %3910 = vmatpush1.msra.mxu0 0.0
      %3911 = vmatprep.subr.mxu0 0.0
      %3912 = vmatpush1.msra.mxu0 0.0
      %3913 = vmatprep.subr.mxu0 0.0
      %3914 = vmatpush1.msra.mxu0 0.0
      %3915 = vmatprep.subr.mxu0 0.0
      %3916 = vmatpush1.msra.mxu0 0.0
      %3917 = vmatprep.subr.mxu0 0.0
      %3918 = vmatpush1.msra.mxu0 0.0
      %3919 = vmatprep.subr.mxu0 0.0
      %3920 = vmatpush1.msra.mxu0 0.0
      %3921 = vmatprep.subr.mxu0 0.0
      %3922 = vmatpush1.msra.mxu0 0.0
      %3923 = vmatprep.subr.mxu0 0.0
      %3924 = vmatpush1.msra.mxu0 0.0
      %3925 = vmatprep.subr.mxu0 0.0
      %3926 = vmatpush1.msra.mxu0 0.0
      %3927 = vmatprep.subr.mxu0 0.0
      %3928 = vmatpush1.msra.mxu0 0.0
      %3929 = vmatprep.subr.mxu0 0.0
      %3930 = vmatpush1.msra.mxu0 0.0
      %3931 = vmatprep.subr.mxu0 0.0
      %3932 = vmatpush1.msra.mxu0 0.0
      %3933 = vmatprep.subr.mxu0 0.0
      %3934 = vmatpush1.msra.mxu0 0.0
      %3935 = vmatprep.subr.mxu0 0.0
      %3936 = vmatpush1.msra.mxu0 0.0
      %3937 = vmatprep.subr.mxu0 0.0
      %3938 = vmatpush1.msra.mxu0 0.0
      %3939 = vmatprep.subr.mxu0 0.0
      %3940 = vmatpush1.msra.mxu0 0.0
      %3941 = vmatprep.subr.mxu0 0.0
      %3942 = vmatpush1.msra.mxu0 0.0
      %3943 = vmatprep.mubr.f32.mxu0 0.0
      %3944 = vmatmul.mubr.f32.gmra.mrb[0].mxu0 %v2294
      %v3945 = vpop.f32.mrb[0].mxu0
      %v3946 = vadd.f32 0.0, %v3945
      %v3947 = vpop.f32.mrb[0].mxu0
      %3948 = vdwg.mxu0
      %v3949 = vadd.f32 %v3861, %v3946
      %v3950 = vxor.u32 %v3949, 2147483648
      %v3951 = vmul.f32 %v3950, 1.442695
      %v3952 = vpow.pop %v3951
      %v3953 = vadd.f32 %v3952, 1.0
      %v3954 = vrcp.pop %v3953
      %v3955 = vmul.f32 1.0, %v3954
      %v3956 = vtanh.pop %v3949
      %v3957 = vmul.f32 %v3955, 0.0
      %3959 = vrot.lane.b32.xlu0 %v3956, 64
      %v3960 = vpop.permute.xlu0 %3959
      %v3962 = vmul.f32 %v3955, %v3960
      %3964 = vrot.lane.b32.xlu0 %v3962, 32
      %v3965 = vpop.permute.xlu0 %3964
      %v3967 = vadd.f32 %v3957, %v3965
      %v3968 = vmax.f32 %v3967, -3.0
      %v3969 = vmin.f32 %v3968, 3.0
      %v3970 = vtanh.pop %v3969
      %3972 = vrot.lane.b32.xlu0 %v3970, 64
      %v3973 = vpop.permute.xlu0 %3972
      %v3975 = vmul.f32 %v3955, %v3973
      %3977 = vrot.lane.b32.xlu0 %v3975, 32
      %v3978 = vpop.permute.xlu0 %3977
      %v3979 = vsel %vm897, %v3978, 0
      %3981 = vmatprep.subr.mxu0 0.0
      %3982 = vmatpush1.msra.mxu0 %v3875
      %3983 = vmatprep.subr.mxu0 0.0
      %3984 = vmatpush1.msra.mxu0 %v3876
      %3985 = vmatprep.subr.mxu0 0.0
      %3986 = vmatpush1.msra.mxu0 %v3877
      %3987 = vmatprep.subr.mxu0 0.0
      %3988 = vmatpush1.msra.mxu0 %v3878
      %3989 = vmatprep.subr.mxu0 0.0
      %3990 = vmatpush1.msra.mxu0 0.0
      %3991 = vmatprep.subr.mxu0 0.0
      %3992 = vmatpush1.msra.mxu0 0.0
      %3993 = vmatprep.subr.mxu0 0.0
      %3994 = vmatpush1.msra.mxu0 0.0
      %3995 = vmatprep.subr.mxu0 0.0
      %3996 = vmatpush1.msra.mxu0 0.0
      %3997 = vmatprep.subr.mxu0 0.0
      %3998 = vmatpush1.msra.mxu0 0.0
      %3999 = vmatprep.subr.mxu0 0.0
      %4000 = vmatpush1.msra.mxu0 0.0
      %4001 = vmatprep.subr.mxu0 0.0
      %4002 = vmatpush1.msra.mxu0 0.0
      %4003 = vmatprep.subr.mxu0 0.0
      %4004 = vmatpush1.msra.mxu0 0.0
      %4005 = vmatprep.subr.mxu0 0.0
      %4006 = vmatpush1.msra.mxu0 0.0
      %4007 = vmatprep.subr.mxu0 0.0
      %4008 = vmatpush1.msra.mxu0 0.0
      %4009 = vmatprep.subr.mxu0 0.0
      %4010 = vmatpush1.msra.mxu0 0.0
      %4011 = vmatprep.subr.mxu0 0.0
      %4012 = vmatpush1.msra.mxu0 0.0
      %4013 = vmatprep.subr.mxu0 0.0
      %4014 = vmatpush1.msra.mxu0 0.0
      %4015 = vmatprep.subr.mxu0 0.0
      %4016 = vmatpush1.msra.mxu0 0.0
      %4017 = vmatprep.subr.mxu0 0.0
      %4018 = vmatpush1.msra.mxu0 0.0
      %4019 = vmatprep.subr.mxu0 0.0
      %4020 = vmatpush1.msra.mxu0 0.0
      %4021 = vmatprep.subr.mxu0 0.0
      %4022 = vmatpush1.msra.mxu0 0.0
      %4023 = vmatprep.subr.mxu0 0.0
      %4024 = vmatpush1.msra.mxu0 0.0
      %4025 = vmatprep.subr.mxu0 0.0
      %4026 = vmatpush1.msra.mxu0 0.0
      %4027 = vmatprep.subr.mxu0 0.0
      %4028 = vmatpush1.msra.mxu0 0.0
      %4029 = vmatprep.subr.mxu0 0.0
      %4030 = vmatpush1.msra.mxu0 0.0
      %4031 = vmatprep.subr.mxu0 0.0
      %4032 = vmatpush1.msra.mxu0 0.0
      %4033 = vmatprep.subr.mxu0 0.0
      %4034 = vmatpush1.msra.mxu0 0.0
      %4035 = vmatprep.subr.mxu0 0.0
      %4036 = vmatpush1.msra.mxu0 0.0
      %4037 = vmatprep.subr.mxu0 0.0
      %4038 = vmatpush1.msra.mxu0 0.0
      %4039 = vmatprep.subr.mxu0 0.0
      %4040 = vmatpush1.msra.mxu0 0.0
      %4041 = vmatprep.subr.mxu0 0.0
      %4042 = vmatpush1.msra.mxu0 0.0
      %4043 = vmatprep.subr.mxu0 0.0
      %4044 = vmatpush1.msra.mxu0 0.0
      %4045 = vmatprep.mubr.f32.mxu0 0.0
      %4046 = vmatmul.mubr.f32.gmra.mrb[0].mxu0 %v3979
      %v4047 = vpop.f32.mrb[0].mxu0
      %v4048 = vadd.f32 0.0, %v4047
      %v4049 = vpop.f32.mrb[0].mxu0
      %4050 = vdwg.mxu0
      %v4051 = vmax.f32 %v4048, -3.0
      %v4052 = vmin.f32 %v4051, 3.0
      %v4054 = vsel %vm897, %v4052, 0
      %4056 = vmatprep.subr.mxu0 0.0
      %4057 = vmatpush1.msra.mxu0 %v3870
      %4058 = vmatprep.subr.mxu0 0.0
      %4059 = vmatpush1.msra.mxu0 %v3871
      %4060 = vmatprep.subr.mxu0 0.0
      %4061 = vmatpush1.msra.mxu0 %v3872
      %4062 = vmatprep.subr.mxu0 0.0
      %4063 = vmatpush1.msra.mxu0 %v3873
      %4064 = vmatprep.subr.mxu0 0.0
      %4065 = vmatpush1.msra.mxu0 0.0
      %4066 = vmatprep.subr.mxu0 0.0
      %4067 = vmatpush1.msra.mxu0 0.0
      %4068 = vmatprep.subr.mxu0 0.0
      %4069 = vmatpush1.msra.mxu0 0.0
      %4070 = vmatprep.subr.mxu0 0.0
      %4071 = vmatpush1.msra.mxu0 0.0
      %4072 = vmatprep.subr.mxu0 0.0
      %4073 = vmatpush1.msra.mxu0 0.0
      %4074 = vmatprep.subr.mxu0 0.0
      %4075 = vmatpush1.msra.mxu0 0.0
      %4076 = vmatprep.subr.mxu0 0.0
      %4077 = vmatpush1.msra.mxu0 0.0
      %4078 = vmatprep.subr.mxu0 0.0
      %4079 = vmatpush1.msra.mxu0 0.0
      %4080 = vmatprep.subr.mxu0 0.0
      %4081 = vmatpush1.msra.mxu0 0.0
      %4082 = vmatprep.subr.mxu0 0.0
      %4083 = vmatpush1.msra.mxu0 0.0
      %4084 = vmatprep.subr.mxu0 0.0
      %4085 = vmatpush1.msra.mxu0 0.0
      %4086 = vmatprep.subr.mxu0 0.0
      %4087 = vmatpush1.msra.mxu0 0.0
      %4088 = vmatprep.subr.mxu0 0.0
      %4089 = vmatpush1.msra.mxu0 0.0
      %4090 = vmatprep.subr.mxu0 0.0
      %4091 = vmatpush1.msra.mxu0 0.0
      %4092 = vmatprep.subr.mxu0 0.0
      %4093 = vmatpush1.msra.mxu0 0.0
      %4094 = vmatprep.subr.mxu0 0.0
      %4095 = vmatpush1.msra.mxu0 0.0
      %4096 = vmatprep.subr.mxu0 0.0
      %4097 = vmatpush1.msra.mxu0 0.0
      %4098 = vmatprep.subr.mxu0 0.0
      %4099 = vmatpush1.msra.mxu0 0.0
      %4100 = vmatprep.subr.mxu0 0.0
      %4101 = vmatpush1.msra.mxu0 0.0
      %4102 = vmatprep.subr.mxu0 0.0
      %4103 = vmatpush1.msra.mxu0 0.0
      %4104 = vmatprep.subr.mxu0 0.0
      %4105 = vmatpush1.msra.mxu0 0.0
      %4106 = vmatprep.subr.mxu0 0.0
      %4107 = vmatpush1.msra.mxu0 0.0
      %4108 = vmatprep.subr.mxu0 0.0
      %4109 = vmatpush1.msra.mxu0 0.0
      %4110 = vmatprep.subr.mxu0 0.0
      %4111 = vmatpush1.msra.mxu0 0.0
      %4112 = vmatprep.subr.mxu0 0.0
      %4113 = vmatpush1.msra.mxu0 0.0
      %4114 = vmatprep.subr.mxu0 0.0
      %4115 = vmatpush1.msra.mxu0 0.0
      %4116 = vmatprep.subr.mxu0 0.0
      %4117 = vmatpush1.msra.mxu0 0.0
      %4118 = vmatprep.subr.mxu0 0.0
      %4119 = vmatpush1.msra.mxu0 0.0
      %4120 = vmatprep.mubr.f32.mxu0 0.0
      %4121 = vmatmul.mubr.f32.gmra.mrb[0].mxu0 %v4054
      %v4122 = vpop.f32.mrb[0].mxu0
      %v4123 = vadd.f32 0.0, %v4122
      %v4124 = vpop.f32.mrb[0].mxu0
      %4125 = vdwg.mxu0
      %v4127 = vrot.slane %v4123, 6
      %v4129 = vadd.f32 %v3861, %v4127
      %v4130 = vxor.u32 %v4129, 2147483648
      %v4131 = vmul.f32 %v4130, 1.442695
      %v4132 = vpow.pop %v4131
      %v4133 = vadd.f32 %v4132, 1.0
      %v4134 = vrcp.pop %v4133
      %v4135 = vmul.f32 1.0, %v4134
      %v4136 = vtanh.pop %v4129
      %v4138 = vrot.slane %v3969, 6
      %v4140 = vmul.f32 %v4135, %v4138
      %4142 = vrot.lane.b32.xlu0 %v4136, 64
      %v4143 = vpop.permute.xlu0 %4142
      %v4145 = vmul.f32 %v4135, %v4143
      %4147 = vrot.lane.b32.xlu0 %v4145, 32
      %v4148 = vpop.permute.xlu0 %4147
      %v4150 = vadd.f32 %v4140, %v4148
      %v4151 = vmax.f32 %v4150, -3.0
      %v4152 = vmin.f32 %v4151, 3.0
      %v4153 = vtanh.pop %v4152
      %4155 = vrot.lane.b32.xlu0 %v4153, 64
      %v4156 = vpop.permute.xlu0 %4155
      %v4158 = vmul.f32 %v4135, %v4156
      %v4160 = vrot.slane %v4158, 2
      %4161 = vrot.lane.b32.xlu0 %v4160, 32
      %v4162 = vpop.permute.xlu0 %4161
      %v4163 = vsel %vm897, %v4162, 0
      %4165 = vmatprep.subr.mxu0 0.0
      %4166 = vmatpush1.msra.mxu0 %v3875
      %4167 = vmatprep.subr.mxu0 0.0
      %4168 = vmatpush1.msra.mxu0 %v3876
      %4169 = vmatprep.subr.mxu0 0.0
      %4170 = vmatpush1.msra.mxu0 %v3877
      %4171 = vmatprep.subr.mxu0 0.0
      %4172 = vmatpush1.msra.mxu0 %v3878
      %4173 = vmatprep.subr.mxu0 0.0
      %4174 = vmatpush1.msra.mxu0 0.0
      %4175 = vmatprep.subr.mxu0 0.0
      %4176 = vmatpush1.msra.mxu0 0.0
      %4177 = vmatprep.subr.mxu0 0.0
      %4178 = vmatpush1.msra.mxu0 0.0
      %4179 = vmatprep.subr.mxu0 0.0
      %4180 = vmatpush1.msra.mxu0 0.0
      %4181 = vmatprep.subr.mxu0 0.0
      %4182 = vmatpush1.msra.mxu0 0.0
      %4183 = vmatprep.subr.mxu0 0.0
      %4184 = vmatpush1.msra.mxu0 0.0
      %4185 = vmatprep.subr.mxu0 0.0
      %4186 = vmatpush1.msra.mxu0 0.0
      %4187 = vmatprep.subr.mxu0 0.0
      %4188 = vmatpush1.msra.mxu0 0.0
      %4189 = vmatprep.subr.mxu0 0.0
      %4190 = vmatpush1.msra.mxu0 0.0
      %4191 = vmatprep.subr.mxu0 0.0
      %4192 = vmatpush1.msra.mxu0 0.0
      %4193 = vmatprep.subr.mxu0 0.0
      %4194 = vmatpush1.msra.mxu0 0.0
      %4195 = vmatprep.subr.mxu0 0.0
      %4196 = vmatpush1.msra.mxu0 0.0
      %4197 = vmatprep.subr.mxu0 0.0
      %4198 = vmatpush1.msra.mxu0 0.0
      %4199 = vmatprep.subr.mxu0 0.0
      %4200 = vmatpush1.msra.mxu0 0.0
      %4201 = vmatprep.subr.mxu0 0.0
      %4202 = vmatpush1.msra.mxu0 0.0
      %4203 = vmatprep.subr.mxu0 0.0
      %4204 = vmatpush1.msra.mxu0 0.0
      %4205 = vmatprep.subr.mxu0 0.0
      %4206 = vmatpush1.msra.mxu0 0.0
      %4207 = vmatprep.subr.mxu0 0.0
      %4208 = vmatpush1.msra.mxu0 0.0
      %4209 = vmatprep.subr.mxu0 0.0
      %4210 = vmatpush1.msra.mxu0 0.0
      %4211 = vmatprep.subr.mxu0 0.0
      %4212 = vmatpush1.msra.mxu0 0.0
      %4213 = vmatprep.subr.mxu0 0.0
      %4214 = vmatpush1.msra.mxu0 0.0
      %4215 = vmatprep.subr.mxu0 0.0
      %4216 = vmatpush1.msra.mxu0 0.0
      %4217 = vmatprep.subr.mxu0 0.0
      %4218 = vmatpush1.msra.mxu0 0.0
      %4219 = vmatprep.subr.mxu0 0.0
      %4220 = vmatpush1.msra.mxu0 0.0
      %4221 = vmatprep.subr.mxu0 0.0
      %4222 = vmatpush1.msra.mxu0 0.0
      %4223 = vmatprep.subr.mxu0 0.0
      %4224 = vmatpush1.msra.mxu0 0.0
      %4225 = vmatprep.subr.mxu0 0.0
      %4226 = vmatpush1.msra.mxu0 0.0
      %4227 = vmatprep.subr.mxu0 0.0
      %4228 = vmatpush1.msra.mxu0 0.0
      %4229 = vmatprep.mubr.f32.mxu0 0.0
      %4230 = vmatmul.mubr.f32.gmra.mrb[0].mxu0 %v4163
      %v4231 = vpop.f32.mrb[0].mxu0
      %v4232 = vadd.f32 0.0, %v4231
      %v4233 = vpop.f32.mrb[0].mxu0
      %4234 = vdwg.mxu0
      %v4235 = vmax.f32 %v4232, -3.0
      %v4236 = vmin.f32 %v4235, 3.0
      %v4238 = vsel %vm897, %v4236, 0
      %4240 = vmatprep.subr.mxu0 0.0
      %4241 = vmatpush1.msra.mxu0 %v3870
      %4242 = vmatprep.subr.mxu0 0.0
      %4243 = vmatpush1.msra.mxu0 %v3871
      %4244 = vmatprep.subr.mxu0 0.0
      %4245 = vmatpush1.msra.mxu0 %v3872
      %4246 = vmatprep.subr.mxu0 0.0
      %4247 = vmatpush1.msra.mxu0 %v3873
      %4248 = vmatprep.subr.mxu0 0.0
      %4249 = vmatpush1.msra.mxu0 0.0
      %4250 = vmatprep.subr.mxu0 0.0
      %4251 = vmatpush1.msra.mxu0 0.0
      %4252 = vmatprep.subr.mxu0 0.0
      %4253 = vmatpush1.msra.mxu0 0.0
      %4254 = vmatprep.subr.mxu0 0.0
      %4255 = vmatpush1.msra.mxu0 0.0
      %4256 = vmatprep.subr.mxu0 0.0
      %4257 = vmatpush1.msra.mxu0 0.0
      %4258 = vmatprep.subr.mxu0 0.0
      %4259 = vmatpush1.msra.mxu0 0.0
      %4260 = vmatprep.subr.mxu0 0.0
      %4261 = vmatpush1.msra.mxu0 0.0
      %4262 = vmatprep.subr.mxu0 0.0
      %4263 = vmatpush1.msra.mxu0 0.0
      %4264 = vmatprep.subr.mxu0 0.0
      %4265 = vmatpush1.msra.mxu0 0.0
      %4266 = vmatprep.subr.mxu0 0.0
      %4267 = vmatpush1.msra.mxu0 0.0
      %4268 = vmatprep.subr.mxu0 0.0
      %4269 = vmatpush1.msra.mxu0 0.0
      %4270 = vmatprep.subr.mxu0 0.0
      %4271 = vmatpush1.msra.mxu0 0.0
      %4272 = vmatprep.subr.mxu0 0.0
      %4273 = vmatpush1.msra.mxu0 0.0
      %4274 = vmatprep.subr.mxu0 0.0
      %4275 = vmatpush1.msra.mxu0 0.0
      %4276 = vmatprep.subr.mxu0 0.0
      %4277 = vmatpush1.msra.mxu0 0.0
      %4278 = vmatprep.subr.mxu0 0.0
      %4279 = vmatpush1.msra.mxu0 0.0
      %4280 = vmatprep.subr.mxu0 0.0
      %4281 = vmatpush1.msra.mxu0 0.0
      %4282 = vmatprep.subr.mxu0 0.0
      %4283 = vmatpush1.msra.mxu0 0.0
      %4284 = vmatprep.subr.mxu0 0.0
      %4285 = vmatpush1.msra.mxu0 0.0
      %4286 = vmatprep.subr.mxu0 0.0
      %4287 = vmatpush1.msra.mxu0 0.0
      %4288 = vmatprep.subr.mxu0 0.0
      %4289 = vmatpush1.msra.mxu0 0.0
      %4290 = vmatprep.subr.mxu0 0.0
      %4291 = vmatpush1.msra.mxu0 0.0
      %4292 = vmatprep.subr.mxu0 0.0
      %4293 = vmatpush1.msra.mxu0 0.0
      %4294 = vmatprep.subr.mxu0 0.0
      %4295 = vmatpush1.msra.mxu0 0.0
      %4296 = vmatprep.subr.mxu0 0.0
      %4297 = vmatpush1.msra.mxu0 0.0
      %4298 = vmatprep.subr.mxu0 0.0
      %4299 = vmatpush1.msra.mxu0 0.0
      %4300 = vmatprep.subr.mxu0 0.0
      %4301 = vmatpush1.msra.mxu0 0.0
      %4302 = vmatprep.subr.mxu0 0.0
      %4303 = vmatpush1.msra.mxu0 0.0
      %4304 = vmatprep.mubr.f32.mxu0 0.0
      %4305 = vmatmul.mubr.f32.gmra.mrb[0].mxu0 %v4238
      %v4306 = vpop.f32.mrb[0].mxu0
      %v4307 = vadd.f32 0.0, %v4306
      %v4308 = vpop.f32.mrb[0].mxu0
      %4309 = vdwg.mxu0
      %v4311 = vrot.slane %v4307, 4
      %v4313 = vadd.f32 %v3861, %v4311
      %v4314 = vxor.u32 %v4313, 2147483648
      %v4315 = vmul.f32 %v4314, 1.442695
      %v4316 = vpow.pop %v4315
      %v4317 = vadd.f32 %v4316, 1.0
      %v4318 = vrcp.pop %v4317
      %v4319 = vmul.f32 1.0, %v4318
      %v4320 = vtanh.pop %v4313
      %v4322 = vrot.slane %v4152, 6
      %v4324 = vmul.f32 %v4319, %v4322
      %4326 = vrot.lane.b32.xlu0 %v4320, 64
      %v4327 = vpop.permute.xlu0 %4326
      %v4329 = vmul.f32 %v4319, %v4327
      %4331 = vrot.lane.b32.xlu0 %v4329, 32
      %v4332 = vpop.permute.xlu0 %4331
      %v4334 = vadd.f32 %v4324, %v4332
      %v4335 = vmax.f32 %v4334, -3.0
      %v4336 = vmin.f32 %v4335, 3.0
      %v4337 = vtanh.pop %v4336
      %4339 = vrot.lane.b32.xlu0 %v4337, 64
      %v4340 = vpop.permute.xlu0 %4339
      %v4342 = vmul.f32 %v4319, %v4340
      %v4344 = vrot.slane %v4342, 4
      %4345 = vrot.lane.b32.xlu0 %v4344, 32
      %v4346 = vpop.permute.xlu0 %4345
      %v4347 = vsel %vm897, %v4346, 0
      %4349 = vmatprep.subr.mxu0 0.0
      %4350 = vmatpush1.msra.mxu0 %v3875
      %4351 = vmatprep.subr.mxu0 0.0
      %4352 = vmatpush1.msra.mxu0 %v3876
      %4353 = vmatprep.subr.mxu0 0.0
      %4354 = vmatpush1.msra.mxu0 %v3877
      %4355 = vmatprep.subr.mxu0 0.0
      %4356 = vmatpush1.msra.mxu0 %v3878
      %4357 = vmatprep.subr.mxu0 0.0
      %4358 = vmatpush1.msra.mxu0 0.0
      %4359 = vmatprep.subr.mxu0 0.0
      %4360 = vmatpush1.msra.mxu0 0.0
      %4361 = vmatprep.subr.mxu0 0.0
      %4362 = vmatpush1.msra.mxu0 0.0
      %4363 = vmatprep.subr.mxu0 0.0
      %4364 = vmatpush1.msra.mxu0 0.0
      %4365 = vmatprep.subr.mxu0 0.0
      %4366 = vmatpush1.msra.mxu0 0.0
      %4367 = vmatprep.subr.mxu0 0.0
      %4368 = vmatpush1.msra.mxu0 0.0
      %4369 = vmatprep.subr.mxu0 0.0
      %4370 = vmatpush1.msra.mxu0 0.0
      %4371 = vmatprep.subr.mxu0 0.0
      %4372 = vmatpush1.msra.mxu0 0.0
      %4373 = vmatprep.subr.mxu0 0.0
      %4374 = vmatpush1.msra.mxu0 0.0
      %4375 = vmatprep.subr.mxu0 0.0
      %4376 = vmatpush1.msra.mxu0 0.0
      %4377 = vmatprep.subr.mxu0 0.0
      %4378 = vmatpush1.msra.mxu0 0.0
      %4379 = vmatprep.subr.mxu0 0.0
      %4380 = vmatpush1.msra.mxu0 0.0
      %4381 = vmatprep.subr.mxu0 0.0
      %4382 = vmatpush1.msra.mxu0 0.0
      %4383 = vmatprep.subr.mxu0 0.0
      %4384 = vmatpush1.msra.mxu0 0.0
      %4385 = vmatprep.subr.mxu0 0.0
      %4386 = vmatpush1.msra.mxu0 0.0
      %4387 = vmatprep.subr.mxu0 0.0
      %4388 = vmatpush1.msra.mxu0 0.0
      %4389 = vmatprep.subr.mxu0 0.0
      %4390 = vmatpush1.msra.mxu0 0.0
      %4391 = vmatprep.subr.mxu0 0.0
      %4392 = vmatpush1.msra.mxu0 0.0
      %4393 = vmatprep.subr.mxu0 0.0
      %4394 = vmatpush1.msra.mxu0 0.0
      %4395 = vmatprep.subr.mxu0 0.0
      %4396 = vmatpush1.msra.mxu0 0.0
      %4397 = vmatprep.subr.mxu0 0.0
      %4398 = vmatpush1.msra.mxu0 0.0
      %4399 = vmatprep.subr.mxu0 0.0
      %4400 = vmatpush1.msra.mxu0 0.0
      %4401 = vmatprep.subr.mxu0 0.0
      %4402 = vmatpush1.msra.mxu0 0.0
      %4403 = vmatprep.subr.mxu0 0.0
      %4404 = vmatpush1.msra.mxu0 0.0
      %4405 = vmatprep.subr.mxu0 0.0
      %4406 = vmatpush1.msra.mxu0 0.0
      %4407 = vmatprep.subr.mxu0 0.0
      %4408 = vmatpush1.msra.mxu0 0.0
      %4409 = vmatprep.subr.mxu0 0.0
      %4410 = vmatpush1.msra.mxu0 0.0
      %4411 = vmatprep.subr.mxu0 0.0
      %4412 = vmatpush1.msra.mxu0 0.0
      %4413 = vmatprep.mubr.f32.mxu0 0.0
      %4414 = vmatmul.mubr.f32.gmra.mrb[0].mxu0 %v4347
      %v4415 = vpop.f32.mrb[0].mxu0
      %v4416 = vadd.f32 0.0, %v4415
      %v4417 = vpop.f32.mrb[0].mxu0
      %4418 = vdwg.mxu0
      %v4419 = vmax.f32 %v4416, -3.0
      %v4420 = vmin.f32 %v4419, 3.0
      %v4422 = vsel %vm897, %v4420, 0
      %4424 = vmatprep.subr.mxu0 0.0
      %4425 = vmatpush1.msra.mxu0 %v3870
      %4426 = vmatprep.subr.mxu0 0.0
      %4427 = vmatpush1.msra.mxu0 %v3871
      %4428 = vmatprep.subr.mxu0 0.0
      %4429 = vmatpush1.msra.mxu0 %v3872
      %4430 = vmatprep.subr.mxu0 0.0
      %4431 = vmatpush1.msra.mxu0 %v3873
      %4432 = vmatprep.subr.mxu0 0.0
      %4433 = vmatpush1.msra.mxu0 0.0
      %4434 = vmatprep.subr.mxu0 0.0
      %4435 = vmatpush1.msra.mxu0 0.0
      %4436 = vmatprep.subr.mxu0 0.0
      %4437 = vmatpush1.msra.mxu0 0.0
      %4438 = vmatprep.subr.mxu0 0.0
      %4439 = vmatpush1.msra.mxu0 0.0
      %4440 = vmatprep.subr.mxu0 0.0
      %4441 = vmatpush1.msra.mxu0 0.0
      %4442 = vmatprep.subr.mxu0 0.0
      %4443 = vmatpush1.msra.mxu0 0.0
      %4444 = vmatprep.subr.mxu0 0.0
      %4445 = vmatpush1.msra.mxu0 0.0
      %4446 = vmatprep.subr.mxu0 0.0
      %4447 = vmatpush1.msra.mxu0 0.0
      %4448 = vmatprep.subr.mxu0 0.0
      %4449 = vmatpush1.msra.mxu0 0.0
      %4450 = vmatprep.subr.mxu0 0.0
      %4451 = vmatpush1.msra.mxu0 0.0
      %4452 = vmatprep.subr.mxu0 0.0
      %4453 = vmatpush1.msra.mxu0 0.0
      %4454 = vmatprep.subr.mxu0 0.0
      %4455 = vmatpush1.msra.mxu0 0.0
      %4456 = vmatprep.subr.mxu0 0.0
      %4457 = vmatpush1.msra.mxu0 0.0
      %4458 = vmatprep.subr.mxu0 0.0
      %4459 = vmatpush1.msra.mxu0 0.0
      %4460 = vmatprep.subr.mxu0 0.0
      %4461 = vmatpush1.msra.mxu0 0.0
      %4462 = vmatprep.subr.mxu0 0.0
      %4463 = vmatpush1.msra.mxu0 0.0
      %4464 = vmatprep.subr.mxu0 0.0
      %4465 = vmatpush1.msra.mxu0 0.0
      %4466 = vmatprep.subr.mxu0 0.0
      %4467 = vmatpush1.msra.mxu0 0.0
      %4468 = vmatprep.subr.mxu0 0.0
      %4469 = vmatpush1.msra.mxu0 0.0
      %4470 = vmatprep.subr.mxu0 0.0
      %4471 = vmatpush1.msra.mxu0 0.0
      %4472 = vmatprep.subr.mxu0 0.0
      %4473 = vmatpush1.msra.mxu0 0.0
      %4474 = vmatprep.subr.mxu0 0.0
      %4475 = vmatpush1.msra.mxu0 0.0
      %4476 = vmatprep.subr.mxu0 0.0
      %4477 = vmatpush1.msra.mxu0 0.0
      %4478 = vmatprep.subr.mxu0 0.0
      %4479 = vmatpush1.msra.mxu0 0.0
      %4480 = vmatprep.subr.mxu0 0.0
      %4481 = vmatpush1.msra.mxu0 0.0
      %4482 = vmatprep.subr.mxu0 0.0
      %4483 = vmatpush1.msra.mxu0 0.0
      %4484 = vmatprep.subr.mxu0 0.0
      %4485 = vmatpush1.msra.mxu0 0.0
      %4486 = vmatprep.subr.mxu0 0.0
      %4487 = vmatpush1.msra.mxu0 0.0
      %4488 = vmatprep.mubr.f32.mxu0 0.0
      %4489 = vmatmul.mubr.f32.gmra.mrb[0].mxu0 %v4422
      %v4490 = vpop.f32.mrb[0].mxu0
      %v4491 = vadd.f32 0.0, %v4490
      %v4492 = vpop.f32.mrb[0].mxu0
      %4493 = vdwg.mxu0
      %v4495 = vrot.slane %v4491, 2
      %v4497 = vadd.f32 %v3861, %v4495
      %v4498 = vxor.u32 %v4497, 2147483648
      %v4499 = vmul.f32 %v4498, 1.442695
      %v4500 = vpow.pop %v4499
      %v4501 = vadd.f32 %v4500, 1.0
      %v4502 = vrcp.pop %v4501
      %v4503 = vmul.f32 1.0, %v4502
      %v4504 = vtanh.pop %v4497
      %v4506 = vrot.slane %v4336, 6
      %v4508 = vmul.f32 %v4503, %v4506
      %4510 = vrot.lane.b32.xlu0 %v4504, 64
      %v4511 = vpop.permute.xlu0 %4510
      %v4513 = vmul.f32 %v4503, %v4511
      %4515 = vrot.lane.b32.xlu0 %v4513, 32
      %v4516 = vpop.permute.xlu0 %4515
      %v4518 = vadd.f32 %v4508, %v4516
      %v4519 = vmax.f32 %v4518, -3.0
      %v4520 = vmin.f32 %v4519, 3.0
      %v4521 = vtanh.pop %v4520
      %4523 = vrot.lane.b32.xlu0 %v4521, 64
      %v4524 = vpop.permute.xlu0 %4523
      %v4526 = vmul.f32 %v4503, %v4524
      %v4528 = vrot.slane %v4526, 6
      %4529 = vrot.lane.b32.xlu0 %v4528, 32
      %v4530 = vpop.permute.xlu0 %4529
      %v4531 = vsel %vm897, %v4530, 0
      %4533 = vmatprep.subr.mxu0 0.0
      %4534 = vmatpush1.msra.mxu0 %v3875
      %4535 = vmatprep.subr.mxu0 0.0
      %4536 = vmatpush1.msra.mxu0 %v3876
      %4537 = vmatprep.subr.mxu0 0.0
      %4538 = vmatpush1.msra.mxu0 %v3877
      %4539 = vmatprep.subr.mxu0 0.0
      %4540 = vmatpush1.msra.mxu0 %v3878
      %4541 = vmatprep.subr.mxu0 0.0
      %4542 = vmatpush1.msra.mxu0 0.0
      %4543 = vmatprep.subr.mxu0 0.0
      %4544 = vmatpush1.msra.mxu0 0.0
      %4545 = vmatprep.subr.mxu0 0.0
      %4546 = vmatpush1.msra.mxu0 0.0
      %4547 = vmatprep.subr.mxu0 0.0
      %4548 = vmatpush1.msra.mxu0 0.0
      %4549 = vmatprep.subr.mxu0 0.0
      %4550 = vmatpush1.msra.mxu0 0.0
      %4551 = vmatprep.subr.mxu0 0.0
      %4552 = vmatpush1.msra.mxu0 0.0
      %4553 = vmatprep.subr.mxu0 0.0
      %4554 = vmatpush1.msra.mxu0 0.0
      %4555 = vmatprep.subr.mxu0 0.0
      %4556 = vmatpush1.msra.mxu0 0.0
      %4557 = vmatprep.subr.mxu0 0.0
      %4558 = vmatpush1.msra.mxu0 0.0
      %4559 = vmatprep.subr.mxu0 0.0
      %4560 = vmatpush1.msra.mxu0 0.0
      %4561 = vmatprep.subr.mxu0 0.0
      %4562 = vmatpush1.msra.mxu0 0.0
      %4563 = vmatprep.subr.mxu0 0.0
      %4564 = vmatpush1.msra.mxu0 0.0
      %4565 = vmatprep.subr.mxu0 0.0
      %4566 = vmatpush1.msra.mxu0 0.0
      %4567 = vmatprep.subr.mxu0 0.0
      %4568 = vmatpush1.msra.mxu0 0.0
      %4569 = vmatprep.subr.mxu0 0.0
      %4570 = vmatpush1.msra.mxu0 0.0
      %4571 = vmatprep.subr.mxu0 0.0
      %4572 = vmatpush1.msra.mxu0 0.0
      %4573 = vmatprep.subr.mxu0 0.0
      %4574 = vmatpush1.msra.mxu0 0.0
      %4575 = vmatprep.subr.mxu0 0.0
      %4576 = vmatpush1.msra.mxu0 0.0
      %4577 = vmatprep.subr.mxu0 0.0
      %4578 = vmatpush1.msra.mxu0 0.0
      %4579 = vmatprep.subr.mxu0 0.0
      %4580 = vmatpush1.msra.mxu0 0.0
      %4581 = vmatprep.subr.mxu0 0.0
      %4582 = vmatpush1.msra.mxu0 0.0
      %4583 = vmatprep.subr.mxu0 0.0
      %4584 = vmatpush1.msra.mxu0 0.0
      %4585 = vmatprep.subr.mxu0 0.0
      %4586 = vmatpush1.msra.mxu0 0.0
      %4587 = vmatprep.subr.mxu0 0.0
      %4588 = vmatpush1.msra.mxu0 0.0
      %4589 = vmatprep.subr.mxu0 0.0
      %4590 = vmatpush1.msra.mxu0 0.0
      %4591 = vmatprep.subr.mxu0 0.0
      %4592 = vmatpush1.msra.mxu0 0.0
      %4593 = vmatprep.subr.mxu0 0.0
      %4594 = vmatpush1.msra.mxu0 0.0
      %4595 = vmatprep.subr.mxu0 0.0
      %4596 = vmatpush1.msra.mxu0 0.0
      %4597 = vmatprep.mubr.f32.mxu0 0.0
      %4598 = vmatmul.mubr.f32.gmra.mrb[0].mxu0 %v4531
      %v4599 = vpop.f32.mrb[0].mxu0
      %v4600 = vadd.f32 0.0, %v4599
      %v4601 = vpop.f32.mrb[0].mxu0
      %4602 = vdwg.mxu0
      %v4603 = vmax.f32 %v4600, -3.0
      %v4604 = vmin.f32 %v4603, 3.0
      %v4606 = vsel %vm897, %v4604, 0
      %4608 = vmatprep.subr.mxu0 0.0
      %4609 = vmatpush1.msra.mxu0 %v3870
      %4610 = vmatprep.subr.mxu0 0.0
      %4611 = vmatpush1.msra.mxu0 %v3871
      %4612 = vmatprep.subr.mxu0 0.0
      %4613 = vmatpush1.msra.mxu0 %v3872
      %4614 = vmatprep.subr.mxu0 0.0
      %4615 = vmatpush1.msra.mxu0 %v3873
      %4616 = vmatprep.subr.mxu0 0.0
      %4617 = vmatpush1.msra.mxu0 0.0
      %4618 = vmatprep.subr.mxu0 0.0
      %4619 = vmatpush1.msra.mxu0 0.0
      %4620 = vmatprep.subr.mxu0 0.0
      %4621 = vmatpush1.msra.mxu0 0.0
      %4622 = vmatprep.subr.mxu0 0.0
      %4623 = vmatpush1.msra.mxu0 0.0
      %4624 = vmatprep.subr.mxu0 0.0
      %4625 = vmatpush1.msra.mxu0 0.0
      %4626 = vmatprep.subr.mxu0 0.0
      %4627 = vmatpush1.msra.mxu0 0.0
      %4628 = vmatprep.subr.mxu0 0.0
      %4629 = vmatpush1.msra.mxu0 0.0
      %4630 = vmatprep.subr.mxu0 0.0
      %4631 = vmatpush1.msra.mxu0 0.0
      %4632 = vmatprep.subr.mxu0 0.0
      %4633 = vmatpush1.msra.mxu0 0.0
      %4634 = vmatprep.subr.mxu0 0.0
      %4635 = vmatpush1.msra.mxu0 0.0
      %4636 = vmatprep.subr.mxu0 0.0
      %4637 = vmatpush1.msra.mxu0 0.0
      %4638 = vmatprep.subr.mxu0 0.0
      %4639 = vmatpush1.msra.mxu0 0.0
      %4640 = vmatprep.subr.mxu0 0.0
      %4641 = vmatpush1.msra.mxu0 0.0
      %4642 = vmatprep.subr.mxu0 0.0
      %4643 = vmatpush1.msra.mxu0 0.0
      %4644 = vmatprep.subr.mxu0 0.0
      %4645 = vmatpush1.msra.mxu0 0.0
      %4646 = vmatprep.subr.mxu0 0.0
      %4647 = vmatpush1.msra.mxu0 0.0
      %4648 = vmatprep.subr.mxu0 0.0
      %4649 = vmatpush1.msra.mxu0 0.0
      %4650 = vmatprep.subr.mxu0 0.0
      %4651 = vmatpush1.msra.mxu0 0.0
      %4652 = vmatprep.subr.mxu0 0.0
      %4653 = vmatpush1.msra.mxu0 0.0
      %4654 = vmatprep.subr.mxu0 0.0
      %4655 = vmatpush1.msra.mxu0 0.0
      %4656 = vmatprep.subr.mxu0 0.0
      %4657 = vmatpush1.msra.mxu0 0.0
      %4658 = vmatprep.subr.mxu0 0.0
      %4659 = vmatpush1.msra.mxu0 0.0
      %4660 = vmatprep.subr.mxu0 0.0
      %4661 = vmatpush1.msra.mxu0 0.0
      %4662 = vmatprep.subr.mxu0 0.0
      %4663 = vmatpush1.msra.mxu0 0.0
      %4664 = vmatprep.subr.mxu0 0.0
      %4665 = vmatpush1.msra.mxu0 0.0
      %4666 = vmatprep.subr.mxu0 0.0
      %4667 = vmatpush1.msra.mxu0 0.0
      %4668 = vmatprep.subr.mxu0 0.0
      %4669 = vmatpush1.msra.mxu0 0.0
      %4670 = vmatprep.subr.mxu0 0.0
      %4671 = vmatpush1.msra.mxu0 0.0
      %4672 = vmatprep.mubr.f32.mxu0 0.0
      %4673 = vmatmul.mubr.f32.gmra.mrb[0].mxu0 %v4606
      %v4674 = vpop.f32.mrb[0].mxu0
      %v4675 = vadd.f32 0.0, %v4674
      %v4676 = vpop.f32.mrb[0].mxu0
      %4677 = vdwg.mxu0
      %v4678 = vadd.f32 %v3866, %v4675
      %v4679 = vxor.u32 %v4678, 2147483648
      %v4680 = vmul.f32 %v4679, 1.442695
      %v4681 = vpow.pop %v4680
      %v4682 = vadd.f32 %v4681, 1.0
      %v4683 = vrcp.pop %v4682
      %v4684 = vmul.f32 1.0, %v4683
      %v4685 = vtanh.pop %v4678
      %v4687 = vrot.slane %v4520, 6
      %v4689 = vmul.f32 %v4684, %v4687
      %4691 = vrot.lane.b32.xlu0 %v4685, 64
      %v4692 = vpop.permute.xlu0 %4691
      %v4694 = vmul.f32 %v4684, %v4692
      %4696 = vrot.lane.b32.xlu0 %v4694, 32
      %v4697 = vpop.permute.xlu0 %4696
      %v4699 = vadd.f32 %v4689, %v4697
      %v4700 = vmax.f32 %v4699, -3.0
      %v4701 = vmin.f32 %v4700, 3.0
      %v4702 = vtanh.pop %v4701
      %4704 = vrot.lane.b32.xlu0 %v4702, 64
      %v4705 = vpop.permute.xlu0 %4704
      %v4707 = vmul.f32 %v4684, %v4705
      %4709 = vrot.lane.b32.xlu0 %v4707, 32
      %v4710 = vpop.permute.xlu0 %4709
      %v4711 = vsel %vm897, %v4710, 0
      %4713 = vmatprep.subr.mxu0 0.0
      %4714 = vmatpush1.msra.mxu0 %v3875
      %4715 = vmatprep.subr.mxu0 0.0
      %4716 = vmatpush1.msra.mxu0 %v3876
      %4717 = vmatprep.subr.mxu0 0.0
      %4718 = vmatpush1.msra.mxu0 %v3877
      %4719 = vmatprep.subr.mxu0 0.0
      %4720 = vmatpush1.msra.mxu0 %v3878
      %4721 = vmatprep.subr.mxu0 0.0
      %4722 = vmatpush1.msra.mxu0 0.0
      %4723 = vmatprep.subr.mxu0 0.0
      %4724 = vmatpush1.msra.mxu0 0.0
      %4725 = vmatprep.subr.mxu0 0.0
      %4726 = vmatpush1.msra.mxu0 0.0
      %4727 = vmatprep.subr.mxu0 0.0
      %4728 = vmatpush1.msra.mxu0 0.0
      %4729 = vmatprep.subr.mxu0 0.0
      %4730 = vmatpush1.msra.mxu0 0.0
      %4731 = vmatprep.subr.mxu0 0.0
      %4732 = vmatpush1.msra.mxu0 0.0
      %4733 = vmatprep.subr.mxu0 0.0
      %4734 = vmatpush1.msra.mxu0 0.0
      %4735 = vmatprep.subr.mxu0 0.0
      %4736 = vmatpush1.msra.mxu0 0.0
      %4737 = vmatprep.subr.mxu0 0.0
      %4738 = vmatpush1.msra.mxu0 0.0
      %4739 = vmatprep.subr.mxu0 0.0
      %4740 = vmatpush1.msra.mxu0 0.0
      %4741 = vmatprep.subr.mxu0 0.0
      %4742 = vmatpush1.msra.mxu0 0.0
      %4743 = vmatprep.subr.mxu0 0.0
      %4744 = vmatpush1.msra.mxu0 0.0
      %4745 = vmatprep.subr.mxu0 0.0
      %4746 = vmatpush1.msra.mxu0 0.0
      %4747 = vmatprep.subr.mxu0 0.0
      %4748 = vmatpush1.msra.mxu0 0.0
      %4749 = vmatprep.subr.mxu0 0.0
      %4750 = vmatpush1.msra.mxu0 0.0
      %4751 = vmatprep.subr.mxu0 0.0
      %4752 = vmatpush1.msra.mxu0 0.0
      %4753 = vmatprep.subr.mxu0 0.0
      %4754 = vmatpush1.msra.mxu0 0.0
      %4755 = vmatprep.subr.mxu0 0.0
      %4756 = vmatpush1.msra.mxu0 0.0
      %4757 = vmatprep.subr.mxu0 0.0
      %4758 = vmatpush1.msra.mxu0 0.0
      %4759 = vmatprep.subr.mxu0 0.0
      %4760 = vmatpush1.msra.mxu0 0.0
      %4761 = vmatprep.subr.mxu0 0.0
      %4762 = vmatpush1.msra.mxu0 0.0
      %4763 = vmatprep.subr.mxu0 0.0
      %4764 = vmatpush1.msra.mxu0 0.0
      %4765 = vmatprep.subr.mxu0 0.0
      %4766 = vmatpush1.msra.mxu0 0.0
      %4767 = vmatprep.subr.mxu0 0.0
      %4768 = vmatpush1.msra.mxu0 0.0
      %4769 = vmatprep.subr.mxu0 0.0
      %4770 = vmatpush1.msra.mxu0 0.0
      %4771 = vmatprep.subr.mxu0 0.0
      %4772 = vmatpush1.msra.mxu0 0.0
      %4773 = vmatprep.subr.mxu0 0.0
      %4774 = vmatpush1.msra.mxu0 0.0
      %4775 = vmatprep.subr.mxu0 0.0
      %4776 = vmatpush1.msra.mxu0 0.0
      %4777 = vmatprep.mubr.f32.mxu0 0.0
      %4778 = vmatmul.mubr.f32.gmra.mrb[0].mxu0 %v4711
      %v4779 = vpop.f32.mrb[0].mxu0
      %v4780 = vadd.f32 0.0, %v4779
      %v4781 = vpop.f32.mrb[0].mxu0
      %4782 = vdwg.mxu0
      %v4783 = vmax.f32 %v4780, -3.0
      %v4784 = vmin.f32 %v4783, 3.0
      %v4786 = vsel %vm897, %v4784, 0
      %4788 = vmatprep.subr.mxu0 0.0
      %4789 = vmatpush1.msra.mxu0 %v3870
      %4790 = vmatprep.subr.mxu0 0.0
      %4791 = vmatpush1.msra.mxu0 %v3871
      %4792 = vmatprep.subr.mxu0 0.0
      %4793 = vmatpush1.msra.mxu0 %v3872
      %4794 = vmatprep.subr.mxu0 0.0
      %4795 = vmatpush1.msra.mxu0 %v3873
      %4796 = vmatprep.subr.mxu0 0.0
      %4797 = vmatpush1.msra.mxu0 0.0
      %4798 = vmatprep.subr.mxu0 0.0
      %4799 = vmatpush1.msra.mxu0 0.0
      %4800 = vmatprep.subr.mxu0 0.0
      %4801 = vmatpush1.msra.mxu0 0.0
      %4802 = vmatprep.subr.mxu0 0.0
      %4803 = vmatpush1.msra.mxu0 0.0
      %4804 = vmatprep.subr.mxu0 0.0
      %4805 = vmatpush1.msra.mxu0 0.0
      %4806 = vmatprep.subr.mxu0 0.0
      %4807 = vmatpush1.msra.mxu0 0.0
      %4808 = vmatprep.subr.mxu0 0.0
      %4809 = vmatpush1.msra.mxu0 0.0
      %4810 = vmatprep.subr.mxu0 0.0
      %4811 = vmatpush1.msra.mxu0 0.0
      %4812 = vmatprep.subr.mxu0 0.0
      %4813 = vmatpush1.msra.mxu0 0.0
      %4814 = vmatprep.subr.mxu0 0.0
      %4815 = vmatpush1.msra.mxu0 0.0
      %4816 = vmatprep.subr.mxu0 0.0
      %4817 = vmatpush1.msra.mxu0 0.0
      %4818 = vmatprep.subr.mxu0 0.0
      %4819 = vmatpush1.msra.mxu0 0.0
      %4820 = vmatprep.subr.mxu0 0.0
      %4821 = vmatpush1.msra.mxu0 0.0
      %4822 = vmatprep.subr.mxu0 0.0
      %4823 = vmatpush1.msra.mxu0 0.0
      %4824 = vmatprep.subr.mxu0 0.0
      %4825 = vmatpush1.msra.mxu0 0.0
      %4826 = vmatprep.subr.mxu0 0.0
      %4827 = vmatpush1.msra.mxu0 0.0
      %4828 = vmatprep.subr.mxu0 0.0
      %4829 = vmatpush1.msra.mxu0 0.0
      %4830 = vmatprep.subr.mxu0 0.0
      %4831 = vmatpush1.msra.mxu0 0.0
      %4832 = vmatprep.subr.mxu0 0.0
      %4833 = vmatpush1.msra.mxu0 0.0
      %4834 = vmatprep.subr.mxu0 0.0
      %4835 = vmatpush1.msra.mxu0 0.0
      %4836 = vmatprep.subr.mxu0 0.0
      %4837 = vmatpush1.msra.mxu0 0.0
      %4838 = vmatprep.subr.mxu0 0.0
      %4839 = vmatpush1.msra.mxu0 0.0
      %4840 = vmatprep.subr.mxu0 0.0
      %4841 = vmatpush1.msra.mxu0 0.0
      %4842 = vmatprep.subr.mxu0 0.0
      %4843 = vmatpush1.msra.mxu0 0.0
      %4844 = vmatprep.subr.mxu0 0.0
      %4845 = vmatpush1.msra.mxu0 0.0
      %4846 = vmatprep.subr.mxu0 0.0
      %4847 = vmatpush1.msra.mxu0 0.0
      %4848 = vmatprep.subr.mxu0 0.0
      %4849 = vmatpush1.msra.mxu0 0.0
      %4850 = vmatprep.subr.mxu0 0.0
      %4851 = vmatpush1.msra.mxu0 0.0
      %4852 = vmatprep.mubr.f32.mxu0 0.0
      %4853 = vmatmul.mubr.f32.gmra.mrb[0].mxu0 %v4786
      %v4854 = vpop.f32.mrb[0].mxu0
      %v4855 = vadd.f32 0.0, %v4854
      %v4856 = vpop.f32.mrb[0].mxu0
      %4857 = vdwg.mxu0
      %v4859 = vrot.slane %v4855, 6
      %v4861 = vadd.f32 %v3866, %v4859
      %v4862 = vxor.u32 %v4861, 2147483648
      %v4863 = vmul.f32 %v4862, 1.442695
      %v4864 = vpow.pop %v4863
      %v4865 = vadd.f32 %v4864, 1.0
      %v4866 = vrcp.pop %v4865
      %v4867 = vmul.f32 1.0, %v4866
      %v4868 = vtanh.pop %v4861
      %v4870 = vrot.slane %v4701, 6
      %v4872 = vmul.f32 %v4867, %v4870
      %4874 = vrot.lane.b32.xlu0 %v4868, 64
      %v4875 = vpop.permute.xlu0 %4874
      %v4877 = vmul.f32 %v4867, %v4875
      %4879 = vrot.lane.b32.xlu0 %v4877, 32
      %v4880 = vpop.permute.xlu0 %4879
      %v4882 = vadd.f32 %v4872, %v4880
      %v4883 = vmax.f32 %v4882, -3.0
      %v4884 = vmin.f32 %v4883, 3.0
      %v4885 = vtanh.pop %v4884
      %4887 = vrot.lane.b32.xlu0 %v4885, 64
      %v4888 = vpop.permute.xlu0 %4887
      %v4890 = vmul.f32 %v4867, %v4888
      %v4892 = vrot.slane %v4890, 2
      %4893 = vrot.lane.b32.xlu0 %v4892, 32
      %v4894 = vpop.permute.xlu0 %4893
      %v4895 = vsel %vm897, %v4894, 0
      %4897 = vmatprep.subr.mxu0 0.0
      %4898 = vmatpush1.msra.mxu0 %v3875
      %4899 = vmatprep.subr.mxu0 0.0
      %4900 = vmatpush1.msra.mxu0 %v3876
      %4901 = vmatprep.subr.mxu0 0.0
      %4902 = vmatpush1.msra.mxu0 %v3877
      %4903 = vmatprep.subr.mxu0 0.0
      %4904 = vmatpush1.msra.mxu0 %v3878
      %4905 = vmatprep.subr.mxu0 0.0
      %4906 = vmatpush1.msra.mxu0 0.0
      %4907 = vmatprep.subr.mxu0 0.0
      %4908 = vmatpush1.msra.mxu0 0.0
      %4909 = vmatprep.subr.mxu0 0.0
      %4910 = vmatpush1.msra.mxu0 0.0
      %4911 = vmatprep.subr.mxu0 0.0
      %4912 = vmatpush1.msra.mxu0 0.0
      %4913 = vmatprep.subr.mxu0 0.0
      %4914 = vmatpush1.msra.mxu0 0.0
      %4915 = vmatprep.subr.mxu0 0.0
      %4916 = vmatpush1.msra.mxu0 0.0
      %4917 = vmatprep.subr.mxu0 0.0
      %4918 = vmatpush1.msra.mxu0 0.0
      %4919 = vmatprep.subr.mxu0 0.0
      %4920 = vmatpush1.msra.mxu0 0.0
      %4921 = vmatprep.subr.mxu0 0.0
      %4922 = vmatpush1.msra.mxu0 0.0
      %4923 = vmatprep.subr.mxu0 0.0
      %4924 = vmatpush1.msra.mxu0 0.0
      %4925 = vmatprep.subr.mxu0 0.0
      %4926 = vmatpush1.msra.mxu0 0.0
      %4927 = vmatprep.subr.mxu0 0.0
      %4928 = vmatpush1.msra.mxu0 0.0
      %4929 = vmatprep.subr.mxu0 0.0
      %4930 = vmatpush1.msra.mxu0 0.0
      %4931 = vmatprep.subr.mxu0 0.0
      %4932 = vmatpush1.msra.mxu0 0.0
      %4933 = vmatprep.subr.mxu0 0.0
      %4934 = vmatpush1.msra.mxu0 0.0
      %4935 = vmatprep.subr.mxu0 0.0
      %4936 = vmatpush1.msra.mxu0 0.0
      %4937 = vmatprep.subr.mxu0 0.0
      %4938 = vmatpush1.msra.mxu0 0.0
      %4939 = vmatprep.subr.mxu0 0.0
      %4940 = vmatpush1.msra.mxu0 0.0
      %4941 = vmatprep.subr.mxu0 0.0
      %4942 = vmatpush1.msra.mxu0 0.0
      %4943 = vmatprep.subr.mxu0 0.0
      %4944 = vmatpush1.msra.mxu0 0.0
      %4945 = vmatprep.subr.mxu0 0.0
      %4946 = vmatpush1.msra.mxu0 0.0
      %4947 = vmatprep.subr.mxu0 0.0
      %4948 = vmatpush1.msra.mxu0 0.0
      %4949 = vmatprep.subr.mxu0 0.0
      %4950 = vmatpush1.msra.mxu0 0.0
      %4951 = vmatprep.subr.mxu0 0.0
      %4952 = vmatpush1.msra.mxu0 0.0
      %4953 = vmatprep.subr.mxu0 0.0
      %4954 = vmatpush1.msra.mxu0 0.0
      %4955 = vmatprep.subr.mxu0 0.0
      %4956 = vmatpush1.msra.mxu0 0.0
      %4957 = vmatprep.subr.mxu0 0.0
      %4958 = vmatpush1.msra.mxu0 0.0
      %4959 = vmatprep.subr.mxu0 0.0
      %4960 = vmatpush1.msra.mxu0 0.0
      %4961 = vmatprep.mubr.f32.mxu0 0.0
      %4962 = vmatmul.mubr.f32.gmra.mrb[0].mxu0 %v4895
      %v4963 = vpop.f32.mrb[0].mxu0
      %v4964 = vadd.f32 0.0, %v4963
      %v4965 = vpop.f32.mrb[0].mxu0
      %4966 = vdwg.mxu0
      %v4967 = vmax.f32 %v4964, -3.0
      %v4968 = vmin.f32 %v4967, 3.0
      %v4970 = vsel %vm897, %v4968, 0
      %4972 = vmatprep.subr.mxu0 0.0
      %4973 = vmatpush1.msra.mxu0 %v3870
      %4974 = vmatprep.subr.mxu0 0.0
      %4975 = vmatpush1.msra.mxu0 %v3871
      %4976 = vmatprep.subr.mxu0 0.0
      %4977 = vmatpush1.msra.mxu0 %v3872
      %4978 = vmatprep.subr.mxu0 0.0
      %4979 = vmatpush1.msra.mxu0 %v3873
      %4980 = vmatprep.subr.mxu0 0.0
      %4981 = vmatpush1.msra.mxu0 0.0
      %4982 = vmatprep.subr.mxu0 0.0
      %4983 = vmatpush1.msra.mxu0 0.0
      %4984 = vmatprep.subr.mxu0 0.0
      %4985 = vmatpush1.msra.mxu0 0.0
      %4986 = vmatprep.subr.mxu0 0.0
      %4987 = vmatpush1.msra.mxu0 0.0
      %4988 = vmatprep.subr.mxu0 0.0
      %4989 = vmatpush1.msra.mxu0 0.0
      %4990 = vmatprep.subr.mxu0 0.0
      %4991 = vmatpush1.msra.mxu0 0.0
      %4992 = vmatprep.subr.mxu0 0.0
      %4993 = vmatpush1.msra.mxu0 0.0
      %4994 = vmatprep.subr.mxu0 0.0
      %4995 = vmatpush1.msra.mxu0 0.0
      %4996 = vmatprep.subr.mxu0 0.0
      %4997 = vmatpush1.msra.mxu0 0.0
      %4998 = vmatprep.subr.mxu0 0.0
      %4999 = vmatpush1.msra.mxu0 0.0
      %5000 = vmatprep.subr.mxu0 0.0
      %5001 = vmatpush1.msra.mxu0 0.0
      %5002 = vmatprep.subr.mxu0 0.0
      %5003 = vmatpush1.msra.mxu0 0.0
      %5004 = vmatprep.subr.mxu0 0.0
      %5005 = vmatpush1.msra.mxu0 0.0
      %5006 = vmatprep.subr.mxu0 0.0
      %5007 = vmatpush1.msra.mxu0 0.0
      %5008 = vmatprep.subr.mxu0 0.0
      %5009 = vmatpush1.msra.mxu0 0.0
      %5010 = vmatprep.subr.mxu0 0.0
      %5011 = vmatpush1.msra.mxu0 0.0
      %5012 = vmatprep.subr.mxu0 0.0
      %5013 = vmatpush1.msra.mxu0 0.0
      %5014 = vmatprep.subr.mxu0 0.0
      %5015 = vmatpush1.msra.mxu0 0.0
      %5016 = vmatprep.subr.mxu0 0.0
      %5017 = vmatpush1.msra.mxu0 0.0
      %5018 = vmatprep.subr.mxu0 0.0
      %5019 = vmatpush1.msra.mxu0 0.0
      %5020 = vmatprep.subr.mxu0 0.0
      %5021 = vmatpush1.msra.mxu0 0.0
      %5022 = vmatprep.subr.mxu0 0.0
      %5023 = vmatpush1.msra.mxu0 0.0
      %5024 = vmatprep.subr.mxu0 0.0
      %5025 = vmatpush1.msra.mxu0 0.0
      %5026 = vmatprep.subr.mxu0 0.0
      %5027 = vmatpush1.msra.mxu0 0.0
      %5028 = vmatprep.subr.mxu0 0.0
      %5029 = vmatpush1.msra.mxu0 0.0
      %5030 = vmatprep.subr.mxu0 0.0
      %5031 = vmatpush1.msra.mxu0 0.0
      %5032 = vmatprep.subr.mxu0 0.0
      %5033 = vmatpush1.msra.mxu0 0.0
      %5034 = vmatprep.subr.mxu0 0.0
      %5035 = vmatpush1.msra.mxu0 0.0
      %5036 = vmatprep.mubr.f32.mxu0 0.0
      %5037 = vmatmul.mubr.f32.gmra.mrb[0].mxu0 %v4970
      %v5038 = vpop.f32.mrb[0].mxu0
      %v5039 = vadd.f32 0.0, %v5038
      %v5040 = vpop.f32.mrb[0].mxu0
      %5041 = vdwg.mxu0
      %v5043 = vrot.slane %v5039, 4
      %v5045 = vadd.f32 %v3866, %v5043
      %v5046 = vxor.u32 %v5045, 2147483648
      %v5047 = vmul.f32 %v5046, 1.442695
      %v5048 = vpow.pop %v5047
      %v5049 = vadd.f32 %v5048, 1.0
      %v5050 = vrcp.pop %v5049
      %v5051 = vmul.f32 1.0, %v5050
      %v5052 = vtanh.pop %v5045
      %v5054 = vrot.slane %v4884, 6
      %v5056 = vmul.f32 %v5051, %v5054
      %5058 = vrot.lane.b32.xlu0 %v5052, 64
      %v5059 = vpop.permute.xlu0 %5058
      %v5061 = vmul.f32 %v5051, %v5059
      %5063 = vrot.lane.b32.xlu0 %v5061, 32
      %v5064 = vpop.permute.xlu0 %5063
      %v5066 = vadd.f32 %v5056, %v5064
      %v5067 = vmax.f32 %v5066, -3.0
      %v5068 = vmin.f32 %v5067, 3.0
      %v5069 = vtanh.pop %v5068
      %5071 = vrot.lane.b32.xlu0 %v5069, 64
      %v5072 = vpop.permute.xlu0 %5071
      %v5074 = vmul.f32 %v5051, %v5072
      %v5076 = vrot.slane %v5074, 4
      %5077 = vrot.lane.b32.xlu0 %v5076, 32
      %v5078 = vpop.permute.xlu0 %5077
      %v5079 = vsel %vm897, %v5078, 0
      %5081 = vmatprep.subr.mxu0 0.0
      %5082 = vmatpush1.msra.mxu0 %v3875
      %5083 = vmatprep.subr.mxu0 0.0
      %5084 = vmatpush1.msra.mxu0 %v3876
      %5085 = vmatprep.subr.mxu0 0.0
      %5086 = vmatpush1.msra.mxu0 %v3877
      %5087 = vmatprep.subr.mxu0 0.0
      %5088 = vmatpush1.msra.mxu0 %v3878
      %5089 = vmatprep.subr.mxu0 0.0
      %5090 = vmatpush1.msra.mxu0 0.0
      %5091 = vmatprep.subr.mxu0 0.0
      %5092 = vmatpush1.msra.mxu0 0.0
      %5093 = vmatprep.subr.mxu0 0.0
      %5094 = vmatpush1.msra.mxu0 0.0
      %5095 = vmatprep.subr.mxu0 0.0
      %5096 = vmatpush1.msra.mxu0 0.0
      %5097 = vmatprep.subr.mxu0 0.0
      %5098 = vmatpush1.msra.mxu0 0.0
      %5099 = vmatprep.subr.mxu0 0.0
      %5100 = vmatpush1.msra.mxu0 0.0
      %5101 = vmatprep.subr.mxu0 0.0
      %5102 = vmatpush1.msra.mxu0 0.0
      %5103 = vmatprep.subr.mxu0 0.0
      %5104 = vmatpush1.msra.mxu0 0.0
      %5105 = vmatprep.subr.mxu0 0.0
      %5106 = vmatpush1.msra.mxu0 0.0
      %5107 = vmatprep.subr.mxu0 0.0
      %5108 = vmatpush1.msra.mxu0 0.0
      %5109 = vmatprep.subr.mxu0 0.0
      %5110 = vmatpush1.msra.mxu0 0.0
      %5111 = vmatprep.subr.mxu0 0.0
      %5112 = vmatpush1.msra.mxu0 0.0
      %5113 = vmatprep.subr.mxu0 0.0
      %5114 = vmatpush1.msra.mxu0 0.0
      %5115 = vmatprep.subr.mxu0 0.0
      %5116 = vmatpush1.msra.mxu0 0.0
      %5117 = vmatprep.subr.mxu0 0.0
      %5118 = vmatpush1.msra.mxu0 0.0
      %5119 = vmatprep.subr.mxu0 0.0
      %5120 = vmatpush1.msra.mxu0 0.0
      %5121 = vmatprep.subr.mxu0 0.0
      %5122 = vmatpush1.msra.mxu0 0.0
      %5123 = vmatprep.subr.mxu0 0.0
      %5124 = vmatpush1.msra.mxu0 0.0
      %5125 = vmatprep.subr.mxu0 0.0
      %5126 = vmatpush1.msra.mxu0 0.0
      %5127 = vmatprep.subr.mxu0 0.0
      %5128 = vmatpush1.msra.mxu0 0.0
      %5129 = vmatprep.subr.mxu0 0.0
      %5130 = vmatpush1.msra.mxu0 0.0
      %5131 = vmatprep.subr.mxu0 0.0
      %5132 = vmatpush1.msra.mxu0 0.0
      %5133 = vmatprep.subr.mxu0 0.0
      %5134 = vmatpush1.msra.mxu0 0.0
      %5135 = vmatprep.subr.mxu0 0.0
      %5136 = vmatpush1.msra.mxu0 0.0
      %5137 = vmatprep.subr.mxu0 0.0
      %5138 = vmatpush1.msra.mxu0 0.0
      %5139 = vmatprep.subr.mxu0 0.0
      %5140 = vmatpush1.msra.mxu0 0.0
      %5141 = vmatprep.subr.mxu0 0.0
      %5142 = vmatpush1.msra.mxu0 0.0
      %5143 = vmatprep.subr.mxu0 0.0
      %5144 = vmatpush1.msra.mxu0 0.0
      %5145 = vmatprep.mubr.f32.mxu0 0.0
      %5146 = vmatmul.mubr.f32.gmra.mrb[0].mxu0 %v5079
      %v5147 = vpop.f32.mrb[0].mxu0
      %v5148 = vadd.f32 0.0, %v5147
      %v5149 = vpop.f32.mrb[0].mxu0
      %5150 = vdwg.mxu0
      %v5151 = vmax.f32 %v5148, -3.0
      %v5152 = vmin.f32 %v5151, 3.0
      %v5154 = vsel %vm897, %v5152, 0
      %5156 = vmatprep.subr.mxu0 0.0
      %5157 = vmatpush1.msra.mxu0 %v3870
      %5158 = vmatprep.subr.mxu0 0.0
      %5159 = vmatpush1.msra.mxu0 %v3871
      %5160 = vmatprep.subr.mxu0 0.0
      %5161 = vmatpush1.msra.mxu0 %v3872
      %5162 = vmatprep.subr.mxu0 0.0
      %5163 = vmatpush1.msra.mxu0 %v3873
      %5164 = vmatprep.subr.mxu0 0.0
      %5165 = vmatpush1.msra.mxu0 0.0
      %5166 = vmatprep.subr.mxu0 0.0
      %5167 = vmatpush1.msra.mxu0 0.0
      %5168 = vmatprep.subr.mxu0 0.0
      %5169 = vmatpush1.msra.mxu0 0.0
      %5170 = vmatprep.subr.mxu0 0.0
      %5171 = vmatpush1.msra.mxu0 0.0
      %5172 = vmatprep.subr.mxu0 0.0
      %5173 = vmatpush1.msra.mxu0 0.0
      %5174 = vmatprep.subr.mxu0 0.0
      %5175 = vmatpush1.msra.mxu0 0.0
      %5176 = vmatprep.subr.mxu0 0.0
      %5177 = vmatpush1.msra.mxu0 0.0
      %5178 = vmatprep.subr.mxu0 0.0
      %5179 = vmatpush1.msra.mxu0 0.0
      %5180 = vmatprep.subr.mxu0 0.0
      %5181 = vmatpush1.msra.mxu0 0.0
      %5182 = vmatprep.subr.mxu0 0.0
      %5183 = vmatpush1.msra.mxu0 0.0
      %5184 = vmatprep.subr.mxu0 0.0
      %5185 = vmatpush1.msra.mxu0 0.0
      %5186 = vmatprep.subr.mxu0 0.0
      %5187 = vmatpush1.msra.mxu0 0.0
      %5188 = vmatprep.subr.mxu0 0.0
      %5189 = vmatpush1.msra.mxu0 0.0
      %5190 = vmatprep.subr.mxu0 0.0
      %5191 = vmatpush1.msra.mxu0 0.0
      %5192 = vmatprep.subr.mxu0 0.0
      %5193 = vmatpush1.msra.mxu0 0.0
      %5194 = vmatprep.subr.mxu0 0.0
      %5195 = vmatpush1.msra.mxu0 0.0
      %5196 = vmatprep.subr.mxu0 0.0
      %5197 = vmatpush1.msra.mxu0 0.0
      %5198 = vmatprep.subr.mxu0 0.0
      %5199 = vmatpush1.msra.mxu0 0.0
      %5200 = vmatprep.subr.mxu0 0.0
      %5201 = vmatpush1.msra.mxu0 0.0
      %5202 = vmatprep.subr.mxu0 0.0
      %5203 = vmatpush1.msra.mxu0 0.0
      %5204 = vmatprep.subr.mxu0 0.0
      %5205 = vmatpush1.msra.mxu0 0.0
      %5206 = vmatprep.subr.mxu0 0.0
      %5207 = vmatpush1.msra.mxu0 0.0
      %5208 = vmatprep.subr.mxu0 0.0
      %5209 = vmatpush1.msra.mxu0 0.0
      %5210 = vmatprep.subr.mxu0 0.0
      %5211 = vmatpush1.msra.mxu0 0.0
      %5212 = vmatprep.subr.mxu0 0.0
      %5213 = vmatpush1.msra.mxu0 0.0
      %5214 = vmatprep.subr.mxu0 0.0
      %5215 = vmatpush1.msra.mxu0 0.0
      %5216 = vmatprep.subr.mxu0 0.0
      %5217 = vmatpush1.msra.mxu0 0.0
      %5218 = vmatprep.subr.mxu0 0.0
      %5219 = vmatpush1.msra.mxu0 0.0
      %5220 = vmatprep.mubr.f32.mxu0 0.0
      %5221 = vmatmul.mubr.f32.gmra.mrb[0].mxu0 %v5154
      %v5222 = vpop.f32.mrb[0].mxu0
      %v5223 = vadd.f32 0.0, %v5222
      %v5224 = vpop.f32.mrb[0].mxu0
      %5225 = vdwg.mxu0
      %v5227 = vrot.slane %v5223, 2
      %v5229 = vadd.f32 %v3866, %v5227
      %v5230 = vxor.u32 %v5229, 2147483648
      %v5231 = vmul.f32 %v5230, 1.442695
      %v5232 = vpow.pop %v5231
      %v5233 = vadd.f32 %v5232, 1.0
      %v5234 = vrcp.pop %v5233
      %v5235 = vmul.f32 1.0, %v5234
      %v5236 = vtanh.pop %v5229
      %v5238 = vrot.slane %v5068, 6
      %v5240 = vmul.f32 %v5235, %v5238
      %5242 = vrot.lane.b32.xlu0 %v5236, 64
      %v5243 = vpop.permute.xlu0 %5242
      %v5245 = vmul.f32 %v5235, %v5243
      %5247 = vrot.lane.b32.xlu0 %v5245, 32
      %v5248 = vpop.permute.xlu0 %5247
      %v5250 = vadd.f32 %v5240, %v5248
      %v5251 = vmax.f32 %v5250, -3.0
      %v5252 = vmin.f32 %v5251, 3.0
      %v5253 = vtanh.pop %v5252
      %5255 = vrot.lane.b32.xlu0 %v5253, 64
      %v5256 = vpop.permute.xlu0 %5255
      %v5258 = vmul.f32 %v5235, %v5256
      %v5260 = vrot.slane %v5258, 6
      %5261 = vrot.lane.b32.xlu0 %v5260, 32
      %v5262 = vpop.permute.xlu0 %5261
      %v5263 = vsel %vm897, %v5262, 0
      %5265 = vmatprep.subr.mxu0 0.0
      %5266 = vmatpush1.msra.mxu0 %v3875
      %5267 = vmatprep.subr.mxu0 0.0
      %5268 = vmatpush1.msra.mxu0 %v3876
      %5269 = vmatprep.subr.mxu0 0.0
      %5270 = vmatpush1.msra.mxu0 %v3877
      %5271 = vmatprep.subr.mxu0 0.0
      %5272 = vmatpush1.msra.mxu0 %v3878
      %5273 = vmatprep.subr.mxu0 0.0
      %5274 = vmatpush1.msra.mxu0 0.0
      %5275 = vmatprep.subr.mxu0 0.0
      %5276 = vmatpush1.msra.mxu0 0.0
      %5277 = vmatprep.subr.mxu0 0.0
      %5278 = vmatpush1.msra.mxu0 0.0
      %5279 = vmatprep.subr.mxu0 0.0
      %5280 = vmatpush1.msra.mxu0 0.0
      %5281 = vmatprep.subr.mxu0 0.0
      %5282 = vmatpush1.msra.mxu0 0.0
      %5283 = vmatprep.subr.mxu0 0.0
      %5284 = vmatpush1.msra.mxu0 0.0
      %5285 = vmatprep.subr.mxu0 0.0
      %5286 = vmatpush1.msra.mxu0 0.0
      %5287 = vmatprep.subr.mxu0 0.0
      %5288 = vmatpush1.msra.mxu0 0.0
      %5289 = vmatprep.subr.mxu0 0.0
      %5290 = vmatpush1.msra.mxu0 0.0
      %5291 = vmatprep.subr.mxu0 0.0
      %5292 = vmatpush1.msra.mxu0 0.0
      %5293 = vmatprep.subr.mxu0 0.0
      %5294 = vmatpush1.msra.mxu0 0.0
      %5295 = vmatprep.subr.mxu0 0.0
      %5296 = vmatpush1.msra.mxu0 0.0
      %5297 = vmatprep.subr.mxu0 0.0
      %5298 = vmatpush1.msra.mxu0 0.0
      %5299 = vmatprep.subr.mxu0 0.0
      %5300 = vmatpush1.msra.mxu0 0.0
      %5301 = vmatprep.subr.mxu0 0.0
      %5302 = vmatpush1.msra.mxu0 0.0
      %5303 = vmatprep.subr.mxu0 0.0
      %5304 = vmatpush1.msra.mxu0 0.0
      %5305 = vmatprep.subr.mxu0 0.0
      %5306 = vmatpush1.msra.mxu0 0.0
      %5307 = vmatprep.subr.mxu0 0.0
      %5308 = vmatpush1.msra.mxu0 0.0
      %5309 = vmatprep.subr.mxu0 0.0
      %5310 = vmatpush1.msra.mxu0 0.0
      %5311 = vmatprep.subr.mxu0 0.0
      %5312 = vmatpush1.msra.mxu0 0.0
      %5313 = vmatprep.subr.mxu0 0.0
      %5314 = vmatpush1.msra.mxu0 0.0
      %5315 = vmatprep.subr.mxu0 0.0
      %5316 = vmatpush1.msra.mxu0 0.0
      %5317 = vmatprep.subr.mxu0 0.0
      %5318 = vmatpush1.msra.mxu0 0.0
      %5319 = vmatprep.subr.mxu0 0.0
      %5320 = vmatpush1.msra.mxu0 0.0
      %5321 = vmatprep.subr.mxu0 0.0
      %5322 = vmatpush1.msra.mxu0 0.0
      %5323 = vmatprep.subr.mxu0 0.0
      %5324 = vmatpush1.msra.mxu0 0.0
      %5325 = vmatprep.subr.mxu0 0.0
      %5326 = vmatpush1.msra.mxu0 0.0
      %5327 = vmatprep.subr.mxu0 0.0
      %5328 = vmatpush1.msra.mxu0 0.0
      %5329 = vmatprep.mubr.f32.mxu0 0.0
      %5330 = vmatmul.mubr.f32.gmra.mrb[0].mxu0 %v5263
      %v5331 = vpop.f32.mrb[0].mxu0
      %v5332 = vadd.f32 0.0, %v5331
      %v5333 = vpop.f32.mrb[0].mxu0
      %5334 = vdwg.mxu0
      %v5335 = vmax.f32 %v5332, -3.0
      %v5336 = vmin.f32 %v5335, 3.0
      %v5337 = vrot.slane %v4236, 6
      %v5339 = vrot.slane %v4420, 4
      %v5341 = vrot.slane %v4604, 2
      %v5343 = vrot.slane %v4968, 6
      %v5345 = vrot.slane %v5152, 4
      %v5348 = vrot.slane %v5336, 2
      %v5350 = vsel %vm1929, %v4052, %v5337
      %v5351 = vsel %vm3768, %v5350, %v5339
      %v5352 = vsel %vm3770, %v5351, %v5341
      %v5353 = vsel %vm1929, %v4784, %v5343
      %v5354 = vsel %vm3768, %v5353, %v5345
      %v5355 = vsel %vm3770, %v5354, %v5348
      %v5356 = vadd.f32 %v5352, %v3771
      %v5357 = vadd.f32 %v5355, %v3774
      %5358 = vst.msk [vmem:[%s527] sm:$0xff] %vm897, %v5356
      %5359 = vst.msk [vmem:[%s527 + $0x8] sm:$0xff] %vm897, %v5357
      %p5360 = scmp.lt.s32.totalorder %s23, 1
      %s5361 = scalar_select %p5360, %s23, 1
      %s5362 = smul.addr %s5361, 2
      %s5363 = smul.addr %s5362, 8
      %s5364 = scalar_lea.vmem %s12, %s5363
      // Predicated region
      $region69: #{model_forward.1} parent=67 // pred_check
        %p5365 = pneg %p323
      $region70: #{model_forward.1} parent=67 // pred_check_branch
        %5367 = sbr.rel (%p5365) target = $region72
      $region71: #{model_forward.1} parent=67 // pred_region
        _
      $region72: #{model_forward.1} parent=67 // pred_fallthru
        _
    $region68: #{model_forward.1} parent=5 // pred_fallthru
      _
    %p5368 = scmp.le.s32.totalorder 2, %s18
    // Predicated region
    $region73: #{model_forward.1} parent=5 // pred_check
      %p5369 = pneg %p5368
    $region74: #{model_forward.1} parent=5 // pred_check_branch
      %5371 = sbr.rel (%p5369) target = $region76
    $region75: #{model_forward.1} parent=5 // pred_region
      %s5372 = ssub.s32 %s18, 2
      // Predicated region
      $region77: #{model_forward.1} parent=75 // pred_check
        %p5373 = pneg %p329
      $region78: #{model_forward.1} parent=75 // pred_check_branch
        %5375 = sbr.rel (%p5373) target = $region80
      $region79: #{model_forward.1} parent=75 // pred_region
        %p5376 = scmp.lt.s32.totalorder %s24, 1
        %s5377 = scalar_select %p5376, %s24, 1
        %s5378 = smul.addr %s5377, 2
        %s5379 = smul.addr %s5378, 8
        %s5380 = scalar_lea.vmem %s12, %s5379
      $region80: #{model_forward.1} parent=75 // pred_fallthru
        _
    $region76: #{model_forward.1} parent=5 // pred_fallthru
      _
  $region6: #{model_forward.1} parent=0 // loop_footer
    %s22 = sadd.s32 1, %s18
  $region7: #{model_forward.1} parent=0 // loop_footer_branch
    %17 = sbr.rel target = $region3
  $region8: #{model_forward.1} parent=0 // loop_exit
    _

</llo_original>
